<compile_context>
chip_gen: v7x
topology: tpu7x:2x2x1
jax: 0.10.0
libtpu: 0.0.40
codegen_flags: <defaults>
</compile_context>

<pallas_src>
import jax
import jax.numpy as jnp
from jax import lax
from jax.experimental import pallas as pl
from jax.experimental.pallas import tpu as pltpu


# Set to jnp.bfloat16 on v6e/v7x for large models; f32 keeps exact reference match.
MATMUL_DTYPE = jnp.float32


def _round_up(x, m):
    return ((x + m - 1) // m) * m


# ----------------------------------------------------------------------------
# Fused Pallas kernel: LSTM recurrence (h-projection only) + FC, single grid pt.
# ----------------------------------------------------------------------------
def _decoder_kernel(gx_ref, whh_ref, wfc_ref, bfc_ref, out_ref,
                    h_scr, c_scr, hseq_scr):
    # gx_ref   : (T1, Bp, 4*Hp)  precomputed x @ W_ih^T + b, time-major, f32
    # whh_ref  : (Hp, 4*Hp)
    # wfc_ref  : (Hp, Vp)
    # bfc_ref  : (1, Vp)
    # out_ref  : (Bp, T1, Vp)    batch-first logits
    # h_scr/c_scr : (Bp, Hp) f32 ; hseq_scr : (T1, Bp, Hp) f32 (never leaves VMEM)
    T1, Bp, _ = gx_ref.shape
    Hp = whh_ref.shape[0]
    Vp = wfc_ref.shape[1]

    h_scr[...] = jnp.zeros_like(h_scr)
    c_scr[...] = jnp.zeros_like(c_scr)

    def step(t, carry):
        # Recurrent projection only; input projection was hoisted out of the loop.
        gates = gx_ref[t] + jnp.dot(
            h_scr[...].astype(whh_ref.dtype), whh_ref[...],
            preferred_element_type=jnp.float32)            # (Bp, 4*Hp)

        # PyTorch gate order i, f, g, o; each slab is a 128-lane aligned slice.
        i = jax.nn.sigmoid(gates[:, 0 * Hp:1 * Hp])
        f = jax.nn.sigmoid(gates[:, 1 * Hp:2 * Hp])
        g = jnp.tanh(gates[:, 2 * Hp:3 * Hp])
        o = jax.nn.sigmoid(gates[:, 3 * Hp:4 * Hp])

        c_new = f * c_scr[...] + i * g
        h_new = o * jnp.tanh(c_new)
        c_scr[...] = c_new
        h_scr[...] = h_new
        hseq_scr[t] = h_new
        return carry

    lax.fori_loop(0, T1, step, 0, unroll=True)

    # Fused FC over all time steps as one MXU matmul; dropout (eval) == identity.
    hs = hseq_scr[...]                                       # (T1, Bp, Hp)
    hs2 = hs.reshape(T1 * Bp, Hp)                            # Bp is a full sublane tile
    logits = jnp.dot(hs2.astype(wfc_ref.dtype), wfc_ref[...],
                     preferred_element_type=jnp.float32) + bfc_ref[...]
    logits = logits.reshape(T1, Bp, Vp)

    # Emit batch-first output directly (no wrapper transpose of the logits).
    for b in range(Bp):                                      # static unroll, Bp == 8
        out_ref[b] = logits[:, b, :]


def _decoder_core(gx_tm, w_hh_t, w_fc_t, b_fc):
    """gx_tm: (T1, Bp, 4*Hp) f32 -> logits (Bp, T1, Vp) f32."""
    T1, Bp, G4 = gx_tm.shape
    Hp = w_hh_t.shape[0]
    Vp = w_fc_t.shape[1]
    return pl.pallas_call(
        _decoder_kernel,
        out_shape=jax.ShapeDtypeStruct((Bp, T1, Vp), jnp.float32),
        grid_spec=pltpu.PrefetchScalarGridSpec(
            num_scalar_prefetch=0,
            grid=(1,),  # single grid point: recurrence handled by in-kernel fori_loop
            in_specs=[
                pl.BlockSpec((T1, Bp, G4), lambda i: (0, 0, 0)),
                pl.BlockSpec((Hp, G4), lambda i: (0, 0)),
                pl.BlockSpec((Hp, Vp), lambda i: (0, 0)),
                pl.BlockSpec((1, Vp), lambda i: (0, 0)),
            ],
            out_specs=pl.BlockSpec((Bp, T1, Vp), lambda i: (0, 0, 0)),
            scratch_shapes=[
                pltpu.VMEM((Bp, Hp), jnp.float32),        # h
                pltpu.VMEM((Bp, Hp), jnp.float32),        # c
                pltpu.VMEM((T1, Bp, Hp), jnp.float32),    # h_seq (VMEM-resident)
            ],
        ),
        compiler_params=pltpu.CompilerParams(
            dimension_semantics=("arbitrary",),
        ),
    )(gx_tm, w_hh_t, w_fc_t, b_fc)


# ----------------------------------------------------------------------------
# Parameters: raw (PyTorch layout, for the reference) + padded/transposed (kernel)
# ----------------------------------------------------------------------------
def init_params(key, embed_size, hidden_size, vocab_size):
    """Raw parameters in PyTorch layout, gate order i,f,g,o."""
    ks = jax.random.split(key, 7)
    s = 0.1
    E, H, V = embed_size, hidden_size, vocab_size
    return {
        "embed": jax.random.normal(ks[0], (V, E), jnp.float32) * s,
        "w_ih": jax.random.normal(ks[1], (4 * H, E), jnp.float32) * s,
        "w_hh": jax.random.normal(ks[2], (4 * H, H), jnp.float32) * s,
        "b_ih": jax.random.normal(ks[3], (4 * H,), jnp.float32) * s,
        "b_hh": jax.random.normal(ks[4], (4 * H,), jnp.float32) * s,
        "w_fc": jax.random.normal(ks[5], (V, H), jnp.float32) * s,
        "b_fc": jax.random.normal(ks[6], (V,), jnp.float32) * s,
    }


def prepare_params(raw, matmul_dtype=MATMUL_DTYPE):
    """One-time: transpose + zero-pad to lane-dense shapes (E,H,V -> mult of 128)."""
    V, E = raw["embed"].shape
    H = raw["w_hh"].shape[1]
    Ep, Hp, Vp = _round_up(E, 128), _round_up(H, 128), _round_up(V, 128)
    G4 = 4 * Hp

    embed_p = jnp.zeros((V, Ep), jnp.float32).at[:, :E].set(raw["embed"])

    w_ih_t = jnp.zeros((Ep, G4), jnp.float32)
    w_hh_t = jnp.zeros((Hp, G4), jnp.float32)
    b_gates = jnp.zeros((G4,), jnp.float32)
    bias = raw["b_ih"] + raw["b_hh"]
    for k in range(4):  # gate order i, f, g, o; each gate gets its own 128-lane slab
        w_ih_t = w_ih_t.at[:E, k * Hp:k * Hp + H].set(raw["w_ih"][k * H:(k + 1) * H, :].T)
        w_hh_t = w_hh_t.at[:H, k * Hp:k * Hp + H].set(raw["w_hh"][k * H:(k + 1) * H, :].T)
        b_gates = b_gates.at[k * Hp:k * Hp + H].set(bias[k * H:(k + 1) * H])

    w_fc_t = jnp.zeros((Hp, Vp), jnp.float32).at[:H, :V].set(raw["w_fc"].T)
    b_fc = jnp.zeros((1, Vp), jnp.float32).at[0, :V].set(raw["b_fc"])

    return {
        "embed": embed_p,                            # (V, Ep)
        "w_ih_t": w_ih_t.astype(matmul_dtype),       # (Ep, 4*Hp)
        "w_hh_t": w_hh_t.astype(matmul_dtype),       # (Hp, 4*Hp)
        "b_gates": b_gates,                          # (4*Hp,)  f32
        "w_fc_t": w_fc_t.astype(matmul_dtype),       # (Hp, Vp)
        "b_fc": b_fc,                                # (1, Vp)  f32
    }


# ----------------------------------------------------------------------------
# Forward
# ----------------------------------------------------------------------------
@jax.jit
def decoder_forward(features, captions, params):
    """DecoderRNN.forward: features (B,E), captions (B,T) -> logits (B, T+1, V)."""
    B, E = features.shape
    T1 = captions.shape[1] + 1
    V = params["embed"].shape[0]
    Ep = params["w_ih_t"].shape[0]
    Bp = _round_up(B, 8)

    # Embedding lookup (table already E-padded) + prepend image feature; pad batch.
    embeds = jnp.take(params["embed"], captions, axis=0)            # (B, T, Ep)
    feat = jnp.zeros((B, Ep), jnp.float32).at[:, :E].set(features)  # (B, Ep)
    x = jnp.concatenate([feat[:, None, :], embeds], axis=1)         # (B, T1, Ep)
    x = jnp.zeros((Bp, T1, Ep), jnp.float32).at[:B].set(x)          # (Bp, T1, Ep)

    # Hoisted input projection: ONE big time-parallel matmul, emitted time-major
    # directly (no separate transpose op on the activations).
    gx_tm = jnp.einsum("bte,eg->tbg",
                       x.astype(params["w_ih_t"].dtype), params["w_ih_t"],
                       preferred_element_type=jnp.float32) + params["b_gates"]

    logits_pad = _decoder_core(gx_tm, params["w_hh_t"],
                               params["w_fc_t"], params["b_fc"])    # (Bp, T1, Vp)
    return logits_pad[:B, :, :V]                                    # (B, T1, V)


# ----------------------------------------------------------------------------
# Pure-JAX reference (un-padded, f32) for correctness checking
# ----------------------------------------------------------------------------
def decoder_forward_ref(features, captions, raw):
    H = raw["w_hh"].shape[1]
    embeds = raw["embed"][captions]
    x = jnp.concatenate([features[:, None, :], embeds], 1)
    x_tm = jnp.transpose(x, (1, 0, 2))
    b = raw["b_ih"] + raw["b_hh"]
    w_ih_t, w_hh_t = raw["w_ih"].T, raw["w_hh"].T

    def step(carry, x_t):
        h, c = carry
        gates = x_t @ w_ih_t + h @ w_hh_t + b
        i = jax.nn.sigmoid(gates[:, 0 * H:1 * H])
        f = jax.nn.sigmoid(gates[:, 1 * H:2 * H])
        g = jnp.tanh(gates[:, 2 * H:3 * H])
        o = jax.nn.sigmoid(gates[:, 3 * H:4 * H])
        c = f * c + i * g
        h = o * jnp.tanh(c)
        return (h, c), h

    h0 = jnp.zeros((features.shape[0], H), jnp.float32)
    (_, _), h_seq = lax.scan(step, (h0, h0), x_tm)
    logits = h_seq @ raw["w_fc"].T + raw["b_fc"]
    return jnp.transpose(logits, (1, 0, 2))


if __name__ == "__main__":
    # Small shapes implied by the forward: batch=2, embed=32, hidden=32, vocab=40, seq=8
    B, T, E, H, V = 2, 8, 32, 32, 40

    key = jax.random.PRNGKey(0)
    kp, kf, kc = jax.random.split(key, 3)
    raw = init_params(kp, E, H, V)
    params = prepare_params(raw)
    features = jax.random.normal(kf, (B, E), jnp.float32)
    captions = jax.random.randint(kc, (B, T), 0, V, dtype=jnp.int32)

    logits = decoder_forward(features, captions, params)
    logits = jax.block_until_ready(logits)

    ref = decoder_forward_ref(features, captions, raw)
    assert logits.shape == (B, T + 1, V), logits.shape
    assert jnp.allclose(logits, ref, atol=1e-4, rtol=1e-4), float(
        jnp.max(jnp.abs(logits - ref)))

    print("KERNEL_OK")
</pallas_src>

<mosaic_0001>
module attributes {stable_mosaic.version = 11 : i64} {
  func.func @_decoder_kernel(%arg0: i32, %arg1: memref<9x8x512xf32, #tpu.memory_space<vmem>>, %arg2: memref<128x512xf32, #tpu.memory_space<vmem>>, %arg3: memref<128x128xf32, #tpu.memory_space<vmem>>, %arg4: memref<1x128xf32, #tpu.memory_space<vmem>>, %arg5: memref<8x9x128xf32, #tpu.memory_space<vmem>>, %arg6: memref<8x128xf32, #tpu.memory_space<vmem>>, %arg7: memref<8x128xf32, #tpu.memory_space<vmem>>, %arg8: memref<9x8x128xf32, #tpu.memory_space<vmem>>) attributes {dimension_semantics = [#tpu.dimension_semantics<arbitrary>], iteration_bounds = array<i64: 1>, scalar_prefetch = 0 : i64, scratch_operands = 3 : i64, tpu.core_type = #tpu.core_type<tc>, window_params = [{pipeline_mode = #tpu.pipeline_mode<synchronous>, transform_indices = @transform_0, window_bounds = array<i64: 9, 8, 512>}, {pipeline_mode = #tpu.pipeline_mode<synchronous>, transform_indices = @transform_1, window_bounds = array<i64: 128, 512>}, {pipeline_mode = #tpu.pipeline_mode<synchronous>, transform_indices = @transform_2, window_bounds = array<i64: 128, 128>}, {pipeline_mode = #tpu.pipeline_mode<synchronous>, transform_indices = @transform_3, window_bounds = array<i64: 1, 128>}, {pipeline_mode = #tpu.pipeline_mode<synchronous>, transform_indices = @transform_4, window_bounds = array<i64: 8, 9, 128>}]} {
    %cst = arith.constant 0.000000e+00 : f32
    %0 = vector.broadcast %cst : f32 to vector<8x128xf32>
    %c0 = arith.constant 0 : index
    %c0_0 = arith.constant 0 : index
    %1 = vector.load %arg6[%c0, %c0_0] : memref<8x128xf32, #tpu.memory_space<vmem>>, vector<8x128xf32>
    tpu.vector_store %arg6[%c0, %c0_0], %0 {strides = array<i32>} : memref<8x128xf32, #tpu.memory_space<vmem>>, vector<8x128xf32>,
    %cst_1 = arith.constant 0.000000e+00 : f32
    %2 = vector.broadcast %cst_1 : f32 to vector<8x128xf32>
    %c0_2 = arith.constant 0 : index
    %c0_3 = arith.constant 0 : index
    %3 = vector.load %arg7[%c0_2, %c0_3] : memref<8x128xf32, #tpu.memory_space<vmem>>, vector<8x128xf32>
    tpu.vector_store %arg7[%c0_2, %c0_3], %2 {strides = array<i32>} : memref<8x128xf32, #tpu.memory_space<vmem>>, vector<8x128xf32>,
    %c0_i32 = arith.constant 0 : i32
    %4 = arith.index_cast %c0_i32 : i32 to index
    %c0_4 = arith.constant 0 : index
    %c0_5 = arith.constant 0 : index
    %5 = vector.load %arg1[%4, %c0_4, %c0_5] : memref<9x8x512xf32, #tpu.memory_space<vmem>>, vector<1x8x512xf32>
    %6 = vector.shape_cast %5 : vector<1x8x512xf32> to vector<8x512xf32>
    %c0_6 = arith.constant 0 : index
    %c0_7 = arith.constant 0 : index
    %7 = vector.load %arg6[%c0_6, %c0_7] : memref<8x128xf32, #tpu.memory_space<vmem>>, vector<8x128xf32>
    %c0_8 = arith.constant 0 : index
    %c0_9 = arith.constant 0 : index
    %8 = vector.load %arg2[%c0_8, %c0_9] : memref<128x512xf32, #tpu.memory_space<vmem>>, vector<128x512xf32>
    %cst_10 = arith.constant dense<0.000000e+00> : vector<8x512xf32>
    %9 = tpu.matmul %7, %8, %cst_10 {dimension_numbers = #tpu.dot_dimension_numbers<[1], [0], [0], [1], [0, 0, 1, 1], [], []>} : vector<8x128xf32>, vector<128x512xf32>, vector<8x512xf32> -> vector<8x512xf32>
    %10 = arith.addf %6, %9 : vector<8x512xf32>
    %11 = vector.extract_strided_slice %10 {offsets = [0, 0], sizes = [8, 128], strides = [1, 1]} : vector<8x512xf32> to vector<8x128xf32>
    %12 = arith.negf %11 : vector<8x128xf32>
    %13 = math.exp %12 : vector<8x128xf32>
    %cst_11 = arith.constant 1.000000e+00 : f32
    %14 = vector.broadcast %cst_11 : f32 to vector<8x128xf32>
    %15 = arith.addf %14, %13 : vector<8x128xf32>
    %16 = arith.divf %14, %15 : vector<8x128xf32>
    %17 = vector.extract_strided_slice %10 {offsets = [0, 128], sizes = [8, 128], strides = [1, 1]} : vector<8x512xf32> to vector<8x128xf32>
    %18 = arith.negf %17 : vector<8x128xf32>
    %19 = math.exp %18 : vector<8x128xf32>
    %cst_12 = arith.constant 1.000000e+00 : f32
    %20 = vector.broadcast %cst_12 : f32 to vector<8x128xf32>
    %21 = arith.addf %20, %19 : vector<8x128xf32>
    %22 = arith.divf %20, %21 : vector<8x128xf32>
    %23 = vector.extract_strided_slice %10 {offsets = [0, 256], sizes = [8, 128], strides = [1, 1]} : vector<8x512xf32> to vector<8x128xf32>
    %24 = math.tanh %23 : vector<8x128xf32>
    %25 = vector.extract_strided_slice %10 {offsets = [0, 384], sizes = [8, 128], strides = [1, 1]} : vector<8x512xf32> to vector<8x128xf32>
    %26 = arith.negf %25 : vector<8x128xf32>
    %27 = math.exp %26 : vector<8x128xf32>
    %cst_13 = arith.constant 1.000000e+00 : f32
    %28 = vector.broadcast %cst_13 : f32 to vector<8x128xf32>
    %29 = arith.addf %28, %27 : vector<8x128xf32>
    %30 = arith.divf %28, %29 : vector<8x128xf32>
    %c0_14 = arith.constant 0 : index
    %c0_15 = arith.constant 0 : index
    %31 = vector.load %arg7[%c0_14, %c0_15] : memref<8x128xf32, #tpu.memory_space<vmem>>, vector<8x128xf32>
    %32 = arith.mulf %22, %31 : vector<8x128xf32>
    %33 = arith.mulf %16, %24 : vector<8x128xf32>
    %34 = arith.addf %32, %33 : vector<8x128xf32>
    %35 = math.tanh %34 : vector<8x128xf32>
    %36 = arith.mulf %30, %35 : vector<8x128xf32>
    %c0_16 = arith.constant 0 : index
    %c0_17 = arith.constant 0 : index
    %37 = vector.load %arg7[%c0_16, %c0_17] : memref<8x128xf32, #tpu.memory_space<vmem>>, vector<8x128xf32>
    tpu.vector_store %arg7[%c0_16, %c0_17], %34 {strides = array<i32>} : memref<8x128xf32, #tpu.memory_space<vmem>>, vector<8x128xf32>,
    %c0_18 = arith.constant 0 : index
    %c0_19 = arith.constant 0 : index
    %38 = vector.load %arg6[%c0_18, %c0_19] : memref<8x128xf32, #tpu.memory_space<vmem>>, vector<8x128xf32>
    tpu.vector_store %arg6[%c0_18, %c0_19], %36 {strides = array<i32>} : memref<8x128xf32, #tpu.memory_space<vmem>>, vector<8x128xf32>,
    %39 = arith.index_cast %c0_i32 : i32 to index
    %c0_20 = arith.constant 0 : index
    %c0_21 = arith.constant 0 : index
    %40 = vector.load %arg8[%39, %c0_20, %c0_21] : memref<9x8x128xf32, #tpu.memory_space<vmem>>, vector<1x8x128xf32>
    %41 = vector.shape_cast %40 : vector<1x8x128xf32> to vector<8x128xf32>
    %42 = vector.shape_cast %36 : vector<8x128xf32> to vector<1x8x128xf32>
    tpu.vector_store %arg8[%39, %c0_20, %c0_21], %42 {strides = array<i32>} : memref<9x8x128xf32, #tpu.memory_space<vmem>>, vector<1x8x128xf32>,
    %c1_i32 = arith.constant 1 : i32
    %43 = arith.index_cast %c1_i32 : i32 to index
    %c0_22 = arith.constant 0 : index
    %c0_23 = arith.constant 0 : index
    %44 = vector.load %arg1[%43, %c0_22, %c0_23] : memref<9x8x512xf32, #tpu.memory_space<vmem>>, vector<1x8x512xf32>
    %45 = vector.shape_cast %44 : vector<1x8x512xf32> to vector<8x512xf32>
    %c0_24 = arith.constant 0 : index
    %c0_25 = arith.constant 0 : index
    %46 = vector.load %arg6[%c0_24, %c0_25] : memref<8x128xf32, #tpu.memory_space<vmem>>, vector<8x128xf32>
    %c0_26 = arith.constant 0 : index
    %c0_27 = arith.constant 0 : index
    %47 = vector.load %arg2[%c0_26, %c0_27] : memref<128x512xf32, #tpu.memory_space<vmem>>, vector<128x512xf32>
    %cst_28 = arith.constant dense<0.000000e+00> : vector<8x512xf32>
    %48 = tpu.matmul %46, %47, %cst_28 {dimension_numbers = #tpu.dot_dimension_numbers<[1], [0], [0], [1], [0, 0, 1, 1], [], []>} : vector<8x128xf32>, vector<128x512xf32>, vector<8x512xf32> -> vector<8x512xf32>
    %49 = arith.addf %45, %48 : vector<8x512xf32>
    %50 = vector.extract_strided_slice %49 {offsets = [0, 0], sizes = [8, 128], strides = [1, 1]} : vector<8x512xf32> to vector<8x128xf32>
    %51 = arith.negf %50 : vector<8x128xf32>
    %52 = math.exp %51 : vector<8x128xf32>
    %cst_29 = arith.constant 1.000000e+00 : f32
    %53 = vector.broadcast %cst_29 : f32 to vector<8x128xf32>
    %54 = arith.addf %53, %52 : vector<8x128xf32>
    %55 = arith.divf %53, %54 : vector<8x128xf32>
    %56 = vector.extract_strided_slice %49 {offsets = [0, 128], sizes = [8, 128], strides = [1, 1]} : vector<8x512xf32> to vector<8x128xf32>
    %57 = arith.negf %56 : vector<8x128xf32>
    %58 = math.exp %57 : vector<8x128xf32>
    %cst_30 = arith.constant 1.000000e+00 : f32
    %59 = vector.broadcast %cst_30 : f32 to vector<8x128xf32>
    %60 = arith.addf %59, %58 : vector<8x128xf32>
    %61 = arith.divf %59, %60 : vector<8x128xf32>
    %62 = vector.extract_strided_slice %49 {offsets = [0, 256], sizes = [8, 128], strides = [1, 1]} : vector<8x512xf32> to vector<8x128xf32>
    %63 = math.tanh %62 : vector<8x128xf32>
    %64 = vector.extract_strided_slice %49 {offsets = [0, 384], sizes = [8, 128], strides = [1, 1]} : vector<8x512xf32> to vector<8x128xf32>
    %65 = arith.negf %64 : vector<8x128xf32>
    %66 = math.exp %65 : vector<8x128xf32>
    %cst_31 = arith.constant 1.000000e+00 : f32
    %67 = vector.broadcast %cst_31 : f32 to vector<8x128xf32>
    %68 = arith.addf %67, %66 : vector<8x128xf32>
    %69 = arith.divf %67, %68 : vector<8x128xf32>
    %c0_32 = arith.constant 0 : index
    %c0_33 = arith.constant 0 : index
    %70 = vector.load %arg7[%c0_32, %c0_33] : memref<8x128xf32, #tpu.memory_space<vmem>>, vector<8x128xf32>
    %71 = arith.mulf %61, %70 : vector<8x128xf32>
    %72 = arith.mulf %55, %63 : vector<8x128xf32>
    %73 = arith.addf %71, %72 : vector<8x128xf32>
    %74 = math.tanh %73 : vector<8x128xf32>
    %75 = arith.mulf %69, %74 : vector<8x128xf32>
    %c0_34 = arith.constant 0 : index
    %c0_35 = arith.constant 0 : index
    %76 = vector.load %arg7[%c0_34, %c0_35] : memref<8x128xf32, #tpu.memory_space<vmem>>, vector<8x128xf32>
    tpu.vector_store %arg7[%c0_34, %c0_35], %73 {strides = array<i32>} : memref<8x128xf32, #tpu.memory_space<vmem>>, vector<8x128xf32>,
    %c0_36 = arith.constant 0 : index
    %c0_37 = arith.constant 0 : index
    %77 = vector.load %arg6[%c0_36, %c0_37] : memref<8x128xf32, #tpu.memory_space<vmem>>, vector<8x128xf32>
    tpu.vector_store %arg6[%c0_36, %c0_37], %75 {strides = array<i32>} : memref<8x128xf32, #tpu.memory_space<vmem>>, vector<8x128xf32>,
    %78 = arith.index_cast %c1_i32 : i32 to index
    %c0_38 = arith.constant 0 : index
    %c0_39 = arith.constant 0 : index
    %79 = vector.load %arg8[%78, %c0_38, %c0_39] : memref<9x8x128xf32, #tpu.memory_space<vmem>>, vector<1x8x128xf32>
    %80 = vector.shape_cast %79 : vector<1x8x128xf32> to vector<8x128xf32>
    %81 = vector.shape_cast %75 : vector<8x128xf32> to vector<1x8x128xf32>
    tpu.vector_store %arg8[%78, %c0_38, %c0_39], %81 {strides = array<i32>} : memref<9x8x128xf32, #tpu.memory_space<vmem>>, vector<1x8x128xf32>,
    %c2_i32 = arith.constant 2 : i32
    %82 = arith.index_cast %c2_i32 : i32 to index
    %c0_40 = arith.constant 0 : index
    %c0_41 = arith.constant 0 : index
    %83 = vector.load %arg1[%82, %c0_40, %c0_41] : memref<9x8x512xf32, #tpu.memory_space<vmem>>, vector<1x8x512xf32>
    %84 = vector.shape_cast %83 : vector<1x8x512xf32> to vector<8x512xf32>
    %c0_42 = arith.constant 0 : index
    %c0_43 = arith.constant 0 : index
    %85 = vector.load %arg6[%c0_42, %c0_43] : memref<8x128xf32, #tpu.memory_space<vmem>>, vector<8x128xf32>
    %c0_44 = arith.constant 0 : index
    %c0_45 = arith.constant 0 : index
    %86 = vector.load %arg2[%c0_44, %c0_45] : memref<128x512xf32, #tpu.memory_space<vmem>>, vector<128x512xf32>
    %cst_46 = arith.constant dense<0.000000e+00> : vector<8x512xf32>
    %87 = tpu.matmul %85, %86, %cst_46 {dimension_numbers = #tpu.dot_dimension_numbers<[1], [0], [0], [1], [0, 0, 1, 1], [], []>} : vector<8x128xf32>, vector<128x512xf32>, vector<8x512xf32> -> vector<8x512xf32>
    %88 = arith.addf %84, %87 : vector<8x512xf32>
    %89 = vector.extract_strided_slice %88 {offsets = [0, 0], sizes = [8, 128], strides = [1, 1]} : vector<8x512xf32> to vector<8x128xf32>
    %90 = arith.negf %89 : vector<8x128xf32>
    %91 = math.exp %90 : vector<8x128xf32>
    %cst_47 = arith.constant 1.000000e+00 : f32
    %92 = vector.broadcast %cst_47 : f32 to vector<8x128xf32>
    %93 = arith.addf %92, %91 : vector<8x128xf32>
    %94 = arith.divf %92, %93 : vector<8x128xf32>
    %95 = vector.extract_strided_slice %88 {offsets = [0, 128], sizes = [8, 128], strides = [1, 1]} : vector<8x512xf32> to vector<8x128xf32>
    %96 = arith.negf %95 : vector<8x128xf32>
    %97 = math.exp %96 : vector<8x128xf32>
    %cst_48 = arith.constant 1.000000e+00 : f32
    %98 = vector.broadcast %cst_48 : f32 to vector<8x128xf32>
    %99 = arith.addf %98, %97 : vector<8x128xf32>
    %100 = arith.divf %98, %99 : vector<8x128xf32>
    %101 = vector.extract_strided_slice %88 {offsets = [0, 256], sizes = [8, 128], strides = [1, 1]} : vector<8x512xf32> to vector<8x128xf32>
    %102 = math.tanh %101 : vector<8x128xf32>
    %103 = vector.extract_strided_slice %88 {offsets = [0, 384], sizes = [8, 128], strides = [1, 1]} : vector<8x512xf32> to vector<8x128xf32>
    %104 = arith.negf %103 : vector<8x128xf32>
    %105 = math.exp %104 : vector<8x128xf32>
    %cst_49 = arith.constant 1.000000e+00 : f32
    %106 = vector.broadcast %cst_49 : f32 to vector<8x128xf32>
    %107 = arith.addf %106, %105 : vector<8x128xf32>
    %108 = arith.divf %106, %107 : vector<8x128xf32>
    %c0_50 = arith.constant 0 : index
    %c0_51 = arith.constant 0 : index
    %109 = vector.load %arg7[%c0_50, %c0_51] : memref<8x128xf32, #tpu.memory_space<vmem>>, vector<8x128xf32>
    %110 = arith.mulf %100, %109 : vector<8x128xf32>
    %111 = arith.mulf %94, %102 : vector<8x128xf32>
    %112 = arith.addf %110, %111 : vector<8x128xf32>
    %113 = math.tanh %112 : vector<8x128xf32>
    %114 = arith.mulf %108, %113 : vector<8x128xf32>
    %c0_52 = arith.constant 0 : index
    %c0_53 = arith.constant 0 : index
    %115 = vector.load %arg7[%c0_52, %c0_53] : memref<8x128xf32, #tpu.memory_space<vmem>>, vector<8x128xf32>
    tpu.vector_store %arg7[%c0_52, %c0_53], %112 {strides = array<i32>} : memref<8x128xf32, #tpu.memory_space<vmem>>, vector<8x128xf32>,
    %c0_54 = arith.constant 0 : index
    %c0_55 = arith.constant 0 : index
    %116 = vector.load %arg6[%c0_54, %c0_55] : memref<8x128xf32, #tpu.memory_space<vmem>>, vector<8x128xf32>
    tpu.vector_store %arg6[%c0_54, %c0_55], %114 {strides = array<i32>} : memref<8x128xf32, #tpu.memory_space<vmem>>, vector<8x128xf32>,
    %117 = arith.index_cast %c2_i32 : i32 to index
    %c0_56 = arith.constant 0 : index
    %c0_57 = arith.constant 0 : index
    %118 = vector.load %arg8[%117, %c0_56, %c0_57] : memref<9x8x128xf32, #tpu.memory_space<vmem>>, vector<1x8x128xf32>
    %119 = vector.shape_cast %118 : vector<1x8x128xf32> to vector<8x128xf32>
    %120 = vector.shape_cast %114 : vector<8x128xf32> to vector<1x8x128xf32>
    tpu.vector_store %arg8[%117, %c0_56, %c0_57], %120 {strides = array<i32>} : memref<9x8x128xf32, #tpu.memory_space<vmem>>, vector<1x8x128xf32>,
    %c3_i32 = arith.constant 3 : i32
    %121 = arith.index_cast %c3_i32 : i32 to index
    %c0_58 = arith.constant 0 : index
    %c0_59 = arith.constant 0 : index
    %122 = vector.load %arg1[%121, %c0_58, %c0_59] : memref<9x8x512xf32, #tpu.memory_space<vmem>>, vector<1x8x512xf32>
    %123 = vector.shape_cast %122 : vector<1x8x512xf32> to vector<8x512xf32>
    %c0_60 = arith.constant 0 : index
    %c0_61 = arith.constant 0 : index
    %124 = vector.load %arg6[%c0_60, %c0_61] : memref<8x128xf32, #tpu.memory_space<vmem>>, vector<8x128xf32>
    %c0_62 = arith.constant 0 : index
    %c0_63 = arith.constant 0 : index
    %125 = vector.load %arg2[%c0_62, %c0_63] : memref<128x512xf32, #tpu.memory_space<vmem>>, vector<128x512xf32>
    %cst_64 = arith.constant dense<0.000000e+00> : vector<8x512xf32>
    %126 = tpu.matmul %124, %125, %cst_64 {dimension_numbers = #tpu.dot_dimension_numbers<[1], [0], [0], [1], [0, 0, 1, 1], [], []>} : vector<8x128xf32>, vector<128x512xf32>, vector<8x512xf32> -> vector<8x512xf32>
    %127 = arith.addf %123, %126 : vector<8x512xf32>
    %128 = vector.extract_strided_slice %127 {offsets = [0, 0], sizes = [8, 128], strides = [1, 1]} : vector<8x512xf32> to vector<8x128xf32>
    %129 = arith.negf %128 : vector<8x128xf32>
    %130 = math.exp %129 : vector<8x128xf32>
    %cst_65 = arith.constant 1.000000e+00 : f32
    %131 = vector.broadcast %cst_65 : f32 to vector<8x128xf32>
    %132 = arith.addf %131, %130 : vector<8x128xf32>
    %133 = arith.divf %131, %132 : vector<8x128xf32>
    %134 = vector.extract_strided_slice %127 {offsets = [0, 128], sizes = [8, 128], strides = [1, 1]} : vector<8x512xf32> to vector<8x128xf32>
    %135 = arith.negf %134 : vector<8x128xf32>
    %136 = math.exp %135 : vector<8x128xf32>
    %cst_66 = arith.constant 1.000000e+00 : f32
    %137 = vector.broadcast %cst_66 : f32 to vector<8x128xf32>
    %138 = arith.addf %137, %136 : vector<8x128xf32>
    %139 = arith.divf %137, %138 : vector<8x128xf32>
    %140 = vector.extract_strided_slice %127 {offsets = [0, 256], sizes = [8, 128], strides = [1, 1]} : vector<8x512xf32> to vector<8x128xf32>
    %141 = math.tanh %140 : vector<8x128xf32>
    %142 = vector.extract_strided_slice %127 {offsets = [0, 384], sizes = [8, 128], strides = [1, 1]} : vector<8x512xf32> to vector<8x128xf32>
    %143 = arith.negf %142 : vector<8x128xf32>
    %144 = math.exp %143 : vector<8x128xf32>
    %cst_67 = arith.constant 1.000000e+00 : f32
    %145 = vector.broadcast %cst_67 : f32 to vector<8x128xf32>
    %146 = arith.addf %145, %144 : vector<8x128xf32>
    %147 = arith.divf %145, %146 : vector<8x128xf32>
    %c0_68 = arith.constant 0 : index
    %c0_69 = arith.constant 0 : index
    %148 = vector.load %arg7[%c0_68, %c0_69] : memref<8x128xf32, #tpu.memory_space<vmem>>, vector<8x128xf32>
    %149 = arith.mulf %139, %148 : vector<8x128xf32>
    %150 = arith.mulf %133, %141 : vector<8x128xf32>
    %151 = arith.addf %149, %150 : vector<8x128xf32>
    %152 = math.tanh %151 : vector<8x128xf32>
    %153 = arith.mulf %147, %152 : vector<8x128xf32>
    %c0_70 = arith.constant 0 : index
    %c0_71 = arith.constant 0 : index
    %154 = vector.load %arg7[%c0_70, %c0_71] : memref<8x128xf32, #tpu.memory_space<vmem>>, vector<8x128xf32>
    tpu.vector_store %arg7[%c0_70, %c0_71], %151 {strides = array<i32>} : memref<8x128xf32, #tpu.memory_space<vmem>>, vector<8x128xf32>,
    %c0_72 = arith.constant 0 : index
    %c0_73 = arith.constant 0 : index
    %155 = vector.load %arg6[%c0_72, %c0_73] : memref<8x128xf32, #tpu.memory_space<vmem>>, vector<8x128xf32>
    tpu.vector_store %arg6[%c0_72, %c0_73], %153 {strides = array<i32>} : memref<8x128xf32, #tpu.memory_space<vmem>>, vector<8x128xf32>,
    %156 = arith.index_cast %c3_i32 : i32 to index
    %c0_74 = arith.constant 0 : index
    %c0_75 = arith.constant 0 : index
    %157 = vector.load %arg8[%156, %c0_74, %c0_75] : memref<9x8x128xf32, #tpu.memory_space<vmem>>, vector<1x8x128xf32>
    %158 = vector.shape_cast %157 : vector<1x8x128xf32> to vector<8x128xf32>
    %159 = vector.shape_cast %153 : vector<8x128xf32> to vector<1x8x128xf32>
    tpu.vector_store %arg8[%156, %c0_74, %c0_75], %159 {strides = array<i32>} : memref<9x8x128xf32, #tpu.memory_space<vmem>>, vector<1x8x128xf32>,
    %c4_i32 = arith.constant 4 : i32
    %160 = arith.index_cast %c4_i32 : i32 to index
    %c0_76 = arith.constant 0 : index
    %c0_77 = arith.constant 0 : index
    %161 = vector.load %arg1[%160, %c0_76, %c0_77] : memref<9x8x512xf32, #tpu.memory_space<vmem>>, vector<1x8x512xf32>
    %162 = vector.shape_cast %161 : vector<1x8x512xf32> to vector<8x512xf32>
    %c0_78 = arith.constant 0 : index
    %c0_79 = arith.constant 0 : index
    %163 = vector.load %arg6[%c0_78, %c0_79] : memref<8x128xf32, #tpu.memory_space<vmem>>, vector<8x128xf32>
    %c0_80 = arith.constant 0 : index
    %c0_81 = arith.constant 0 : index
    %164 = vector.load %arg2[%c0_80, %c0_81] : memref<128x512xf32, #tpu.memory_space<vmem>>, vector<128x512xf32>
    %cst_82 = arith.constant dense<0.000000e+00> : vector<8x512xf32>
    %165 = tpu.matmul %163, %164, %cst_82 {dimension_numbers = #tpu.dot_dimension_numbers<[1], [0], [0], [1], [0, 0, 1, 1], [], []>} : vector<8x128xf32>, vector<128x512xf32>, vector<8x512xf32> -> vector<8x512xf32>
    %166 = arith.addf %162, %165 : vector<8x512xf32>
    %167 = vector.extract_strided_slice %166 {offsets = [0, 0], sizes = [8, 128], strides = [1, 1]} : vector<8x512xf32> to vector<8x128xf32>
    %168 = arith.negf %167 : vector<8x128xf32>
    %169 = math.exp %168 : vector<8x128xf32>
    %cst_83 = arith.constant 1.000000e+00 : f32
    %170 = vector.broadcast %cst_83 : f32 to vector<8x128xf32>
    %171 = arith.addf %170, %169 : vector<8x128xf32>
    %172 = arith.divf %170, %171 : vector<8x128xf32>
    %173 = vector.extract_strided_slice %166 {offsets = [0, 128], sizes = [8, 128], strides = [1, 1]} : vector<8x512xf32> to vector<8x128xf32>
    %174 = arith.negf %173 : vector<8x128xf32>
    %175 = math.exp %174 : vector<8x128xf32>
    %cst_84 = arith.constant 1.000000e+00 : f32
    %176 = vector.broadcast %cst_84 : f32 to vector<8x128xf32>
    %177 = arith.addf %176, %175 : vector<8x128xf32>
    %178 = arith.divf %176, %177 : vector<8x128xf32>
    %179 = vector.extract_strided_slice %166 {offsets = [0, 256], sizes = [8, 128], strides = [1, 1]} : vector<8x512xf32> to vector<8x128xf32>
    %180 = math.tanh %179 : vector<8x128xf32>
    %181 = vector.extract_strided_slice %166 {offsets = [0, 384], sizes = [8, 128], strides = [1, 1]} : vector<8x512xf32> to vector<8x128xf32>
    %182 = arith.negf %181 : vector<8x128xf32>
    %183 = math.exp %182 : vector<8x128xf32>
    %cst_85 = arith.constant 1.000000e+00 : f32
    %184 = vector.broadcast %cst_85 : f32 to vector<8x128xf32>
    %185 = arith.addf %184, %183 : vector<8x128xf32>
    %186 = arith.divf %184, %185 : vector<8x128xf32>
    %c0_86 = arith.constant 0 : index
    %c0_87 = arith.constant 0 : index
    %187 = vector.load %arg7[%c0_86, %c0_87] : memref<8x128xf32, #tpu.memory_space<vmem>>, vector<8x128xf32>
    %188 = arith.mulf %178, %187 : vector<8x128xf32>
    %189 = arith.mulf %172, %180 : vector<8x128xf32>
    %190 = arith.addf %188, %189 : vector<8x128xf32>
    %191 = math.tanh %190 : vector<8x128xf32>
    %192 = arith.mulf %186, %191 : vector<8x128xf32>
    %c0_88 = arith.constant 0 : index
    %c0_89 = arith.constant 0 : index
    %193 = vector.load %arg7[%c0_88, %c0_89] : memref<8x128xf32, #tpu.memory_space<vmem>>, vector<8x128xf32>
    tpu.vector_store %arg7[%c0_88, %c0_89], %190 {strides = array<i32>} : memref<8x128xf32, #tpu.memory_space<vmem>>, vector<8x128xf32>,
    %c0_90 = arith.constant 0 : index
    %c0_91 = arith.constant 0 : index
    %194 = vector.load %arg6[%c0_90, %c0_91] : memref<8x128xf32, #tpu.memory_space<vmem>>, vector<8x128xf32>
    tpu.vector_store %arg6[%c0_90, %c0_91], %192 {strides = array<i32>} : memref<8x128xf32, #tpu.memory_space<vmem>>, vector<8x128xf32>,
    %195 = arith.index_cast %c4_i32 : i32 to index
    %c0_92 = arith.constant 0 : index
    %c0_93 = arith.constant 0 : index
    %196 = vector.load %arg8[%195, %c0_92, %c0_93] : memref<9x8x128xf32, #tpu.memory_space<vmem>>, vector<1x8x128xf32>
    %197 = vector.shape_cast %196 : vector<1x8x128xf32> to vector<8x128xf32>
    %198 = vector.shape_cast %192 : vector<8x128xf32> to vector<1x8x128xf32>
    tpu.vector_store %arg8[%195, %c0_92, %c0_93], %198 {strides = array<i32>} : memref<9x8x128xf32, #tpu.memory_space<vmem>>, vector<1x8x128xf32>,
    %c5_i32 = arith.constant 5 : i32
    %199 = arith.index_cast %c5_i32 : i32 to index
    %c0_94 = arith.constant 0 : index
    %c0_95 = arith.constant 0 : index
    %200 = vector.load %arg1[%199, %c0_94, %c0_95] : memref<9x8x512xf32, #tpu.memory_space<vmem>>, vector<1x8x512xf32>
    %201 = vector.shape_cast %200 : vector<1x8x512xf32> to vector<8x512xf32>
    %c0_96 = arith.constant 0 : index
    %c0_97 = arith.constant 0 : index
    %202 = vector.load %arg6[%c0_96, %c0_97] : memref<8x128xf32, #tpu.memory_space<vmem>>, vector<8x128xf32>
    %c0_98 = arith.constant 0 : index
    %c0_99 = arith.constant 0 : index
    %203 = vector.load %arg2[%c0_98, %c0_99] : memref<128x512xf32, #tpu.memory_space<vmem>>, vector<128x512xf32>
    %cst_100 = arith.constant dense<0.000000e+00> : vector<8x512xf32>
    %204 = tpu.matmul %202, %203, %cst_100 {dimension_numbers = #tpu.dot_dimension_numbers<[1], [0], [0], [1], [0, 0, 1, 1], [], []>} : vector<8x128xf32>, vector<128x512xf32>, vector<8x512xf32> -> vector<8x512xf32>
    %205 = arith.addf %201, %204 : vector<8x512xf32>
    %206 = vector.extract_strided_slice %205 {offsets = [0, 0], sizes = [8, 128], strides = [1, 1]} : vector<8x512xf32> to vector<8x128xf32>
    %207 = arith.negf %206 : vector<8x128xf32>
    %208 = math.exp %207 : vector<8x128xf32>
    %cst_101 = arith.constant 1.000000e+00 : f32
    %209 = vector.broadcast %cst_101 : f32 to vector<8x128xf32>
    %210 = arith.addf %209, %208 : vector<8x128xf32>
    %211 = arith.divf %209, %210 : vector<8x128xf32>
    %212 = vector.extract_strided_slice %205 {offsets = [0, 128], sizes = [8, 128], strides = [1, 1]} : vector<8x512xf32> to vector<8x128xf32>
    %213 = arith.negf %212 : vector<8x128xf32>
    %214 = math.exp %213 : vector<8x128xf32>
    %cst_102 = arith.constant 1.000000e+00 : f32
    %215 = vector.broadcast %cst_102 : f32 to vector<8x128xf32>
    %216 = arith.addf %215, %214 : vector<8x128xf32>
    %217 = arith.divf %215, %216 : vector<8x128xf32>
    %218 = vector.extract_strided_slice %205 {offsets = [0, 256], sizes = [8, 128], strides = [1, 1]} : vector<8x512xf32> to vector<8x128xf32>
    %219 = math.tanh %218 : vector<8x128xf32>
    %220 = vector.extract_strided_slice %205 {offsets = [0, 384], sizes = [8, 128], strides = [1, 1]} : vector<8x512xf32> to vector<8x128xf32>
    %221 = arith.negf %220 : vector<8x128xf32>
    %222 = math.exp %221 : vector<8x128xf32>
    %cst_103 = arith.constant 1.000000e+00 : f32
    %223 = vector.broadcast %cst_103 : f32 to vector<8x128xf32>
    %224 = arith.addf %223, %222 : vector<8x128xf32>
    %225 = arith.divf %223, %224 : vector<8x128xf32>
    %c0_104 = arith.constant 0 : index
    %c0_105 = arith.constant 0 : index
    %226 = vector.load %arg7[%c0_104, %c0_105] : memref<8x128xf32, #tpu.memory_space<vmem>>, vector<8x128xf32>
    %227 = arith.mulf %217, %226 : vector<8x128xf32>
    %228 = arith.mulf %211, %219 : vector<8x128xf32>
    %229 = arith.addf %227, %228 : vector<8x128xf32>
    %230 = math.tanh %229 : vector<8x128xf32>
    %231 = arith.mulf %225, %230 : vector<8x128xf32>
    %c0_106 = arith.constant 0 : index
    %c0_107 = arith.constant 0 : index
    %232 = vector.load %arg7[%c0_106, %c0_107] : memref<8x128xf32, #tpu.memory_space<vmem>>, vector<8x128xf32>
    tpu.vector_store %arg7[%c0_106, %c0_107], %229 {strides = array<i32>} : memref<8x128xf32, #tpu.memory_space<vmem>>, vector<8x128xf32>,
    %c0_108 = arith.constant 0 : index
    %c0_109 = arith.constant 0 : index
    %233 = vector.load %arg6[%c0_108, %c0_109] : memref<8x128xf32, #tpu.memory_space<vmem>>, vector<8x128xf32>
    tpu.vector_store %arg6[%c0_108, %c0_109], %231 {strides = array<i32>} : memref<8x128xf32, #tpu.memory_space<vmem>>, vector<8x128xf32>,
    %234 = arith.index_cast %c5_i32 : i32 to index
    %c0_110 = arith.constant 0 : index
    %c0_111 = arith.constant 0 : index
    %235 = vector.load %arg8[%234, %c0_110, %c0_111] : memref<9x8x128xf32, #tpu.memory_space<vmem>>, vector<1x8x128xf32>
    %236 = vector.shape_cast %235 : vector<1x8x128xf32> to vector<8x128xf32>
    %237 = vector.shape_cast %231 : vector<8x128xf32> to vector<1x8x128xf32>
    tpu.vector_store %arg8[%234, %c0_110, %c0_111], %237 {strides = array<i32>} : memref<9x8x128xf32, #tpu.memory_space<vmem>>, vector<1x8x128xf32>,
    %c6_i32 = arith.constant 6 : i32
    %238 = arith.index_cast %c6_i32 : i32 to index
    %c0_112 = arith.constant 0 : index
    %c0_113 = arith.constant 0 : index
    %239 = vector.load %arg1[%238, %c0_112, %c0_113] : memref<9x8x512xf32, #tpu.memory_space<vmem>>, vector<1x8x512xf32>
    %240 = vector.shape_cast %239 : vector<1x8x512xf32> to vector<8x512xf32>
    %c0_114 = arith.constant 0 : index
    %c0_115 = arith.constant 0 : index
    %241 = vector.load %arg6[%c0_114, %c0_115] : memref<8x128xf32, #tpu.memory_space<vmem>>, vector<8x128xf32>
    %c0_116 = arith.constant 0 : index
    %c0_117 = arith.constant 0 : index
    %242 = vector.load %arg2[%c0_116, %c0_117] : memref<128x512xf32, #tpu.memory_space<vmem>>, vector<128x512xf32>
    %cst_118 = arith.constant dense<0.000000e+00> : vector<8x512xf32>
    %243 = tpu.matmul %241, %242, %cst_118 {dimension_numbers = #tpu.dot_dimension_numbers<[1], [0], [0], [1], [0, 0, 1, 1], [], []>} : vector<8x128xf32>, vector<128x512xf32>, vector<8x512xf32> -> vector<8x512xf32>
    %244 = arith.addf %240, %243 : vector<8x512xf32>
    %245 = vector.extract_strided_slice %244 {offsets = [0, 0], sizes = [8, 128], strides = [1, 1]} : vector<8x512xf32> to vector<8x128xf32>
    %246 = arith.negf %245 : vector<8x128xf32>
    %247 = math.exp %246 : vector<8x128xf32>
    %cst_119 = arith.constant 1.000000e+00 : f32
    %248 = vector.broadcast %cst_119 : f32 to vector<8x128xf32>
    %249 = arith.addf %248, %247 : vector<8x128xf32>
    %250 = arith.divf %248, %249 : vector<8x128xf32>
    %251 = vector.extract_strided_slice %244 {offsets = [0, 128], sizes = [8, 128], strides = [1, 1]} : vector<8x512xf32> to vector<8x128xf32>
    %252 = arith.negf %251 : vector<8x128xf32>
    %253 = math.exp %252 : vector<8x128xf32>
    %cst_120 = arith.constant 1.000000e+00 : f32
    %254 = vector.broadcast %cst_120 : f32 to vector<8x128xf32>
    %255 = arith.addf %254, %253 : vector<8x128xf32>
    %256 = arith.divf %254, %255 : vector<8x128xf32>
    %257 = vector.extract_strided_slice %244 {offsets = [0, 256], sizes = [8, 128], strides = [1, 1]} : vector<8x512xf32> to vector<8x128xf32>
    %258 = math.tanh %257 : vector<8x128xf32>
    %259 = vector.extract_strided_slice %244 {offsets = [0, 384], sizes = [8, 128], strides = [1, 1]} : vector<8x512xf32> to vector<8x128xf32>
    %260 = arith.negf %259 : vector<8x128xf32>
    %261 = math.exp %260 : vector<8x128xf32>
    %cst_121 = arith.constant 1.000000e+00 : f32
    %262 = vector.broadcast %cst_121 : f32 to vector<8x128xf32>
    %263 = arith.addf %262, %261 : vector<8x128xf32>
    %264 = arith.divf %262, %263 : vector<8x128xf32>
    %c0_122 = arith.constant 0 : index
    %c0_123 = arith.constant 0 : index
    %265 = vector.load %arg7[%c0_122, %c0_123] : memref<8x128xf32, #tpu.memory_space<vmem>>, vector<8x128xf32>
    %266 = arith.mulf %256, %265 : vector<8x128xf32>
    %267 = arith.mulf %250, %258 : vector<8x128xf32>
    %268 = arith.addf %266, %267 : vector<8x128xf32>
    %269 = math.tanh %268 : vector<8x128xf32>
    %270 = arith.mulf %264, %269 : vector<8x128xf32>
    %c0_124 = arith.constant 0 : index
    %c0_125 = arith.constant 0 : index
    %271 = vector.load %arg7[%c0_124, %c0_125] : memref<8x128xf32, #tpu.memory_space<vmem>>, vector<8x128xf32>
    tpu.vector_store %arg7[%c0_124, %c0_125], %268 {strides = array<i32>} : memref<8x128xf32, #tpu.memory_space<vmem>>, vector<8x128xf32>,
    %c0_126 = arith.constant 0 : index
    %c0_127 = arith.constant 0 : index
    %272 = vector.load %arg6[%c0_126, %c0_127] : memref<8x128xf32, #tpu.memory_space<vmem>>, vector<8x128xf32>
    tpu.vector_store %arg6[%c0_126, %c0_127], %270 {strides = array<i32>} : memref<8x128xf32, #tpu.memory_space<vmem>>, vector<8x128xf32>,
    %273 = arith.index_cast %c6_i32 : i32 to index
    %c0_128 = arith.constant 0 : index
    %c0_129 = arith.constant 0 : index
    %274 = vector.load %arg8[%273, %c0_128, %c0_129] : memref<9x8x128xf32, #tpu.memory_space<vmem>>, vector<1x8x128xf32>
    %275 = vector.shape_cast %274 : vector<1x8x128xf32> to vector<8x128xf32>
    %276 = vector.shape_cast %270 : vector<8x128xf32> to vector<1x8x128xf32>
    tpu.vector_store %arg8[%273, %c0_128, %c0_129], %276 {strides = array<i32>} : memref<9x8x128xf32, #tpu.memory_space<vmem>>, vector<1x8x128xf32>,
    %c7_i32 = arith.constant 7 : i32
    %277 = arith.index_cast %c7_i32 : i32 to index
    %c0_130 = arith.constant 0 : index
    %c0_131 = arith.constant 0 : index
    %278 = vector.load %arg1[%277, %c0_130, %c0_131] : memref<9x8x512xf32, #tpu.memory_space<vmem>>, vector<1x8x512xf32>
    %279 = vector.shape_cast %278 : vector<1x8x512xf32> to vector<8x512xf32>
    %c0_132 = arith.constant 0 : index
    %c0_133 = arith.constant 0 : index
    %280 = vector.load %arg6[%c0_132, %c0_133] : memref<8x128xf32, #tpu.memory_space<vmem>>, vector<8x128xf32>
    %c0_134 = arith.constant 0 : index
    %c0_135 = arith.constant 0 : index
    %281 = vector.load %arg2[%c0_134, %c0_135] : memref<128x512xf32, #tpu.memory_space<vmem>>, vector<128x512xf32>
    %cst_136 = arith.constant dense<0.000000e+00> : vector<8x512xf32>
    %282 = tpu.matmul %280, %281, %cst_136 {dimension_numbers = #tpu.dot_dimension_numbers<[1], [0], [0], [1], [0, 0, 1, 1], [], []>} : vector<8x128xf32>, vector<128x512xf32>, vector<8x512xf32> -> vector<8x512xf32>
    %283 = arith.addf %279, %282 : vector<8x512xf32>
    %284 = vector.extract_strided_slice %283 {offsets = [0, 0], sizes = [8, 128], strides = [1, 1]} : vector<8x512xf32> to vector<8x128xf32>
    %285 = arith.negf %284 : vector<8x128xf32>
    %286 = math.exp %285 : vector<8x128xf32>
    %cst_137 = arith.constant 1.000000e+00 : f32
    %287 = vector.broadcast %cst_137 : f32 to vector<8x128xf32>
    %288 = arith.addf %287, %286 : vector<8x128xf32>
    %289 = arith.divf %287, %288 : vector<8x128xf32>
    %290 = vector.extract_strided_slice %283 {offsets = [0, 128], sizes = [8, 128], strides = [1, 1]} : vector<8x512xf32> to vector<8x128xf32>
    %291 = arith.negf %290 : vector<8x128xf32>
    %292 = math.exp %291 : vector<8x128xf32>
    %cst_138 = arith.constant 1.000000e+00 : f32
    %293 = vector.broadcast %cst_138 : f32 to vector<8x128xf32>
    %294 = arith.addf %293, %292 : vector<8x128xf32>
    %295 = arith.divf %293, %294 : vector<8x128xf32>
    %296 = vector.extract_strided_slice %283 {offsets = [0, 256], sizes = [8, 128], strides = [1, 1]} : vector<8x512xf32> to vector<8x128xf32>
    %297 = math.tanh %296 : vector<8x128xf32>
    %298 = vector.extract_strided_slice %283 {offsets = [0, 384], sizes = [8, 128], strides = [1, 1]} : vector<8x512xf32> to vector<8x128xf32>
    %299 = arith.negf %298 : vector<8x128xf32>
    %300 = math.exp %299 : vector<8x128xf32>
    %cst_139 = arith.constant 1.000000e+00 : f32
    %301 = vector.broadcast %cst_139 : f32 to vector<8x128xf32>
    %302 = arith.addf %301, %300 : vector<8x128xf32>
    %303 = arith.divf %301, %302 : vector<8x128xf32>
    %c0_140 = arith.constant 0 : index
    %c0_141 = arith.constant 0 : index
    %304 = vector.load %arg7[%c0_140, %c0_141] : memref<8x128xf32, #tpu.memory_space<vmem>>, vector<8x128xf32>
    %305 = arith.mulf %295, %304 : vector<8x128xf32>
    %306 = arith.mulf %289, %297 : vector<8x128xf32>
    %307 = arith.addf %305, %306 : vector<8x128xf32>
    %308 = math.tanh %307 : vector<8x128xf32>
    %309 = arith.mulf %303, %308 : vector<8x128xf32>
    %c0_142 = arith.constant 0 : index
    %c0_143 = arith.constant 0 : index
    %310 = vector.load %arg7[%c0_142, %c0_143] : memref<8x128xf32, #tpu.memory_space<vmem>>, vector<8x128xf32>
    tpu.vector_store %arg7[%c0_142, %c0_143], %307 {strides = array<i32>} : memref<8x128xf32, #tpu.memory_space<vmem>>, vector<8x128xf32>,
    %c0_144 = arith.constant 0 : index
    %c0_145 = arith.constant 0 : index
    %311 = vector.load %arg6[%c0_144, %c0_145] : memref<8x128xf32, #tpu.memory_space<vmem>>, vector<8x128xf32>
    tpu.vector_store %arg6[%c0_144, %c0_145], %309 {strides = array<i32>} : memref<8x128xf32, #tpu.memory_space<vmem>>, vector<8x128xf32>,
    %312 = arith.index_cast %c7_i32 : i32 to index
    %c0_146 = arith.constant 0 : index
    %c0_147 = arith.constant 0 : index
    %313 = vector.load %arg8[%312, %c0_146, %c0_147] : memref<9x8x128xf32, #tpu.memory_space<vmem>>, vector<1x8x128xf32>
    %314 = vector.shape_cast %313 : vector<1x8x128xf32> to vector<8x128xf32>
    %315 = vector.shape_cast %309 : vector<8x128xf32> to vector<1x8x128xf32>
    tpu.vector_store %arg8[%312, %c0_146, %c0_147], %315 {strides = array<i32>} : memref<9x8x128xf32, #tpu.memory_space<vmem>>, vector<1x8x128xf32>,
    %c8_i32 = arith.constant 8 : i32
    %316 = arith.index_cast %c8_i32 : i32 to index
    %c0_148 = arith.constant 0 : index
    %c0_149 = arith.constant 0 : index
    %317 = vector.load %arg1[%316, %c0_148, %c0_149] : memref<9x8x512xf32, #tpu.memory_space<vmem>>, vector<1x8x512xf32>
    %318 = vector.shape_cast %317 : vector<1x8x512xf32> to vector<8x512xf32>
    %c0_150 = arith.constant 0 : index
    %c0_151 = arith.constant 0 : index
    %319 = vector.load %arg6[%c0_150, %c0_151] : memref<8x128xf32, #tpu.memory_space<vmem>>, vector<8x128xf32>
    %c0_152 = arith.constant 0 : index
    %c0_153 = arith.constant 0 : index
    %320 = vector.load %arg2[%c0_152, %c0_153] : memref<128x512xf32, #tpu.memory_space<vmem>>, vector<128x512xf32>
    %cst_154 = arith.constant dense<0.000000e+00> : vector<8x512xf32>
    %321 = tpu.matmul %319, %320, %cst_154 {dimension_numbers = #tpu.dot_dimension_numbers<[1], [0], [0], [1], [0, 0, 1, 1], [], []>} : vector<8x128xf32>, vector<128x512xf32>, vector<8x512xf32> -> vector<8x512xf32>
    %322 = arith.addf %318, %321 : vector<8x512xf32>
    %323 = vector.extract_strided_slice %322 {offsets = [0, 0], sizes = [8, 128], strides = [1, 1]} : vector<8x512xf32> to vector<8x128xf32>
    %324 = arith.negf %323 : vector<8x128xf32>
    %325 = math.exp %324 : vector<8x128xf32>
    %cst_155 = arith.constant 1.000000e+00 : f32
    %326 = vector.broadcast %cst_155 : f32 to vector<8x128xf32>
    %327 = arith.addf %326, %325 : vector<8x128xf32>
    %328 = arith.divf %326, %327 : vector<8x128xf32>
    %329 = vector.extract_strided_slice %322 {offsets = [0, 128], sizes = [8, 128], strides = [1, 1]} : vector<8x512xf32> to vector<8x128xf32>
    %330 = arith.negf %329 : vector<8x128xf32>
    %331 = math.exp %330 : vector<8x128xf32>
    %cst_156 = arith.constant 1.000000e+00 : f32
    %332 = vector.broadcast %cst_156 : f32 to vector<8x128xf32>
    %333 = arith.addf %332, %331 : vector<8x128xf32>
    %334 = arith.divf %332, %333 : vector<8x128xf32>
    %335 = vector.extract_strided_slice %322 {offsets = [0, 256], sizes = [8, 128], strides = [1, 1]} : vector<8x512xf32> to vector<8x128xf32>
    %336 = math.tanh %335 : vector<8x128xf32>
    %337 = vector.extract_strided_slice %322 {offsets = [0, 384], sizes = [8, 128], strides = [1, 1]} : vector<8x512xf32> to vector<8x128xf32>
    %338 = arith.negf %337 : vector<8x128xf32>
    %339 = math.exp %338 : vector<8x128xf32>
    %cst_157 = arith.constant 1.000000e+00 : f32
    %340 = vector.broadcast %cst_157 : f32 to vector<8x128xf32>
    %341 = arith.addf %340, %339 : vector<8x128xf32>
    %342 = arith.divf %340, %341 : vector<8x128xf32>
    %c0_158 = arith.constant 0 : index
    %c0_159 = arith.constant 0 : index
    %343 = vector.load %arg7[%c0_158, %c0_159] : memref<8x128xf32, #tpu.memory_space<vmem>>, vector<8x128xf32>
    %344 = arith.mulf %334, %343 : vector<8x128xf32>
    %345 = arith.mulf %328, %336 : vector<8x128xf32>
    %346 = arith.addf %344, %345 : vector<8x128xf32>
    %347 = math.tanh %346 : vector<8x128xf32>
    %348 = arith.mulf %342, %347 : vector<8x128xf32>
    %c0_160 = arith.constant 0 : index
    %c0_161 = arith.constant 0 : index
    %349 = vector.load %arg7[%c0_160, %c0_161] : memref<8x128xf32, #tpu.memory_space<vmem>>, vector<8x128xf32>
    tpu.vector_store %arg7[%c0_160, %c0_161], %346 {strides = array<i32>} : memref<8x128xf32, #tpu.memory_space<vmem>>, vector<8x128xf32>,
    %c0_162 = arith.constant 0 : index
    %c0_163 = arith.constant 0 : index
    %350 = vector.load %arg6[%c0_162, %c0_163] : memref<8x128xf32, #tpu.memory_space<vmem>>, vector<8x128xf32>
    tpu.vector_store %arg6[%c0_162, %c0_163], %348 {strides = array<i32>} : memref<8x128xf32, #tpu.memory_space<vmem>>, vector<8x128xf32>,
    %351 = arith.index_cast %c8_i32 : i32 to index
    %c0_164 = arith.constant 0 : index
    %c0_165 = arith.constant 0 : index
    %352 = vector.load %arg8[%351, %c0_164, %c0_165] : memref<9x8x128xf32, #tpu.memory_space<vmem>>, vector<1x8x128xf32>
    %353 = vector.shape_cast %352 : vector<1x8x128xf32> to vector<8x128xf32>
    %354 = vector.shape_cast %348 : vector<8x128xf32> to vector<1x8x128xf32>
    tpu.vector_store %arg8[%351, %c0_164, %c0_165], %354 {strides = array<i32>} : memref<9x8x128xf32, #tpu.memory_space<vmem>>, vector<1x8x128xf32>,
    %c9_i32 = arith.constant 9 : i32
    %c0_166 = arith.constant 0 : index
    %c0_167 = arith.constant 0 : index
    %c0_168 = arith.constant 0 : index
    %355 = vector.load %arg8[%c0_166, %c0_167, %c0_168] : memref<9x8x128xf32, #tpu.memory_space<vmem>>, vector<9x8x128xf32>
    %356 = vector.shape_cast %355 : vector<9x8x128xf32> to vector<72x128xf32>
    %c0_169 = arith.constant 0 : index
    %c0_170 = arith.constant 0 : index
    %357 = vector.load %arg3[%c0_169, %c0_170] : memref<128x128xf32, #tpu.memory_space<vmem>>, vector<128x128xf32>
    %cst_171 = arith.constant dense<0.000000e+00> : vector<72x128xf32>
    %358 = tpu.matmul %356, %357, %cst_171 {dimension_numbers = #tpu.dot_dimension_numbers<[1], [0], [0], [1], [0, 0, 1, 1], [], []>} : vector<72x128xf32>, vector<128x128xf32>, vector<72x128xf32> -> vector<72x128xf32>
    %c0_172 = arith.constant 0 : index
    %c0_173 = arith.constant 0 : index
    %359 = vector.load %arg4[%c0_172, %c0_173] : memref<1x128xf32, #tpu.memory_space<vmem>>, vector<1x128xf32>
    %360 = vector.broadcast %359 : vector<1x128xf32> to vector<72x128xf32>
    %361 = arith.addf %358, %360 : vector<72x128xf32>
    %362 = vector.shape_cast %361 : vector<72x128xf32> to vector<9x8x128xf32>
    %363 = vector.extract_strided_slice %362 {offsets = [0, 0, 0], sizes = [9, 1, 128], strides = [1, 1, 1]} : vector<9x8x128xf32> to vector<9x1x128xf32>
    %364 = vector.shape_cast %363 : vector<9x1x128xf32> to vector<9x128xf32>
    %c0_174 = arith.constant 0 : index
    %c0_175 = arith.constant 0 : index
    %c0_176 = arith.constant 0 : index
    %365 = vector.load %arg5[%c0_174, %c0_175, %c0_176] : memref<8x9x128xf32, #tpu.memory_space<vmem>>, vector<1x9x128xf32>
    %366 = vector.shape_cast %365 : vector<1x9x128xf32> to vector<9x128xf32>
    %367 = vector.shape_cast %364 : vector<9x128xf32> to vector<1x9x128xf32>
    tpu.vector_store %arg5[%c0_174, %c0_175, %c0_176], %367 {strides = array<i32>} : memref<8x9x128xf32, #tpu.memory_space<vmem>>, vector<1x9x128xf32>,
    %368 = vector.extract_strided_slice %362 {offsets = [0, 1, 0], sizes = [9, 1, 128], strides = [1, 1, 1]} : vector<9x8x128xf32> to vector<9x1x128xf32>
    %369 = vector.shape_cast %368 : vector<9x1x128xf32> to vector<9x128xf32>
    %c1 = arith.constant 1 : index
    %c0_177 = arith.constant 0 : index
    %c0_178 = arith.constant 0 : index
    %370 = vector.load %arg5[%c1, %c0_177, %c0_178] : memref<8x9x128xf32, #tpu.memory_space<vmem>>, vector<1x9x128xf32>
    %371 = vector.shape_cast %370 : vector<1x9x128xf32> to vector<9x128xf32>
    %372 = vector.shape_cast %369 : vector<9x128xf32> to vector<1x9x128xf32>
    tpu.vector_store %arg5[%c1, %c0_177, %c0_178], %372 {strides = array<i32>} : memref<8x9x128xf32, #tpu.memory_space<vmem>>, vector<1x9x128xf32>,
    %373 = vector.extract_strided_slice %362 {offsets = [0, 2, 0], sizes = [9, 1, 128], strides = [1, 1, 1]} : vector<9x8x128xf32> to vector<9x1x128xf32>
    %374 = vector.shape_cast %373 : vector<9x1x128xf32> to vector<9x128xf32>
    %c2 = arith.constant 2 : index
    %c0_179 = arith.constant 0 : index
    %c0_180 = arith.constant 0 : index
    %375 = vector.load %arg5[%c2, %c0_179, %c0_180] : memref<8x9x128xf32, #tpu.memory_space<vmem>>, vector<1x9x128xf32>
    %376 = vector.shape_cast %375 : vector<1x9x128xf32> to vector<9x128xf32>
    %377 = vector.shape_cast %374 : vector<9x128xf32> to vector<1x9x128xf32>
    tpu.vector_store %arg5[%c2, %c0_179, %c0_180], %377 {strides = array<i32>} : memref<8x9x128xf32, #tpu.memory_space<vmem>>, vector<1x9x128xf32>,
    %378 = vector.extract_strided_slice %362 {offsets = [0, 3, 0], sizes = [9, 1, 128], strides = [1, 1, 1]} : vector<9x8x128xf32> to vector<9x1x128xf32>
    %379 = vector.shape_cast %378 : vector<9x1x128xf32> to vector<9x128xf32>
    %c3 = arith.constant 3 : index
    %c0_181 = arith.constant 0 : index
    %c0_182 = arith.constant 0 : index
    %380 = vector.load %arg5[%c3, %c0_181, %c0_182] : memref<8x9x128xf32, #tpu.memory_space<vmem>>, vector<1x9x128xf32>
    %381 = vector.shape_cast %380 : vector<1x9x128xf32> to vector<9x128xf32>
    %382 = vector.shape_cast %379 : vector<9x128xf32> to vector<1x9x128xf32>
    tpu.vector_store %arg5[%c3, %c0_181, %c0_182], %382 {strides = array<i32>} : memref<8x9x128xf32, #tpu.memory_space<vmem>>, vector<1x9x128xf32>,
    %383 = vector.extract_strided_slice %362 {offsets = [0, 4, 0], sizes = [9, 1, 128], strides = [1, 1, 1]} : vector<9x8x128xf32> to vector<9x1x128xf32>
    %384 = vector.shape_cast %383 : vector<9x1x128xf32> to vector<9x128xf32>
    %c4 = arith.constant 4 : index
    %c0_183 = arith.constant 0 : index
    %c0_184 = arith.constant 0 : index
    %385 = vector.load %arg5[%c4, %c0_183, %c0_184] : memref<8x9x128xf32, #tpu.memory_space<vmem>>, vector<1x9x128xf32>
    %386 = vector.shape_cast %385 : vector<1x9x128xf32> to vector<9x128xf32>
    %387 = vector.shape_cast %384 : vector<9x128xf32> to vector<1x9x128xf32>
    tpu.vector_store %arg5[%c4, %c0_183, %c0_184], %387 {strides = array<i32>} : memref<8x9x128xf32, #tpu.memory_space<vmem>>, vector<1x9x128xf32>,
    %388 = vector.extract_strided_slice %362 {offsets = [0, 5, 0], sizes = [9, 1, 128], strides = [1, 1, 1]} : vector<9x8x128xf32> to vector<9x1x128xf32>
    %389 = vector.shape_cast %388 : vector<9x1x128xf32> to vector<9x128xf32>
    %c5 = arith.constant 5 : index
    %c0_185 = arith.constant 0 : index
    %c0_186 = arith.constant 0 : index
    %390 = vector.load %arg5[%c5, %c0_185, %c0_186] : memref<8x9x128xf32, #tpu.memory_space<vmem>>, vector<1x9x128xf32>
    %391 = vector.shape_cast %390 : vector<1x9x128xf32> to vector<9x128xf32>
    %392 = vector.shape_cast %389 : vector<9x128xf32> to vector<1x9x128xf32>
    tpu.vector_store %arg5[%c5, %c0_185, %c0_186], %392 {strides = array<i32>} : memref<8x9x128xf32, #tpu.memory_space<vmem>>, vector<1x9x128xf32>,
    %393 = vector.extract_strided_slice %362 {offsets = [0, 6, 0], sizes = [9, 1, 128], strides = [1, 1, 1]} : vector<9x8x128xf32> to vector<9x1x128xf32>
    %394 = vector.shape_cast %393 : vector<9x1x128xf32> to vector<9x128xf32>
    %c6 = arith.constant 6 : index
    %c0_187 = arith.constant 0 : index
    %c0_188 = arith.constant 0 : index
    %395 = vector.load %arg5[%c6, %c0_187, %c0_188] : memref<8x9x128xf32, #tpu.memory_space<vmem>>, vector<1x9x128xf32>
    %396 = vector.shape_cast %395 : vector<1x9x128xf32> to vector<9x128xf32>
    %397 = vector.shape_cast %394 : vector<9x128xf32> to vector<1x9x128xf32>
    tpu.vector_store %arg5[%c6, %c0_187, %c0_188], %397 {strides = array<i32>} : memref<8x9x128xf32, #tpu.memory_space<vmem>>, vector<1x9x128xf32>,
    %398 = vector.extract_strided_slice %362 {offsets = [0, 7, 0], sizes = [9, 1, 128], strides = [1, 1, 1]} : vector<9x8x128xf32> to vector<9x1x128xf32>
    %399 = vector.shape_cast %398 : vector<9x1x128xf32> to vector<9x128xf32>
    %c7 = arith.constant 7 : index
    %c0_189 = arith.constant 0 : index
    %c0_190 = arith.constant 0 : index
    %400 = vector.load %arg5[%c7, %c0_189, %c0_190] : memref<8x9x128xf32, #tpu.memory_space<vmem>>, vector<1x9x128xf32>
    %401 = vector.shape_cast %400 : vector<1x9x128xf32> to vector<9x128xf32>
    %402 = vector.shape_cast %399 : vector<9x128xf32> to vector<1x9x128xf32>
    tpu.vector_store %arg5[%c7, %c0_189, %c0_190], %402 {strides = array<i32>} : memref<8x9x128xf32, #tpu.memory_space<vmem>>, vector<1x9x128xf32>,
    return
  }
  func.func @transform_0(%arg0: i32) -> (i32, i32, i32) {
    %c0_i32 = arith.constant 0 : i32
    %c0_i32_0 = arith.constant 0 : i32
    %c0_i32_1 = arith.constant 0 : i32
    %c0_i32_2 = arith.constant 0 : i32
    return %c0_i32, %c0_i32_0, %c0_i32_1 : i32, i32, i32
  }
  func.func @transform_1(%arg0: i32) -> (i32, i32) {
    %c0_i32 = arith.constant 0 : i32
    %c0_i32_0 = arith.constant 0 : i32
    %c0_i32_1 = arith.constant 0 : i32
    return %c0_i32, %c0_i32_0 : i32, i32
  }
  func.func @transform_2(%arg0: i32) -> (i32, i32) {
    %c0_i32 = arith.constant 0 : i32
    %c0_i32_0 = arith.constant 0 : i32
    %c0_i32_1 = arith.constant 0 : i32
    return %c0_i32, %c0_i32_0 : i32, i32
  }
  func.func @transform_3(%arg0: i32) -> (i32, i32) {
    %c0_i32 = arith.constant 0 : i32
    %c0_i32_0 = arith.constant 0 : i32
    %c0_i32_1 = arith.constant 0 : i32
    return %c0_i32, %c0_i32_0 : i32, i32
  }
  func.func @transform_4(%arg0: i32) -> (i32, i32, i32) {
    %c0_i32 = arith.constant 0 : i32
    %c0_i32_0 = arith.constant 0 : i32
    %c0_i32_1 = arith.constant 0 : i32
    %c0_i32_2 = arith.constant 0 : i32
    return %c0_i32, %c0_i32_0, %c0_i32_1 : i32, i32, i32
  }
}

</mosaic_0001>

<llo_original>
// kernel: decoder_forward.1
$region0: #{decoder_forward.1}
  #allocation0 [shape = 'u32[]', space=smem, size = 0x4, offset = 0x4, fixed_abs, tag = 'smem constant byte address 0x4 - core index']
  #allocation1 [shape = 'u32[144,128]{1,0:T(1,128)}', space=vmem, size = 0x12000, scoped, tag = 'internal scratch']
  #allocation2 [shape = 'f32[8,128]{1,0:T(8,128)}', space=vmem, size = 0x1000, scoped, tag = 'scratch operand']
  #allocation3 [shape = 'f32[8,128]{1,0:T(8,128)}', space=vmem, size = 0x1000, scoped, tag = 'scratch operand']
  #allocation4 [shape = 'f32[9,8,128]{2,1,0:T(8,128)}', space=vmem, size = 0x9000, scoped, tag = 'scratch operand']
  %s0 = inlined_call_operand.vmem [shape: f32[9,8,512], index: 0, kind: input, shape index: {}]
  %s1 = inlined_call_operand.vmem [shape: f32[128,512], index: 1, kind: input, shape index: {}]
  %s2 = inlined_call_operand.vmem [shape: f32[128,128], index: 2, kind: input, shape index: {}]
  %s3 = inlined_call_operand.vmem [shape: f32[1,128], index: 3, kind: input, shape index: {}]
  %s4 = inlined_call_operand.vmem [shape: f32[8,9,128], index: 4, kind: output, shape index: {}]
  %s5 = sld [smem:[#allocation0]]
  $region26: #{decoder_forward.1} parent=0
    _
  %s7 = ssub.s32 1, %s5
  %s8 = scalar_select 0, %s7, %s5
  // Predicated region
  $region2: #{decoder_forward.1} parent=0 // pred_check
    _
  $region3: #{decoder_forward.1} parent=0 // pred_check_branch
    %10 = sbr.rel (0) target = $region5
  $region4: #{decoder_forward.1} parent=0 // pred_region
    _
  $region5: #{decoder_forward.1} parent=0 // pred_fallthru
    _
  // Predicated region
  $region6: #{decoder_forward.1} parent=0 // pred_check
    _
  $region7: #{decoder_forward.1} parent=0 // pred_check_branch
    %12 = sbr.rel (0) target = $region9
  $region8: #{decoder_forward.1} parent=0 // pred_region
    _
  $region9: #{decoder_forward.1} parent=0 // pred_fallthru
    _
  // Predicated region
  $region10: #{decoder_forward.1} parent=0 // pred_check
    _
  $region11: #{decoder_forward.1} parent=0 // pred_check_branch
    %14 = sbr.rel (0) target = $region13
  $region12: #{decoder_forward.1} parent=0 // pred_region
    _
  $region13: #{decoder_forward.1} parent=0 // pred_fallthru
    _
  // Predicated region
  $region14: #{decoder_forward.1} parent=0 // pred_check
    _
  $region15: #{decoder_forward.1} parent=0 // pred_check_branch
    %16 = sbr.rel (0) target = $region17
  $region16: #{decoder_forward.1} parent=0 // pred_region
    _
  $region17: #{decoder_forward.1} parent=0 // pred_fallthru
    _
  %17 = vst [vmem:[#allocation2] sm:$0xff] 0.0
  %18 = vst [vmem:[#allocation3] sm:$0xff] 0.0
  %v19 = vld [vmem:[%s0] sm:$0xff]
  %v20 = vld [vmem:[%s0 + $0x8] sm:$0xff]
  %v21 = vld [vmem:[%s0 + $0x10] sm:$0xff]
  %v22 = vld [vmem:[%s0 + $0x18] sm:$0xff]
  %v23 = vld [vmem:[#allocation2] sm:$0xff]
  %v24 = vld [vmem:[%s1] sm:$0xff]
  %v25 = vld [vmem:[%s1 + $0x8] sm:$0xff]
  %v26 = vld [vmem:[%s1 + $0x10] sm:$0xff]
  %v27 = vld [vmem:[%s1 + $0x18] sm:$0xff]
  %v28 = vld [vmem:[%s1 + $0x20] sm:$0xff]
  %v29 = vld [vmem:[%s1 + $0x28] sm:$0xff]
  %v30 = vld [vmem:[%s1 + $0x30] sm:$0xff]
  %v31 = vld [vmem:[%s1 + $0x38] sm:$0xff]
  %v32 = vld [vmem:[%s1 + $0x40] sm:$0xff]
  %v33 = vld [vmem:[%s1 + $0x48] sm:$0xff]
  %v34 = vld [vmem:[%s1 + $0x50] sm:$0xff]
  %v35 = vld [vmem:[%s1 + $0x58] sm:$0xff]
  %v36 = vld [vmem:[%s1 + $0x60] sm:$0xff]
  %v37 = vld [vmem:[%s1 + $0x68] sm:$0xff]
  %v38 = vld [vmem:[%s1 + $0x70] sm:$0xff]
  %v39 = vld [vmem:[%s1 + $0x78] sm:$0xff]
  %v40 = vld [vmem:[%s1 + $0x80] sm:$0xff]
  %v41 = vld [vmem:[%s1 + $0x88] sm:$0xff]
  %v42 = vld [vmem:[%s1 + $0x90] sm:$0xff]
  %v43 = vld [vmem:[%s1 + $0x98] sm:$0xff]
  %v44 = vld [vmem:[%s1 + $0xa0] sm:$0xff]
  %v45 = vld [vmem:[%s1 + $0xa8] sm:$0xff]
  %v46 = vld [vmem:[%s1 + $0xb0] sm:$0xff]
  %v47 = vld [vmem:[%s1 + $0xb8] sm:$0xff]
  %v48 = vld [vmem:[%s1 + $0xc0] sm:$0xff]
  %v49 = vld [vmem:[%s1 + $0xc8] sm:$0xff]
  %v50 = vld [vmem:[%s1 + $0xd0] sm:$0xff]
  %v51 = vld [vmem:[%s1 + $0xd8] sm:$0xff]
  %v52 = vld [vmem:[%s1 + $0xe0] sm:$0xff]
  %v53 = vld [vmem:[%s1 + $0xe8] sm:$0xff]
  %v54 = vld [vmem:[%s1 + $0xf0] sm:$0xff]
  %v55 = vld [vmem:[%s1 + $0xf8] sm:$0xff]
  %v56 = vld [vmem:[%s1 + $0x100] sm:$0xff]
  %v57 = vld [vmem:[%s1 + $0x108] sm:$0xff]
  %v58 = vld [vmem:[%s1 + $0x110] sm:$0xff]
  %v59 = vld [vmem:[%s1 + $0x118] sm:$0xff]
  %v60 = vld [vmem:[%s1 + $0x120] sm:$0xff]
  %v61 = vld [vmem:[%s1 + $0x128] sm:$0xff]
  %v62 = vld [vmem:[%s1 + $0x130] sm:$0xff]
  %v63 = vld [vmem:[%s1 + $0x138] sm:$0xff]
  %v64 = vld [vmem:[%s1 + $0x140] sm:$0xff]
  %v65 = vld [vmem:[%s1 + $0x148] sm:$0xff]
  %v66 = vld [vmem:[%s1 + $0x150] sm:$0xff]
  %v67 = vld [vmem:[%s1 + $0x158] sm:$0xff]
  %v68 = vld [vmem:[%s1 + $0x160] sm:$0xff]
  %v69 = vld [vmem:[%s1 + $0x168] sm:$0xff]
  %v70 = vld [vmem:[%s1 + $0x170] sm:$0xff]
  %v71 = vld [vmem:[%s1 + $0x178] sm:$0xff]
  %v72 = vld [vmem:[%s1 + $0x180] sm:$0xff]
  %v73 = vld [vmem:[%s1 + $0x188] sm:$0xff]
  %v74 = vld [vmem:[%s1 + $0x190] sm:$0xff]
  %v75 = vld [vmem:[%s1 + $0x198] sm:$0xff]
  %v76 = vld [vmem:[%s1 + $0x1a0] sm:$0xff]
  %v77 = vld [vmem:[%s1 + $0x1a8] sm:$0xff]
  %v78 = vld [vmem:[%s1 + $0x1b0] sm:$0xff]
  %v79 = vld [vmem:[%s1 + $0x1b8] sm:$0xff]
  %v80 = vld [vmem:[%s1 + $0x1c0] sm:$0xff]
  %v81 = vld [vmem:[%s1 + $0x1c8] sm:$0xff]
  %v82 = vld [vmem:[%s1 + $0x1d0] sm:$0xff]
  %v83 = vld [vmem:[%s1 + $0x1d8] sm:$0xff]
  %v84 = vld [vmem:[%s1 + $0x1e0] sm:$0xff]
  %v85 = vld [vmem:[%s1 + $0x1e8] sm:$0xff]
  %v86 = vld [vmem:[%s1 + $0x1f0] sm:$0xff]
  %v87 = vld [vmem:[%s1 + $0x1f8] sm:$0xff]
  %88 = vmatprep.subr.mxu0 %v25
  %89 = vmatpush1.msra.mxu0 %v24
  %90 = vmatprep.subr.mxu0 %v29
  %91 = vmatpush1.msra.mxu0 %v28
  %92 = vmatprep.subr.mxu0 %v33
  %93 = vmatpush1.msra.mxu0 %v32
  %94 = vmatprep.subr.mxu0 %v37
  %95 = vmatpush1.msra.mxu0 %v36
  %96 = vmatprep.subr.mxu0 %v41
  %97 = vmatpush1.msra.mxu0 %v40
  %98 = vmatprep.subr.mxu0 %v45
  %99 = vmatpush1.msra.mxu0 %v44
  %100 = vmatprep.subr.mxu0 %v49
  %101 = vmatpush1.msra.mxu0 %v48
  %102 = vmatprep.subr.mxu0 %v53
  %103 = vmatpush1.msra.mxu0 %v52
  %104 = vmatprep.subr.mxu0 %v57
  %105 = vmatpush1.msra.mxu0 %v56
  %106 = vmatprep.subr.mxu0 %v61
  %107 = vmatpush1.msra.mxu0 %v60
  %108 = vmatprep.subr.mxu0 %v65
  %109 = vmatpush1.msra.mxu0 %v64
  %110 = vmatprep.subr.mxu0 %v69
  %111 = vmatpush1.msra.mxu0 %v68
  %112 = vmatprep.subr.mxu0 %v73
  %113 = vmatpush1.msra.mxu0 %v72
  %114 = vmatprep.subr.mxu0 %v77
  %115 = vmatpush1.msra.mxu0 %v76
  %116 = vmatprep.subr.mxu0 %v81
  %117 = vmatpush1.msra.mxu0 %v80
  %118 = vmatprep.subr.mxu0 %v85
  %119 = vmatpush1.msra.mxu0 %v84
  %120 = vmatprep.subr.mxu0 0.0
  %121 = vmatpush1.msra.mxu0 0.0
  %122 = vmatprep.subr.mxu0 0.0
  %123 = vmatpush1.msra.mxu0 0.0
  %124 = vmatprep.subr.mxu0 0.0
  %125 = vmatpush1.msra.mxu0 0.0
  %126 = vmatprep.subr.mxu0 0.0
  %127 = vmatpush1.msra.mxu0 0.0
  %128 = vmatprep.subr.mxu0 0.0
  %129 = vmatpush1.msra.mxu0 0.0
  %130 = vmatprep.subr.mxu0 0.0
  %131 = vmatpush1.msra.mxu0 0.0
  %132 = vmatprep.subr.mxu0 0.0
  %133 = vmatpush1.msra.mxu0 0.0
  %134 = vmatprep.subr.mxu0 0.0
  %135 = vmatpush1.msra.mxu0 0.0
  %136 = vmatprep.subr.mxu0 0.0
  %137 = vmatpush1.msra.mxu0 0.0
  %138 = vmatprep.subr.mxu0 0.0
  %139 = vmatpush1.msra.mxu0 0.0
  %140 = vmatprep.subr.mxu0 0.0
  %141 = vmatpush1.msra.mxu0 0.0
  %142 = vmatprep.subr.mxu0 0.0
  %143 = vmatpush1.msra.mxu0 0.0
  %144 = vmatprep.subr.mxu0 0.0
  %145 = vmatpush1.msra.mxu0 0.0
  %146 = vmatprep.subr.mxu0 0.0
  %147 = vmatpush1.msra.mxu0 0.0
  %148 = vmatprep.subr.mxu0 0.0
  %149 = vmatpush1.msra.mxu0 0.0
  %150 = vmatprep.subr.mxu0 0.0
  %151 = vmatpush1.msra.mxu0 0.0
  %152 = vmatprep.mubr.f32.mxu0 0.0
  %153 = vmatmul.mubr.f32.gmra.mrb[0].mxu0 %v23
  %v154 = vpop.f32.mrb[0].mxu0
  %v155 = vadd.f32 0.0, %v154
  %v156 = vpop.f32.mrb[0].mxu0
  %v157 = vadd.f32 0.0, %v156
  %158 = vdwg.mxu0
  %159 = vmatprep.subr.mxu0 %v27
  %160 = vmatpush1.msra.mxu0 %v26
  %161 = vmatprep.subr.mxu0 %v31
  %162 = vmatpush1.msra.mxu0 %v30
  %163 = vmatprep.subr.mxu0 %v35
  %164 = vmatpush1.msra.mxu0 %v34
  %165 = vmatprep.subr.mxu0 %v39
  %166 = vmatpush1.msra.mxu0 %v38
  %167 = vmatprep.subr.mxu0 %v43
  %168 = vmatpush1.msra.mxu0 %v42
  %169 = vmatprep.subr.mxu0 %v47
  %170 = vmatpush1.msra.mxu0 %v46
  %171 = vmatprep.subr.mxu0 %v51
  %172 = vmatpush1.msra.mxu0 %v50
  %173 = vmatprep.subr.mxu0 %v55
  %174 = vmatpush1.msra.mxu0 %v54
  %175 = vmatprep.subr.mxu0 %v59
  %176 = vmatpush1.msra.mxu0 %v58
  %177 = vmatprep.subr.mxu0 %v63
  %178 = vmatpush1.msra.mxu0 %v62
  %179 = vmatprep.subr.mxu0 %v67
  %180 = vmatpush1.msra.mxu0 %v66
  %181 = vmatprep.subr.mxu0 %v71
  %182 = vmatpush1.msra.mxu0 %v70
  %183 = vmatprep.subr.mxu0 %v75
  %184 = vmatpush1.msra.mxu0 %v74
  %185 = vmatprep.subr.mxu0 %v79
  %186 = vmatpush1.msra.mxu0 %v78
  %187 = vmatprep.subr.mxu0 %v83
  %188 = vmatpush1.msra.mxu0 %v82
  %189 = vmatprep.subr.mxu0 %v87
  %190 = vmatpush1.msra.mxu0 %v86
  %191 = vmatprep.subr.mxu0 0.0
  %192 = vmatpush1.msra.mxu0 0.0
  %193 = vmatprep.subr.mxu0 0.0
  %194 = vmatpush1.msra.mxu0 0.0
  %195 = vmatprep.subr.mxu0 0.0
  %196 = vmatpush1.msra.mxu0 0.0
  %197 = vmatprep.subr.mxu0 0.0
  %198 = vmatpush1.msra.mxu0 0.0
  %199 = vmatprep.subr.mxu0 0.0
  %200 = vmatpush1.msra.mxu0 0.0
  %201 = vmatprep.subr.mxu0 0.0
  %202 = vmatpush1.msra.mxu0 0.0
  %203 = vmatprep.subr.mxu0 0.0
  %204 = vmatpush1.msra.mxu0 0.0
  %205 = vmatprep.subr.mxu0 0.0
  %206 = vmatpush1.msra.mxu0 0.0
  %207 = vmatprep.subr.mxu0 0.0
  %208 = vmatpush1.msra.mxu0 0.0
  %209 = vmatprep.subr.mxu0 0.0
  %210 = vmatpush1.msra.mxu0 0.0
  %211 = vmatprep.subr.mxu0 0.0
  %212 = vmatpush1.msra.mxu0 0.0
  %213 = vmatprep.subr.mxu0 0.0
  %214 = vmatpush1.msra.mxu0 0.0
  %215 = vmatprep.subr.mxu0 0.0
  %216 = vmatpush1.msra.mxu0 0.0
  %217 = vmatprep.subr.mxu0 0.0
  %218 = vmatpush1.msra.mxu0 0.0
  %219 = vmatprep.subr.mxu0 0.0
  %220 = vmatpush1.msra.mxu0 0.0
  %221 = vmatprep.subr.mxu0 0.0
  %222 = vmatpush1.msra.mxu0 0.0
  %223 = vmatprep.mubr.f32.mxu0 0.0
  %224 = vmatmul.mubr.f32.gmra.mrb[0].mxu0 %v23
  %v225 = vpop.f32.mrb[0].mxu0
  %v226 = vadd.f32 0.0, %v225
  %v227 = vpop.f32.mrb[0].mxu0
  %v228 = vadd.f32 0.0, %v227
  %229 = vdwg.mxu0
  %v230 = vadd.f32 %v19, %v155
  %v231 = vadd.f32 %v20, %v157
  %v232 = vadd.f32 %v21, %v226
  %v233 = vadd.f32 %v22, %v228
  %v234 = vxor.u32 %v230, 2147483648
  %v235 = vmul.f32 %v234, 1.442695
  %v236 = vpow.pop %v235
  %v237 = vadd.f32 %v236, 1.0
  %v238 = vrcp.pop %v237
  %v239 = vmul.f32 1.0, %v238
  %v240 = vxor.u32 %v231, 2147483648
  %v241 = vmul.f32 %v240, 1.442695
  %v242 = vpow.pop %v241
  %v243 = vadd.f32 %v242, 1.0
  %v244 = vrcp.pop %v243
  %v245 = vmul.f32 1.0, %v244
  %v246 = vtanh.pop %v232
  %v247 = vxor.u32 %v233, 2147483648
  %v248 = vmul.f32 %v247, 1.442695
  %v249 = vpow.pop %v248
  %v250 = vadd.f32 %v249, 1.0
  %v251 = vrcp.pop %v250
  %v252 = vmul.f32 1.0, %v251
  %v253 = vld [vmem:[#allocation3] sm:$0xff]
  %v254 = vmul.f32 %v245, %v253
  %v255 = vmul.f32 %v239, %v246
  %v256 = vadd.f32 %v254, %v255
  %v257 = vtanh.pop %v256
  %v258 = vmul.f32 %v252, %v257
  %259 = vst [vmem:[#allocation3] sm:$0xff] %v256
  %260 = vst [vmem:[#allocation2] sm:$0xff] %v258
  %261 = vst [vmem:[#allocation4] sm:$0xff] %v258
  %s262 = scalar_lea.vmem %s0, 32
  %v263 = vld [vmem:[%s262] sm:$0xff]
  %v264 = vld [vmem:[%s262 + $0x8] sm:$0xff]
  %v265 = vld [vmem:[%s262 + $0x10] sm:$0xff]
  %v266 = vld [vmem:[%s262 + $0x18] sm:$0xff]
  %v267 = vld [vmem:[#allocation2] sm:$0xff]
  %v268 = vld [vmem:[%s1] sm:$0xff]
  %v269 = vld [vmem:[%s1 + $0x8] sm:$0xff]
  %v270 = vld [vmem:[%s1 + $0x10] sm:$0xff]
  %v271 = vld [vmem:[%s1 + $0x18] sm:$0xff]
  %v272 = vld [vmem:[%s1 + $0x20] sm:$0xff]
  %v273 = vld [vmem:[%s1 + $0x28] sm:$0xff]
  %v274 = vld [vmem:[%s1 + $0x30] sm:$0xff]
  %v275 = vld [vmem:[%s1 + $0x38] sm:$0xff]
  %v276 = vld [vmem:[%s1 + $0x40] sm:$0xff]
  %v277 = vld [vmem:[%s1 + $0x48] sm:$0xff]
  %v278 = vld [vmem:[%s1 + $0x50] sm:$0xff]
  %v279 = vld [vmem:[%s1 + $0x58] sm:$0xff]
  %v280 = vld [vmem:[%s1 + $0x60] sm:$0xff]
  %v281 = vld [vmem:[%s1 + $0x68] sm:$0xff]
  %v282 = vld [vmem:[%s1 + $0x70] sm:$0xff]
  %v283 = vld [vmem:[%s1 + $0x78] sm:$0xff]
  %v284 = vld [vmem:[%s1 + $0x80] sm:$0xff]
  %v285 = vld [vmem:[%s1 + $0x88] sm:$0xff]
  %v286 = vld [vmem:[%s1 + $0x90] sm:$0xff]
  %v287 = vld [vmem:[%s1 + $0x98] sm:$0xff]
  %v288 = vld [vmem:[%s1 + $0xa0] sm:$0xff]
  %v289 = vld [vmem:[%s1 + $0xa8] sm:$0xff]
  %v290 = vld [vmem:[%s1 + $0xb0] sm:$0xff]
  %v291 = vld [vmem:[%s1 + $0xb8] sm:$0xff]
  %v292 = vld [vmem:[%s1 + $0xc0] sm:$0xff]
  %v293 = vld [vmem:[%s1 + $0xc8] sm:$0xff]
  %v294 = vld [vmem:[%s1 + $0xd0] sm:$0xff]
  %v295 = vld [vmem:[%s1 + $0xd8] sm:$0xff]
  %v296 = vld [vmem:[%s1 + $0xe0] sm:$0xff]
  %v297 = vld [vmem:[%s1 + $0xe8] sm:$0xff]
  %v298 = vld [vmem:[%s1 + $0xf0] sm:$0xff]
  %v299 = vld [vmem:[%s1 + $0xf8] sm:$0xff]
  %v300 = vld [vmem:[%s1 + $0x100] sm:$0xff]
  %v301 = vld [vmem:[%s1 + $0x108] sm:$0xff]
  %v302 = vld [vmem:[%s1 + $0x110] sm:$0xff]
  %v303 = vld [vmem:[%s1 + $0x118] sm:$0xff]
  %v304 = vld [vmem:[%s1 + $0x120] sm:$0xff]
  %v305 = vld [vmem:[%s1 + $0x128] sm:$0xff]
  %v306 = vld [vmem:[%s1 + $0x130] sm:$0xff]
  %v307 = vld [vmem:[%s1 + $0x138] sm:$0xff]
  %v308 = vld [vmem:[%s1 + $0x140] sm:$0xff]
  %v309 = vld [vmem:[%s1 + $0x148] sm:$0xff]
  %v310 = vld [vmem:[%s1 + $0x150] sm:$0xff]
  %v311 = vld [vmem:[%s1 + $0x158] sm:$0xff]
  %v312 = vld [vmem:[%s1 + $0x160] sm:$0xff]
  %v313 = vld [vmem:[%s1 + $0x168] sm:$0xff]
  %v314 = vld [vmem:[%s1 + $0x170] sm:$0xff]
  %v315 = vld [vmem:[%s1 + $0x178] sm:$0xff]
  %v316 = vld [vmem:[%s1 + $0x180] sm:$0xff]
  %v317 = vld [vmem:[%s1 + $0x188] sm:$0xff]
  %v318 = vld [vmem:[%s1 + $0x190] sm:$0xff]
  %v319 = vld [vmem:[%s1 + $0x198] sm:$0xff]
  %v320 = vld [vmem:[%s1 + $0x1a0] sm:$0xff]
  %v321 = vld [vmem:[%s1 + $0x1a8] sm:$0xff]
  %v322 = vld [vmem:[%s1 + $0x1b0] sm:$0xff]
  %v323 = vld [vmem:[%s1 + $0x1b8] sm:$0xff]
  %v324 = vld [vmem:[%s1 + $0x1c0] sm:$0xff]
  %v325 = vld [vmem:[%s1 + $0x1c8] sm:$0xff]
  %v326 = vld [vmem:[%s1 + $0x1d0] sm:$0xff]
  %v327 = vld [vmem:[%s1 + $0x1d8] sm:$0xff]
  %v328 = vld [vmem:[%s1 + $0x1e0] sm:$0xff]
  %v329 = vld [vmem:[%s1 + $0x1e8] sm:$0xff]
  %v330 = vld [vmem:[%s1 + $0x1f0] sm:$0xff]
  %v331 = vld [vmem:[%s1 + $0x1f8] sm:$0xff]
  %332 = vmatprep.subr.mxu0 %v269
  %333 = vmatpush1.msra.mxu0 %v268
  %334 = vmatprep.subr.mxu0 %v273
  %335 = vmatpush1.msra.mxu0 %v272
  %336 = vmatprep.subr.mxu0 %v277
  %337 = vmatpush1.msra.mxu0 %v276
  %338 = vmatprep.subr.mxu0 %v281
  %339 = vmatpush1.msra.mxu0 %v280
  %340 = vmatprep.subr.mxu0 %v285
  %341 = vmatpush1.msra.mxu0 %v284
  %342 = vmatprep.subr.mxu0 %v289
  %343 = vmatpush1.msra.mxu0 %v288
  %344 = vmatprep.subr.mxu0 %v293
  %345 = vmatpush1.msra.mxu0 %v292
  %346 = vmatprep.subr.mxu0 %v297
  %347 = vmatpush1.msra.mxu0 %v296
  %348 = vmatprep.subr.mxu0 %v301
  %349 = vmatpush1.msra.mxu0 %v300
  %350 = vmatprep.subr.mxu0 %v305
  %351 = vmatpush1.msra.mxu0 %v304
  %352 = vmatprep.subr.mxu0 %v309
  %353 = vmatpush1.msra.mxu0 %v308
  %354 = vmatprep.subr.mxu0 %v313
  %355 = vmatpush1.msra.mxu0 %v312
  %356 = vmatprep.subr.mxu0 %v317
  %357 = vmatpush1.msra.mxu0 %v316
  %358 = vmatprep.subr.mxu0 %v321
  %359 = vmatpush1.msra.mxu0 %v320
  %360 = vmatprep.subr.mxu0 %v325
  %361 = vmatpush1.msra.mxu0 %v324
  %362 = vmatprep.subr.mxu0 %v329
  %363 = vmatpush1.msra.mxu0 %v328
  %364 = vmatprep.subr.mxu0 0.0
  %365 = vmatpush1.msra.mxu0 0.0
  %366 = vmatprep.subr.mxu0 0.0
  %367 = vmatpush1.msra.mxu0 0.0
  %368 = vmatprep.subr.mxu0 0.0
  %369 = vmatpush1.msra.mxu0 0.0
  %370 = vmatprep.subr.mxu0 0.0
  %371 = vmatpush1.msra.mxu0 0.0
  %372 = vmatprep.subr.mxu0 0.0
  %373 = vmatpush1.msra.mxu0 0.0
  %374 = vmatprep.subr.mxu0 0.0
  %375 = vmatpush1.msra.mxu0 0.0
  %376 = vmatprep.subr.mxu0 0.0
  %377 = vmatpush1.msra.mxu0 0.0
  %378 = vmatprep.subr.mxu0 0.0
  %379 = vmatpush1.msra.mxu0 0.0
  %380 = vmatprep.subr.mxu0 0.0
  %381 = vmatpush1.msra.mxu0 0.0
  %382 = vmatprep.subr.mxu0 0.0
  %383 = vmatpush1.msra.mxu0 0.0
  %384 = vmatprep.subr.mxu0 0.0
  %385 = vmatpush1.msra.mxu0 0.0
  %386 = vmatprep.subr.mxu0 0.0
  %387 = vmatpush1.msra.mxu0 0.0
  %388 = vmatprep.subr.mxu0 0.0
  %389 = vmatpush1.msra.mxu0 0.0
  %390 = vmatprep.subr.mxu0 0.0
  %391 = vmatpush1.msra.mxu0 0.0
  %392 = vmatprep.subr.mxu0 0.0
  %393 = vmatpush1.msra.mxu0 0.0
  %394 = vmatprep.subr.mxu0 0.0
  %395 = vmatpush1.msra.mxu0 0.0
  %396 = vmatprep.mubr.f32.mxu0 0.0
  %397 = vmatmul.mubr.f32.gmra.mrb[0].mxu0 %v267
  %v398 = vpop.f32.mrb[0].mxu0
  %v399 = vadd.f32 0.0, %v398
  %v400 = vpop.f32.mrb[0].mxu0
  %v401 = vadd.f32 0.0, %v400
  %402 = vdwg.mxu0
  %403 = vmatprep.subr.mxu0 %v271
  %404 = vmatpush1.msra.mxu0 %v270
  %405 = vmatprep.subr.mxu0 %v275
  %406 = vmatpush1.msra.mxu0 %v274
  %407 = vmatprep.subr.mxu0 %v279
  %408 = vmatpush1.msra.mxu0 %v278
  %409 = vmatprep.subr.mxu0 %v283
  %410 = vmatpush1.msra.mxu0 %v282
  %411 = vmatprep.subr.mxu0 %v287
  %412 = vmatpush1.msra.mxu0 %v286
  %413 = vmatprep.subr.mxu0 %v291
  %414 = vmatpush1.msra.mxu0 %v290
  %415 = vmatprep.subr.mxu0 %v295
  %416 = vmatpush1.msra.mxu0 %v294
  %417 = vmatprep.subr.mxu0 %v299
  %418 = vmatpush1.msra.mxu0 %v298
  %419 = vmatprep.subr.mxu0 %v303
  %420 = vmatpush1.msra.mxu0 %v302
  %421 = vmatprep.subr.mxu0 %v307
  %422 = vmatpush1.msra.mxu0 %v306
  %423 = vmatprep.subr.mxu0 %v311
  %424 = vmatpush1.msra.mxu0 %v310
  %425 = vmatprep.subr.mxu0 %v315
  %426 = vmatpush1.msra.mxu0 %v314
  %427 = vmatprep.subr.mxu0 %v319
  %428 = vmatpush1.msra.mxu0 %v318
  %429 = vmatprep.subr.mxu0 %v323
  %430 = vmatpush1.msra.mxu0 %v322
  %431 = vmatprep.subr.mxu0 %v327
  %432 = vmatpush1.msra.mxu0 %v326
  %433 = vmatprep.subr.mxu0 %v331
  %434 = vmatpush1.msra.mxu0 %v330
  %435 = vmatprep.subr.mxu0 0.0
  %436 = vmatpush1.msra.mxu0 0.0
  %437 = vmatprep.subr.mxu0 0.0
  %438 = vmatpush1.msra.mxu0 0.0
  %439 = vmatprep.subr.mxu0 0.0
  %440 = vmatpush1.msra.mxu0 0.0
  %441 = vmatprep.subr.mxu0 0.0
  %442 = vmatpush1.msra.mxu0 0.0
  %443 = vmatprep.subr.mxu0 0.0
  %444 = vmatpush1.msra.mxu0 0.0
  %445 = vmatprep.subr.mxu0 0.0
  %446 = vmatpush1.msra.mxu0 0.0
  %447 = vmatprep.subr.mxu0 0.0
  %448 = vmatpush1.msra.mxu0 0.0
  %449 = vmatprep.subr.mxu0 0.0
  %450 = vmatpush1.msra.mxu0 0.0
  %451 = vmatprep.subr.mxu0 0.0
  %452 = vmatpush1.msra.mxu0 0.0
  %453 = vmatprep.subr.mxu0 0.0
  %454 = vmatpush1.msra.mxu0 0.0
  %455 = vmatprep.subr.mxu0 0.0
  %456 = vmatpush1.msra.mxu0 0.0
  %457 = vmatprep.subr.mxu0 0.0
  %458 = vmatpush1.msra.mxu0 0.0
  %459 = vmatprep.subr.mxu0 0.0
  %460 = vmatpush1.msra.mxu0 0.0
  %461 = vmatprep.subr.mxu0 0.0
  %462 = vmatpush1.msra.mxu0 0.0
  %463 = vmatprep.subr.mxu0 0.0
  %464 = vmatpush1.msra.mxu0 0.0
  %465 = vmatprep.subr.mxu0 0.0
  %466 = vmatpush1.msra.mxu0 0.0
  %467 = vmatprep.mubr.f32.mxu0 0.0
  %468 = vmatmul.mubr.f32.gmra.mrb[0].mxu0 %v267
  %v469 = vpop.f32.mrb[0].mxu0
  %v470 = vadd.f32 0.0, %v469
  %v471 = vpop.f32.mrb[0].mxu0
  %v472 = vadd.f32 0.0, %v471
  %473 = vdwg.mxu0
  %v474 = vadd.f32 %v263, %v399
  %v475 = vadd.f32 %v264, %v401
  %v476 = vadd.f32 %v265, %v470
  %v477 = vadd.f32 %v266, %v472
  %v478 = vxor.u32 %v474, 2147483648
  %v479 = vmul.f32 %v478, 1.442695
  %v480 = vpow.pop %v479
  %v481 = vadd.f32 %v480, 1.0
  %v482 = vrcp.pop %v481
  %v483 = vmul.f32 1.0, %v482
  %v484 = vxor.u32 %v475, 2147483648
  %v485 = vmul.f32 %v484, 1.442695
  %v486 = vpow.pop %v485
  %v487 = vadd.f32 %v486, 1.0
  %v488 = vrcp.pop %v487
  %v489 = vmul.f32 1.0, %v488
  %v490 = vtanh.pop %v476
  %v491 = vxor.u32 %v477, 2147483648
  %v492 = vmul.f32 %v491, 1.442695
  %v493 = vpow.pop %v492
  %v494 = vadd.f32 %v493, 1.0
  %v495 = vrcp.pop %v494
  %v496 = vmul.f32 1.0, %v495
  %v497 = vld [vmem:[#allocation3] sm:$0xff]
  %v498 = vmul.f32 %v489, %v497
  %v499 = vmul.f32 %v483, %v490
  %v500 = vadd.f32 %v498, %v499
  %v501 = vtanh.pop %v500
  %v502 = vmul.f32 %v496, %v501
  %503 = vst [vmem:[#allocation3] sm:$0xff] %v500
  %504 = vst [vmem:[#allocation2] sm:$0xff] %v502
  %s505 = scalar_lea.vmem [#allocation4], 8
  %506 = vst [vmem:[%s505] sm:$0xff] %v502
  %s507 = scalar_lea.vmem %s0, 64
  %v508 = vld [vmem:[%s507] sm:$0xff]
  %v509 = vld [vmem:[%s507 + $0x8] sm:$0xff]
  %v510 = vld [vmem:[%s507 + $0x10] sm:$0xff]
  %v511 = vld [vmem:[%s507 + $0x18] sm:$0xff]
  %v512 = vld [vmem:[#allocation2] sm:$0xff]
  %v513 = vld [vmem:[%s1] sm:$0xff]
  %v514 = vld [vmem:[%s1 + $0x8] sm:$0xff]
  %v515 = vld [vmem:[%s1 + $0x10] sm:$0xff]
  %v516 = vld [vmem:[%s1 + $0x18] sm:$0xff]
  %v517 = vld [vmem:[%s1 + $0x20] sm:$0xff]
  %v518 = vld [vmem:[%s1 + $0x28] sm:$0xff]
  %v519 = vld [vmem:[%s1 + $0x30] sm:$0xff]
  %v520 = vld [vmem:[%s1 + $0x38] sm:$0xff]
  %v521 = vld [vmem:[%s1 + $0x40] sm:$0xff]
  %v522 = vld [vmem:[%s1 + $0x48] sm:$0xff]
  %v523 = vld [vmem:[%s1 + $0x50] sm:$0xff]
  %v524 = vld [vmem:[%s1 + $0x58] sm:$0xff]
  %v525 = vld [vmem:[%s1 + $0x60] sm:$0xff]
  %v526 = vld [vmem:[%s1 + $0x68] sm:$0xff]
  %v527 = vld [vmem:[%s1 + $0x70] sm:$0xff]
  %v528 = vld [vmem:[%s1 + $0x78] sm:$0xff]
  %v529 = vld [vmem:[%s1 + $0x80] sm:$0xff]
  %v530 = vld [vmem:[%s1 + $0x88] sm:$0xff]
  %v531 = vld [vmem:[%s1 + $0x90] sm:$0xff]
  %v532 = vld [vmem:[%s1 + $0x98] sm:$0xff]
  %v533 = vld [vmem:[%s1 + $0xa0] sm:$0xff]
  %v534 = vld [vmem:[%s1 + $0xa8] sm:$0xff]
  %v535 = vld [vmem:[%s1 + $0xb0] sm:$0xff]
  %v536 = vld [vmem:[%s1 + $0xb8] sm:$0xff]
  %v537 = vld [vmem:[%s1 + $0xc0] sm:$0xff]
  %v538 = vld [vmem:[%s1 + $0xc8] sm:$0xff]
  %v539 = vld [vmem:[%s1 + $0xd0] sm:$0xff]
  %v540 = vld [vmem:[%s1 + $0xd8] sm:$0xff]
  %v541 = vld [vmem:[%s1 + $0xe0] sm:$0xff]
  %v542 = vld [vmem:[%s1 + $0xe8] sm:$0xff]
  %v543 = vld [vmem:[%s1 + $0xf0] sm:$0xff]
  %v544 = vld [vmem:[%s1 + $0xf8] sm:$0xff]
  %v545 = vld [vmem:[%s1 + $0x100] sm:$0xff]
  %v546 = vld [vmem:[%s1 + $0x108] sm:$0xff]
  %v547 = vld [vmem:[%s1 + $0x110] sm:$0xff]
  %v548 = vld [vmem:[%s1 + $0x118] sm:$0xff]
  %v549 = vld [vmem:[%s1 + $0x120] sm:$0xff]
  %v550 = vld [vmem:[%s1 + $0x128] sm:$0xff]
  %v551 = vld [vmem:[%s1 + $0x130] sm:$0xff]
  %v552 = vld [vmem:[%s1 + $0x138] sm:$0xff]
  %v553 = vld [vmem:[%s1 + $0x140] sm:$0xff]
  %v554 = vld [vmem:[%s1 + $0x148] sm:$0xff]
  %v555 = vld [vmem:[%s1 + $0x150] sm:$0xff]
  %v556 = vld [vmem:[%s1 + $0x158] sm:$0xff]
  %v557 = vld [vmem:[%s1 + $0x160] sm:$0xff]
  %v558 = vld [vmem:[%s1 + $0x168] sm:$0xff]
  %v559 = vld [vmem:[%s1 + $0x170] sm:$0xff]
  %v560 = vld [vmem:[%s1 + $0x178] sm:$0xff]
  %v561 = vld [vmem:[%s1 + $0x180] sm:$0xff]
  %v562 = vld [vmem:[%s1 + $0x188] sm:$0xff]
  %v563 = vld [vmem:[%s1 + $0x190] sm:$0xff]
  %v564 = vld [vmem:[%s1 + $0x198] sm:$0xff]
  %v565 = vld [vmem:[%s1 + $0x1a0] sm:$0xff]
  %v566 = vld [vmem:[%s1 + $0x1a8] sm:$0xff]
  %v567 = vld [vmem:[%s1 + $0x1b0] sm:$0xff]
  %v568 = vld [vmem:[%s1 + $0x1b8] sm:$0xff]
  %v569 = vld [vmem:[%s1 + $0x1c0] sm:$0xff]
  %v570 = vld [vmem:[%s1 + $0x1c8] sm:$0xff]
  %v571 = vld [vmem:[%s1 + $0x1d0] sm:$0xff]
  %v572 = vld [vmem:[%s1 + $0x1d8] sm:$0xff]
  %v573 = vld [vmem:[%s1 + $0x1e0] sm:$0xff]
  %v574 = vld [vmem:[%s1 + $0x1e8] sm:$0xff]
  %v575 = vld [vmem:[%s1 + $0x1f0] sm:$0xff]
  %v576 = vld [vmem:[%s1 + $0x1f8] sm:$0xff]
  %577 = vmatprep.subr.mxu0 %v514
  %578 = vmatpush1.msra.mxu0 %v513
  %579 = vmatprep.subr.mxu0 %v518
  %580 = vmatpush1.msra.mxu0 %v517
  %581 = vmatprep.subr.mxu0 %v522
  %582 = vmatpush1.msra.mxu0 %v521
  %583 = vmatprep.subr.mxu0 %v526
  %584 = vmatpush1.msra.mxu0 %v525
  %585 = vmatprep.subr.mxu0 %v530
  %586 = vmatpush1.msra.mxu0 %v529
  %587 = vmatprep.subr.mxu0 %v534
  %588 = vmatpush1.msra.mxu0 %v533
  %589 = vmatprep.subr.mxu0 %v538
  %590 = vmatpush1.msra.mxu0 %v537
  %591 = vmatprep.subr.mxu0 %v542
  %592 = vmatpush1.msra.mxu0 %v541
  %593 = vmatprep.subr.mxu0 %v546
  %594 = vmatpush1.msra.mxu0 %v545
  %595 = vmatprep.subr.mxu0 %v550
  %596 = vmatpush1.msra.mxu0 %v549
  %597 = vmatprep.subr.mxu0 %v554
  %598 = vmatpush1.msra.mxu0 %v553
  %599 = vmatprep.subr.mxu0 %v558
  %600 = vmatpush1.msra.mxu0 %v557
  %601 = vmatprep.subr.mxu0 %v562
  %602 = vmatpush1.msra.mxu0 %v561
  %603 = vmatprep.subr.mxu0 %v566
  %604 = vmatpush1.msra.mxu0 %v565
  %605 = vmatprep.subr.mxu0 %v570
  %606 = vmatpush1.msra.mxu0 %v569
  %607 = vmatprep.subr.mxu0 %v574
  %608 = vmatpush1.msra.mxu0 %v573
  %609 = vmatprep.subr.mxu0 0.0
  %610 = vmatpush1.msra.mxu0 0.0
  %611 = vmatprep.subr.mxu0 0.0
  %612 = vmatpush1.msra.mxu0 0.0
  %613 = vmatprep.subr.mxu0 0.0
  %614 = vmatpush1.msra.mxu0 0.0
  %615 = vmatprep.subr.mxu0 0.0
  %616 = vmatpush1.msra.mxu0 0.0
  %617 = vmatprep.subr.mxu0 0.0
  %618 = vmatpush1.msra.mxu0 0.0
  %619 = vmatprep.subr.mxu0 0.0
  %620 = vmatpush1.msra.mxu0 0.0
  %621 = vmatprep.subr.mxu0 0.0
  %622 = vmatpush1.msra.mxu0 0.0
  %623 = vmatprep.subr.mxu0 0.0
  %624 = vmatpush1.msra.mxu0 0.0
  %625 = vmatprep.subr.mxu0 0.0
  %626 = vmatpush1.msra.mxu0 0.0
  %627 = vmatprep.subr.mxu0 0.0
  %628 = vmatpush1.msra.mxu0 0.0
  %629 = vmatprep.subr.mxu0 0.0
  %630 = vmatpush1.msra.mxu0 0.0
  %631 = vmatprep.subr.mxu0 0.0
  %632 = vmatpush1.msra.mxu0 0.0
  %633 = vmatprep.subr.mxu0 0.0
  %634 = vmatpush1.msra.mxu0 0.0
  %635 = vmatprep.subr.mxu0 0.0
  %636 = vmatpush1.msra.mxu0 0.0
  %637 = vmatprep.subr.mxu0 0.0
  %638 = vmatpush1.msra.mxu0 0.0
  %639 = vmatprep.subr.mxu0 0.0
  %640 = vmatpush1.msra.mxu0 0.0
  %641 = vmatprep.mubr.f32.mxu0 0.0
  %642 = vmatmul.mubr.f32.gmra.mrb[0].mxu0 %v512
  %v643 = vpop.f32.mrb[0].mxu0
  %v644 = vadd.f32 0.0, %v643
  %v645 = vpop.f32.mrb[0].mxu0
  %v646 = vadd.f32 0.0, %v645
  %647 = vdwg.mxu0
  %648 = vmatprep.subr.mxu0 %v516
  %649 = vmatpush1.msra.mxu0 %v515
  %650 = vmatprep.subr.mxu0 %v520
  %651 = vmatpush1.msra.mxu0 %v519
  %652 = vmatprep.subr.mxu0 %v524
  %653 = vmatpush1.msra.mxu0 %v523
  %654 = vmatprep.subr.mxu0 %v528
  %655 = vmatpush1.msra.mxu0 %v527
  %656 = vmatprep.subr.mxu0 %v532
  %657 = vmatpush1.msra.mxu0 %v531
  %658 = vmatprep.subr.mxu0 %v536
  %659 = vmatpush1.msra.mxu0 %v535
  %660 = vmatprep.subr.mxu0 %v540
  %661 = vmatpush1.msra.mxu0 %v539
  %662 = vmatprep.subr.mxu0 %v544
  %663 = vmatpush1.msra.mxu0 %v543
  %664 = vmatprep.subr.mxu0 %v548
  %665 = vmatpush1.msra.mxu0 %v547
  %666 = vmatprep.subr.mxu0 %v552
  %667 = vmatpush1.msra.mxu0 %v551
  %668 = vmatprep.subr.mxu0 %v556
  %669 = vmatpush1.msra.mxu0 %v555
  %670 = vmatprep.subr.mxu0 %v560
  %671 = vmatpush1.msra.mxu0 %v559
  %672 = vmatprep.subr.mxu0 %v564
  %673 = vmatpush1.msra.mxu0 %v563
  %674 = vmatprep.subr.mxu0 %v568
  %675 = vmatpush1.msra.mxu0 %v567
  %676 = vmatprep.subr.mxu0 %v572
  %677 = vmatpush1.msra.mxu0 %v571
  %678 = vmatprep.subr.mxu0 %v576
  %679 = vmatpush1.msra.mxu0 %v575
  %680 = vmatprep.subr.mxu0 0.0
  %681 = vmatpush1.msra.mxu0 0.0
  %682 = vmatprep.subr.mxu0 0.0
  %683 = vmatpush1.msra.mxu0 0.0
  %684 = vmatprep.subr.mxu0 0.0
  %685 = vmatpush1.msra.mxu0 0.0
  %686 = vmatprep.subr.mxu0 0.0
  %687 = vmatpush1.msra.mxu0 0.0
  %688 = vmatprep.subr.mxu0 0.0
  %689 = vmatpush1.msra.mxu0 0.0
  %690 = vmatprep.subr.mxu0 0.0
  %691 = vmatpush1.msra.mxu0 0.0
  %692 = vmatprep.subr.mxu0 0.0
  %693 = vmatpush1.msra.mxu0 0.0
  %694 = vmatprep.subr.mxu0 0.0
  %695 = vmatpush1.msra.mxu0 0.0
  %696 = vmatprep.subr.mxu0 0.0
  %697 = vmatpush1.msra.mxu0 0.0
  %698 = vmatprep.subr.mxu0 0.0
  %699 = vmatpush1.msra.mxu0 0.0
  %700 = vmatprep.subr.mxu0 0.0
  %701 = vmatpush1.msra.mxu0 0.0
  %702 = vmatprep.subr.mxu0 0.0
  %703 = vmatpush1.msra.mxu0 0.0
  %704 = vmatprep.subr.mxu0 0.0
  %705 = vmatpush1.msra.mxu0 0.0
  %706 = vmatprep.subr.mxu0 0.0
  %707 = vmatpush1.msra.mxu0 0.0
  %708 = vmatprep.subr.mxu0 0.0
  %709 = vmatpush1.msra.mxu0 0.0
  %710 = vmatprep.subr.mxu0 0.0
  %711 = vmatpush1.msra.mxu0 0.0
  %712 = vmatprep.mubr.f32.mxu0 0.0
  %713 = vmatmul.mubr.f32.gmra.mrb[0].mxu0 %v512
  %v714 = vpop.f32.mrb[0].mxu0
  %v715 = vadd.f32 0.0, %v714
  %v716 = vpop.f32.mrb[0].mxu0
  %v717 = vadd.f32 0.0, %v716
  %718 = vdwg.mxu0
  %v719 = vadd.f32 %v508, %v644
  %v720 = vadd.f32 %v509, %v646
  %v721 = vadd.f32 %v510, %v715
  %v722 = vadd.f32 %v511, %v717
  %v723 = vxor.u32 %v719, 2147483648
  %v724 = vmul.f32 %v723, 1.442695
  %v725 = vpow.pop %v724
  %v726 = vadd.f32 %v725, 1.0
  %v727 = vrcp.pop %v726
  %v728 = vmul.f32 1.0, %v727
  %v729 = vxor.u32 %v720, 2147483648
  %v730 = vmul.f32 %v729, 1.442695
  %v731 = vpow.pop %v730
  %v732 = vadd.f32 %v731, 1.0
  %v733 = vrcp.pop %v732
  %v734 = vmul.f32 1.0, %v733
  %v735 = vtanh.pop %v721
  %v736 = vxor.u32 %v722, 2147483648
  %v737 = vmul.f32 %v736, 1.442695
  %v738 = vpow.pop %v737
  %v739 = vadd.f32 %v738, 1.0
  %v740 = vrcp.pop %v739
  %v741 = vmul.f32 1.0, %v740
  %v742 = vld [vmem:[#allocation3] sm:$0xff]
  %v743 = vmul.f32 %v734, %v742
  %v744 = vmul.f32 %v728, %v735
  %v745 = vadd.f32 %v743, %v744
  %v746 = vtanh.pop %v745
  %v747 = vmul.f32 %v741, %v746
  %748 = vst [vmem:[#allocation3] sm:$0xff] %v745
  %749 = vst [vmem:[#allocation2] sm:$0xff] %v747
  %s750 = scalar_lea.vmem [#allocation4], 16
  %751 = vst [vmem:[%s750] sm:$0xff] %v747
  %s752 = scalar_lea.vmem %s0, 96
  %v753 = vld [vmem:[%s752] sm:$0xff]
  %v754 = vld [vmem:[%s752 + $0x8] sm:$0xff]
  %v755 = vld [vmem:[%s752 + $0x10] sm:$0xff]
  %v756 = vld [vmem:[%s752 + $0x18] sm:$0xff]
  %v757 = vld [vmem:[#allocation2] sm:$0xff]
  %v758 = vld [vmem:[%s1] sm:$0xff]
  %v759 = vld [vmem:[%s1 + $0x8] sm:$0xff]
  %v760 = vld [vmem:[%s1 + $0x10] sm:$0xff]
  %v761 = vld [vmem:[%s1 + $0x18] sm:$0xff]
  %v762 = vld [vmem:[%s1 + $0x20] sm:$0xff]
  %v763 = vld [vmem:[%s1 + $0x28] sm:$0xff]
  %v764 = vld [vmem:[%s1 + $0x30] sm:$0xff]
  %v765 = vld [vmem:[%s1 + $0x38] sm:$0xff]
  %v766 = vld [vmem:[%s1 + $0x40] sm:$0xff]
  %v767 = vld [vmem:[%s1 + $0x48] sm:$0xff]
  %v768 = vld [vmem:[%s1 + $0x50] sm:$0xff]
  %v769 = vld [vmem:[%s1 + $0x58] sm:$0xff]
  %v770 = vld [vmem:[%s1 + $0x60] sm:$0xff]
  %v771 = vld [vmem:[%s1 + $0x68] sm:$0xff]
  %v772 = vld [vmem:[%s1 + $0x70] sm:$0xff]
  %v773 = vld [vmem:[%s1 + $0x78] sm:$0xff]
  %v774 = vld [vmem:[%s1 + $0x80] sm:$0xff]
  %v775 = vld [vmem:[%s1 + $0x88] sm:$0xff]
  %v776 = vld [vmem:[%s1 + $0x90] sm:$0xff]
  %v777 = vld [vmem:[%s1 + $0x98] sm:$0xff]
  %v778 = vld [vmem:[%s1 + $0xa0] sm:$0xff]
  %v779 = vld [vmem:[%s1 + $0xa8] sm:$0xff]
  %v780 = vld [vmem:[%s1 + $0xb0] sm:$0xff]
  %v781 = vld [vmem:[%s1 + $0xb8] sm:$0xff]
  %v782 = vld [vmem:[%s1 + $0xc0] sm:$0xff]
  %v783 = vld [vmem:[%s1 + $0xc8] sm:$0xff]
  %v784 = vld [vmem:[%s1 + $0xd0] sm:$0xff]
  %v785 = vld [vmem:[%s1 + $0xd8] sm:$0xff]
  %v786 = vld [vmem:[%s1 + $0xe0] sm:$0xff]
  %v787 = vld [vmem:[%s1 + $0xe8] sm:$0xff]
  %v788 = vld [vmem:[%s1 + $0xf0] sm:$0xff]
  %v789 = vld [vmem:[%s1 + $0xf8] sm:$0xff]
  %v790 = vld [vmem:[%s1 + $0x100] sm:$0xff]
  %v791 = vld [vmem:[%s1 + $0x108] sm:$0xff]
  %v792 = vld [vmem:[%s1 + $0x110] sm:$0xff]
  %v793 = vld [vmem:[%s1 + $0x118] sm:$0xff]
  %v794 = vld [vmem:[%s1 + $0x120] sm:$0xff]
  %v795 = vld [vmem:[%s1 + $0x128] sm:$0xff]
  %v796 = vld [vmem:[%s1 + $0x130] sm:$0xff]
  %v797 = vld [vmem:[%s1 + $0x138] sm:$0xff]
  %v798 = vld [vmem:[%s1 + $0x140] sm:$0xff]
  %v799 = vld [vmem:[%s1 + $0x148] sm:$0xff]
  %v800 = vld [vmem:[%s1 + $0x150] sm:$0xff]
  %v801 = vld [vmem:[%s1 + $0x158] sm:$0xff]
  %v802 = vld [vmem:[%s1 + $0x160] sm:$0xff]
  %v803 = vld [vmem:[%s1 + $0x168] sm:$0xff]
  %v804 = vld [vmem:[%s1 + $0x170] sm:$0xff]
  %v805 = vld [vmem:[%s1 + $0x178] sm:$0xff]
  %v806 = vld [vmem:[%s1 + $0x180] sm:$0xff]
  %v807 = vld [vmem:[%s1 + $0x188] sm:$0xff]
  %v808 = vld [vmem:[%s1 + $0x190] sm:$0xff]
  %v809 = vld [vmem:[%s1 + $0x198] sm:$0xff]
  %v810 = vld [vmem:[%s1 + $0x1a0] sm:$0xff]
  %v811 = vld [vmem:[%s1 + $0x1a8] sm:$0xff]
  %v812 = vld [vmem:[%s1 + $0x1b0] sm:$0xff]
  %v813 = vld [vmem:[%s1 + $0x1b8] sm:$0xff]
  %v814 = vld [vmem:[%s1 + $0x1c0] sm:$0xff]
  %v815 = vld [vmem:[%s1 + $0x1c8] sm:$0xff]
  %v816 = vld [vmem:[%s1 + $0x1d0] sm:$0xff]
  %v817 = vld [vmem:[%s1 + $0x1d8] sm:$0xff]
  %v818 = vld [vmem:[%s1 + $0x1e0] sm:$0xff]
  %v819 = vld [vmem:[%s1 + $0x1e8] sm:$0xff]
  %v820 = vld [vmem:[%s1 + $0x1f0] sm:$0xff]
  %v821 = vld [vmem:[%s1 + $0x1f8] sm:$0xff]
  %822 = vmatprep.subr.mxu0 %v759
  %823 = vmatpush1.msra.mxu0 %v758
  %824 = vmatprep.subr.mxu0 %v763
  %825 = vmatpush1.msra.mxu0 %v762
  %826 = vmatprep.subr.mxu0 %v767
  %827 = vmatpush1.msra.mxu0 %v766
  %828 = vmatprep.subr.mxu0 %v771
  %829 = vmatpush1.msra.mxu0 %v770
  %830 = vmatprep.subr.mxu0 %v775
  %831 = vmatpush1.msra.mxu0 %v774
  %832 = vmatprep.subr.mxu0 %v779
  %833 = vmatpush1.msra.mxu0 %v778
  %834 = vmatprep.subr.mxu0 %v783
  %835 = vmatpush1.msra.mxu0 %v782
  %836 = vmatprep.subr.mxu0 %v787
  %837 = vmatpush1.msra.mxu0 %v786
  %838 = vmatprep.subr.mxu0 %v791
  %839 = vmatpush1.msra.mxu0 %v790
  %840 = vmatprep.subr.mxu0 %v795
  %841 = vmatpush1.msra.mxu0 %v794
  %842 = vmatprep.subr.mxu0 %v799
  %843 = vmatpush1.msra.mxu0 %v798
  %844 = vmatprep.subr.mxu0 %v803
  %845 = vmatpush1.msra.mxu0 %v802
  %846 = vmatprep.subr.mxu0 %v807
  %847 = vmatpush1.msra.mxu0 %v806
  %848 = vmatprep.subr.mxu0 %v811
  %849 = vmatpush1.msra.mxu0 %v810
  %850 = vmatprep.subr.mxu0 %v815
  %851 = vmatpush1.msra.mxu0 %v814
  %852 = vmatprep.subr.mxu0 %v819
  %853 = vmatpush1.msra.mxu0 %v818
  %854 = vmatprep.subr.mxu0 0.0
  %855 = vmatpush1.msra.mxu0 0.0
  %856 = vmatprep.subr.mxu0 0.0
  %857 = vmatpush1.msra.mxu0 0.0
  %858 = vmatprep.subr.mxu0 0.0
  %859 = vmatpush1.msra.mxu0 0.0
  %860 = vmatprep.subr.mxu0 0.0
  %861 = vmatpush1.msra.mxu0 0.0
  %862 = vmatprep.subr.mxu0 0.0
  %863 = vmatpush1.msra.mxu0 0.0
  %864 = vmatprep.subr.mxu0 0.0
  %865 = vmatpush1.msra.mxu0 0.0
  %866 = vmatprep.subr.mxu0 0.0
  %867 = vmatpush1.msra.mxu0 0.0
  %868 = vmatprep.subr.mxu0 0.0
  %869 = vmatpush1.msra.mxu0 0.0
  %870 = vmatprep.subr.mxu0 0.0
  %871 = vmatpush1.msra.mxu0 0.0
  %872 = vmatprep.subr.mxu0 0.0
  %873 = vmatpush1.msra.mxu0 0.0
  %874 = vmatprep.subr.mxu0 0.0
  %875 = vmatpush1.msra.mxu0 0.0
  %876 = vmatprep.subr.mxu0 0.0
  %877 = vmatpush1.msra.mxu0 0.0
  %878 = vmatprep.subr.mxu0 0.0
  %879 = vmatpush1.msra.mxu0 0.0
  %880 = vmatprep.subr.mxu0 0.0
  %881 = vmatpush1.msra.mxu0 0.0
  %882 = vmatprep.subr.mxu0 0.0
  %883 = vmatpush1.msra.mxu0 0.0
  %884 = vmatprep.subr.mxu0 0.0
  %885 = vmatpush1.msra.mxu0 0.0
  %886 = vmatprep.mubr.f32.mxu0 0.0
  %887 = vmatmul.mubr.f32.gmra.mrb[0].mxu0 %v757
  %v888 = vpop.f32.mrb[0].mxu0
  %v889 = vadd.f32 0.0, %v888
  %v890 = vpop.f32.mrb[0].mxu0
  %v891 = vadd.f32 0.0, %v890
  %892 = vdwg.mxu0
  %893 = vmatprep.subr.mxu0 %v761
  %894 = vmatpush1.msra.mxu0 %v760
  %895 = vmatprep.subr.mxu0 %v765
  %896 = vmatpush1.msra.mxu0 %v764
  %897 = vmatprep.subr.mxu0 %v769
  %898 = vmatpush1.msra.mxu0 %v768
  %899 = vmatprep.subr.mxu0 %v773
  %900 = vmatpush1.msra.mxu0 %v772
  %901 = vmatprep.subr.mxu0 %v777
  %902 = vmatpush1.msra.mxu0 %v776
  %903 = vmatprep.subr.mxu0 %v781
  %904 = vmatpush1.msra.mxu0 %v780
  %905 = vmatprep.subr.mxu0 %v785
  %906 = vmatpush1.msra.mxu0 %v784
  %907 = vmatprep.subr.mxu0 %v789
  %908 = vmatpush1.msra.mxu0 %v788
  %909 = vmatprep.subr.mxu0 %v793
  %910 = vmatpush1.msra.mxu0 %v792
  %911 = vmatprep.subr.mxu0 %v797
  %912 = vmatpush1.msra.mxu0 %v796
  %913 = vmatprep.subr.mxu0 %v801
  %914 = vmatpush1.msra.mxu0 %v800
  %915 = vmatprep.subr.mxu0 %v805
  %916 = vmatpush1.msra.mxu0 %v804
  %917 = vmatprep.subr.mxu0 %v809
  %918 = vmatpush1.msra.mxu0 %v808
  %919 = vmatprep.subr.mxu0 %v813
  %920 = vmatpush1.msra.mxu0 %v812
  %921 = vmatprep.subr.mxu0 %v817
  %922 = vmatpush1.msra.mxu0 %v816
  %923 = vmatprep.subr.mxu0 %v821
  %924 = vmatpush1.msra.mxu0 %v820
  %925 = vmatprep.subr.mxu0 0.0
  %926 = vmatpush1.msra.mxu0 0.0
  %927 = vmatprep.subr.mxu0 0.0
  %928 = vmatpush1.msra.mxu0 0.0
  %929 = vmatprep.subr.mxu0 0.0
  %930 = vmatpush1.msra.mxu0 0.0
  %931 = vmatprep.subr.mxu0 0.0
  %932 = vmatpush1.msra.mxu0 0.0
  %933 = vmatprep.subr.mxu0 0.0
  %934 = vmatpush1.msra.mxu0 0.0
  %935 = vmatprep.subr.mxu0 0.0
  %936 = vmatpush1.msra.mxu0 0.0
  %937 = vmatprep.subr.mxu0 0.0
  %938 = vmatpush1.msra.mxu0 0.0
  %939 = vmatprep.subr.mxu0 0.0
  %940 = vmatpush1.msra.mxu0 0.0
  %941 = vmatprep.subr.mxu0 0.0
  %942 = vmatpush1.msra.mxu0 0.0
  %943 = vmatprep.subr.mxu0 0.0
  %944 = vmatpush1.msra.mxu0 0.0
  %945 = vmatprep.subr.mxu0 0.0
  %946 = vmatpush1.msra.mxu0 0.0
  %947 = vmatprep.subr.mxu0 0.0
  %948 = vmatpush1.msra.mxu0 0.0
  %949 = vmatprep.subr.mxu0 0.0
  %950 = vmatpush1.msra.mxu0 0.0
  %951 = vmatprep.subr.mxu0 0.0
  %952 = vmatpush1.msra.mxu0 0.0
  %953 = vmatprep.subr.mxu0 0.0
  %954 = vmatpush1.msra.mxu0 0.0
  %955 = vmatprep.subr.mxu0 0.0
  %956 = vmatpush1.msra.mxu0 0.0
  %957 = vmatprep.mubr.f32.mxu0 0.0
  %958 = vmatmul.mubr.f32.gmra.mrb[0].mxu0 %v757
  %v959 = vpop.f32.mrb[0].mxu0
  %v960 = vadd.f32 0.0, %v959
  %v961 = vpop.f32.mrb[0].mxu0
  %v962 = vadd.f32 0.0, %v961
  %963 = vdwg.mxu0
  %v964 = vadd.f32 %v753, %v889
  %v965 = vadd.f32 %v754, %v891
  %v966 = vadd.f32 %v755, %v960
  %v967 = vadd.f32 %v756, %v962
  %v968 = vxor.u32 %v964, 2147483648
  %v969 = vmul.f32 %v968, 1.442695
  %v970 = vpow.pop %v969
  %v971 = vadd.f32 %v970, 1.0
  %v972 = vrcp.pop %v971
  %v973 = vmul.f32 1.0, %v972
  %v974 = vxor.u32 %v965, 2147483648
  %v975 = vmul.f32 %v974, 1.442695
  %v976 = vpow.pop %v975
  %v977 = vadd.f32 %v976, 1.0
  %v978 = vrcp.pop %v977
  %v979 = vmul.f32 1.0, %v978
  %v980 = vtanh.pop %v966
  %v981 = vxor.u32 %v967, 2147483648
  %v982 = vmul.f32 %v981, 1.442695
  %v983 = vpow.pop %v982
  %v984 = vadd.f32 %v983, 1.0
  %v985 = vrcp.pop %v984
  %v986 = vmul.f32 1.0, %v985
  %v987 = vld [vmem:[#allocation3] sm:$0xff]
  %v988 = vmul.f32 %v979, %v987
  %v989 = vmul.f32 %v973, %v980
  %v990 = vadd.f32 %v988, %v989
  %v991 = vtanh.pop %v990
  %v992 = vmul.f32 %v986, %v991
  %993 = vst [vmem:[#allocation3] sm:$0xff] %v990
  %994 = vst [vmem:[#allocation2] sm:$0xff] %v992
  %s995 = scalar_lea.vmem [#allocation4], 24
  %996 = vst [vmem:[%s995] sm:$0xff] %v992
  %s997 = scalar_lea.vmem %s0, 128
  %v998 = vld [vmem:[%s997] sm:$0xff]
  %v999 = vld [vmem:[%s997 + $0x8] sm:$0xff]
  %v1000 = vld [vmem:[%s997 + $0x10] sm:$0xff]
  %v1001 = vld [vmem:[%s997 + $0x18] sm:$0xff]
  %v1002 = vld [vmem:[#allocation2] sm:$0xff]
  %v1003 = vld [vmem:[%s1] sm:$0xff]
  %v1004 = vld [vmem:[%s1 + $0x8] sm:$0xff]
  %v1005 = vld [vmem:[%s1 + $0x10] sm:$0xff]
  %v1006 = vld [vmem:[%s1 + $0x18] sm:$0xff]
  %v1007 = vld [vmem:[%s1 + $0x20] sm:$0xff]
  %v1008 = vld [vmem:[%s1 + $0x28] sm:$0xff]
  %v1009 = vld [vmem:[%s1 + $0x30] sm:$0xff]
  %v1010 = vld [vmem:[%s1 + $0x38] sm:$0xff]
  %v1011 = vld [vmem:[%s1 + $0x40] sm:$0xff]
  %v1012 = vld [vmem:[%s1 + $0x48] sm:$0xff]
  %v1013 = vld [vmem:[%s1 + $0x50] sm:$0xff]
  %v1014 = vld [vmem:[%s1 + $0x58] sm:$0xff]
  %v1015 = vld [vmem:[%s1 + $0x60] sm:$0xff]
  %v1016 = vld [vmem:[%s1 + $0x68] sm:$0xff]
  %v1017 = vld [vmem:[%s1 + $0x70] sm:$0xff]
  %v1018 = vld [vmem:[%s1 + $0x78] sm:$0xff]
  %v1019 = vld [vmem:[%s1 + $0x80] sm:$0xff]
  %v1020 = vld [vmem:[%s1 + $0x88] sm:$0xff]
  %v1021 = vld [vmem:[%s1 + $0x90] sm:$0xff]
  %v1022 = vld [vmem:[%s1 + $0x98] sm:$0xff]
  %v1023 = vld [vmem:[%s1 + $0xa0] sm:$0xff]
  %v1024 = vld [vmem:[%s1 + $0xa8] sm:$0xff]
  %v1025 = vld [vmem:[%s1 + $0xb0] sm:$0xff]
  %v1026 = vld [vmem:[%s1 + $0xb8] sm:$0xff]
  %v1027 = vld [vmem:[%s1 + $0xc0] sm:$0xff]
  %v1028 = vld [vmem:[%s1 + $0xc8] sm:$0xff]
  %v1029 = vld [vmem:[%s1 + $0xd0] sm:$0xff]
  %v1030 = vld [vmem:[%s1 + $0xd8] sm:$0xff]
  %v1031 = vld [vmem:[%s1 + $0xe0] sm:$0xff]
  %v1032 = vld [vmem:[%s1 + $0xe8] sm:$0xff]
  %v1033 = vld [vmem:[%s1 + $0xf0] sm:$0xff]
  %v1034 = vld [vmem:[%s1 + $0xf8] sm:$0xff]
  %v1035 = vld [vmem:[%s1 + $0x100] sm:$0xff]
  %v1036 = vld [vmem:[%s1 + $0x108] sm:$0xff]
  %v1037 = vld [vmem:[%s1 + $0x110] sm:$0xff]
  %v1038 = vld [vmem:[%s1 + $0x118] sm:$0xff]
  %v1039 = vld [vmem:[%s1 + $0x120] sm:$0xff]
  %v1040 = vld [vmem:[%s1 + $0x128] sm:$0xff]
  %v1041 = vld [vmem:[%s1 + $0x130] sm:$0xff]
  %v1042 = vld [vmem:[%s1 + $0x138] sm:$0xff]
  %v1043 = vld [vmem:[%s1 + $0x140] sm:$0xff]
  %v1044 = vld [vmem:[%s1 + $0x148] sm:$0xff]
  %v1045 = vld [vmem:[%s1 + $0x150] sm:$0xff]
  %v1046 = vld [vmem:[%s1 + $0x158] sm:$0xff]
  %v1047 = vld [vmem:[%s1 + $0x160] sm:$0xff]
  %v1048 = vld [vmem:[%s1 + $0x168] sm:$0xff]
  %v1049 = vld [vmem:[%s1 + $0x170] sm:$0xff]
  %v1050 = vld [vmem:[%s1 + $0x178] sm:$0xff]
  %v1051 = vld [vmem:[%s1 + $0x180] sm:$0xff]
  %v1052 = vld [vmem:[%s1 + $0x188] sm:$0xff]
  %v1053 = vld [vmem:[%s1 + $0x190] sm:$0xff]
  %v1054 = vld [vmem:[%s1 + $0x198] sm:$0xff]
  %v1055 = vld [vmem:[%s1 + $0x1a0] sm:$0xff]
  %v1056 = vld [vmem:[%s1 + $0x1a8] sm:$0xff]
  %v1057 = vld [vmem:[%s1 + $0x1b0] sm:$0xff]
  %v1058 = vld [vmem:[%s1 + $0x1b8] sm:$0xff]
  %v1059 = vld [vmem:[%s1 + $0x1c0] sm:$0xff]
  %v1060 = vld [vmem:[%s1 + $0x1c8] sm:$0xff]
  %v1061 = vld [vmem:[%s1 + $0x1d0] sm:$0xff]
  %v1062 = vld [vmem:[%s1 + $0x1d8] sm:$0xff]
  %v1063 = vld [vmem:[%s1 + $0x1e0] sm:$0xff]
  %v1064 = vld [vmem:[%s1 + $0x1e8] sm:$0xff]
  %v1065 = vld [vmem:[%s1 + $0x1f0] sm:$0xff]
  %v1066 = vld [vmem:[%s1 + $0x1f8] sm:$0xff]
  %1067 = vmatprep.subr.mxu0 %v1004
  %1068 = vmatpush1.msra.mxu0 %v1003
  %1069 = vmatprep.subr.mxu0 %v1008
  %1070 = vmatpush1.msra.mxu0 %v1007
  %1071 = vmatprep.subr.mxu0 %v1012
  %1072 = vmatpush1.msra.mxu0 %v1011
  %1073 = vmatprep.subr.mxu0 %v1016
  %1074 = vmatpush1.msra.mxu0 %v1015
  %1075 = vmatprep.subr.mxu0 %v1020
  %1076 = vmatpush1.msra.mxu0 %v1019
  %1077 = vmatprep.subr.mxu0 %v1024
  %1078 = vmatpush1.msra.mxu0 %v1023
  %1079 = vmatprep.subr.mxu0 %v1028
  %1080 = vmatpush1.msra.mxu0 %v1027
  %1081 = vmatprep.subr.mxu0 %v1032
  %1082 = vmatpush1.msra.mxu0 %v1031
  %1083 = vmatprep.subr.mxu0 %v1036
  %1084 = vmatpush1.msra.mxu0 %v1035
  %1085 = vmatprep.subr.mxu0 %v1040
  %1086 = vmatpush1.msra.mxu0 %v1039
  %1087 = vmatprep.subr.mxu0 %v1044
  %1088 = vmatpush1.msra.mxu0 %v1043
  %1089 = vmatprep.subr.mxu0 %v1048
  %1090 = vmatpush1.msra.mxu0 %v1047
  %1091 = vmatprep.subr.mxu0 %v1052
  %1092 = vmatpush1.msra.mxu0 %v1051
  %1093 = vmatprep.subr.mxu0 %v1056
  %1094 = vmatpush1.msra.mxu0 %v1055
  %1095 = vmatprep.subr.mxu0 %v1060
  %1096 = vmatpush1.msra.mxu0 %v1059
  %1097 = vmatprep.subr.mxu0 %v1064
  %1098 = vmatpush1.msra.mxu0 %v1063
  %1099 = vmatprep.subr.mxu0 0.0
  %1100 = vmatpush1.msra.mxu0 0.0
  %1101 = vmatprep.subr.mxu0 0.0
  %1102 = vmatpush1.msra.mxu0 0.0
  %1103 = vmatprep.subr.mxu0 0.0
  %1104 = vmatpush1.msra.mxu0 0.0
  %1105 = vmatprep.subr.mxu0 0.0
  %1106 = vmatpush1.msra.mxu0 0.0
  %1107 = vmatprep.subr.mxu0 0.0
  %1108 = vmatpush1.msra.mxu0 0.0
  %1109 = vmatprep.subr.mxu0 0.0
  %1110 = vmatpush1.msra.mxu0 0.0
  %1111 = vmatprep.subr.mxu0 0.0
  %1112 = vmatpush1.msra.mxu0 0.0
  %1113 = vmatprep.subr.mxu0 0.0
  %1114 = vmatpush1.msra.mxu0 0.0
  %1115 = vmatprep.subr.mxu0 0.0
  %1116 = vmatpush1.msra.mxu0 0.0
  %1117 = vmatprep.subr.mxu0 0.0
  %1118 = vmatpush1.msra.mxu0 0.0
  %1119 = vmatprep.subr.mxu0 0.0
  %1120 = vmatpush1.msra.mxu0 0.0
  %1121 = vmatprep.subr.mxu0 0.0
  %1122 = vmatpush1.msra.mxu0 0.0
  %1123 = vmatprep.subr.mxu0 0.0
  %1124 = vmatpush1.msra.mxu0 0.0
  %1125 = vmatprep.subr.mxu0 0.0
  %1126 = vmatpush1.msra.mxu0 0.0
  %1127 = vmatprep.subr.mxu0 0.0
  %1128 = vmatpush1.msra.mxu0 0.0
  %1129 = vmatprep.subr.mxu0 0.0
  %1130 = vmatpush1.msra.mxu0 0.0
  %1131 = vmatprep.mubr.f32.mxu0 0.0
  %1132 = vmatmul.mubr.f32.gmra.mrb[0].mxu0 %v1002
  %v1133 = vpop.f32.mrb[0].mxu0
  %v1134 = vadd.f32 0.0, %v1133
  %v1135 = vpop.f32.mrb[0].mxu0
  %v1136 = vadd.f32 0.0, %v1135
  %1137 = vdwg.mxu0
  %1138 = vmatprep.subr.mxu0 %v1006
  %1139 = vmatpush1.msra.mxu0 %v1005
  %1140 = vmatprep.subr.mxu0 %v1010
  %1141 = vmatpush1.msra.mxu0 %v1009
  %1142 = vmatprep.subr.mxu0 %v1014
  %1143 = vmatpush1.msra.mxu0 %v1013
  %1144 = vmatprep.subr.mxu0 %v1018
  %1145 = vmatpush1.msra.mxu0 %v1017
  %1146 = vmatprep.subr.mxu0 %v1022
  %1147 = vmatpush1.msra.mxu0 %v1021
  %1148 = vmatprep.subr.mxu0 %v1026
  %1149 = vmatpush1.msra.mxu0 %v1025
  %1150 = vmatprep.subr.mxu0 %v1030
  %1151 = vmatpush1.msra.mxu0 %v1029
  %1152 = vmatprep.subr.mxu0 %v1034
  %1153 = vmatpush1.msra.mxu0 %v1033
  %1154 = vmatprep.subr.mxu0 %v1038
  %1155 = vmatpush1.msra.mxu0 %v1037
  %1156 = vmatprep.subr.mxu0 %v1042
  %1157 = vmatpush1.msra.mxu0 %v1041
  %1158 = vmatprep.subr.mxu0 %v1046
  %1159 = vmatpush1.msra.mxu0 %v1045
  %1160 = vmatprep.subr.mxu0 %v1050
  %1161 = vmatpush1.msra.mxu0 %v1049
  %1162 = vmatprep.subr.mxu0 %v1054
  %1163 = vmatpush1.msra.mxu0 %v1053
  %1164 = vmatprep.subr.mxu0 %v1058
  %1165 = vmatpush1.msra.mxu0 %v1057
  %1166 = vmatprep.subr.mxu0 %v1062
  %1167 = vmatpush1.msra.mxu0 %v1061
  %1168 = vmatprep.subr.mxu0 %v1066
  %1169 = vmatpush1.msra.mxu0 %v1065
  %1170 = vmatprep.subr.mxu0 0.0
  %1171 = vmatpush1.msra.mxu0 0.0
  %1172 = vmatprep.subr.mxu0 0.0
  %1173 = vmatpush1.msra.mxu0 0.0
  %1174 = vmatprep.subr.mxu0 0.0
  %1175 = vmatpush1.msra.mxu0 0.0
  %1176 = vmatprep.subr.mxu0 0.0
  %1177 = vmatpush1.msra.mxu0 0.0
  %1178 = vmatprep.subr.mxu0 0.0
  %1179 = vmatpush1.msra.mxu0 0.0
  %1180 = vmatprep.subr.mxu0 0.0
  %1181 = vmatpush1.msra.mxu0 0.0
  %1182 = vmatprep.subr.mxu0 0.0
  %1183 = vmatpush1.msra.mxu0 0.0
  %1184 = vmatprep.subr.mxu0 0.0
  %1185 = vmatpush1.msra.mxu0 0.0
  %1186 = vmatprep.subr.mxu0 0.0
  %1187 = vmatpush1.msra.mxu0 0.0
  %1188 = vmatprep.subr.mxu0 0.0
  %1189 = vmatpush1.msra.mxu0 0.0
  %1190 = vmatprep.subr.mxu0 0.0
  %1191 = vmatpush1.msra.mxu0 0.0
  %1192 = vmatprep.subr.mxu0 0.0
  %1193 = vmatpush1.msra.mxu0 0.0
  %1194 = vmatprep.subr.mxu0 0.0
  %1195 = vmatpush1.msra.mxu0 0.0
  %1196 = vmatprep.subr.mxu0 0.0
  %1197 = vmatpush1.msra.mxu0 0.0
  %1198 = vmatprep.subr.mxu0 0.0
  %1199 = vmatpush1.msra.mxu0 0.0
  %1200 = vmatprep.subr.mxu0 0.0
  %1201 = vmatpush1.msra.mxu0 0.0
  %1202 = vmatprep.mubr.f32.mxu0 0.0
  %1203 = vmatmul.mubr.f32.gmra.mrb[0].mxu0 %v1002
  %v1204 = vpop.f32.mrb[0].mxu0
  %v1205 = vadd.f32 0.0, %v1204
  %v1206 = vpop.f32.mrb[0].mxu0
  %v1207 = vadd.f32 0.0, %v1206
  %1208 = vdwg.mxu0
  %v1209 = vadd.f32 %v998, %v1134
  %v1210 = vadd.f32 %v999, %v1136
  %v1211 = vadd.f32 %v1000, %v1205
  %v1212 = vadd.f32 %v1001, %v1207
  %v1213 = vxor.u32 %v1209, 2147483648
  %v1214 = vmul.f32 %v1213, 1.442695
  %v1215 = vpow.pop %v1214
  %v1216 = vadd.f32 %v1215, 1.0
  %v1217 = vrcp.pop %v1216
  %v1218 = vmul.f32 1.0, %v1217
  %v1219 = vxor.u32 %v1210, 2147483648
  %v1220 = vmul.f32 %v1219, 1.442695
  %v1221 = vpow.pop %v1220
  %v1222 = vadd.f32 %v1221, 1.0
  %v1223 = vrcp.pop %v1222
  %v1224 = vmul.f32 1.0, %v1223
  %v1225 = vtanh.pop %v1211
  %v1226 = vxor.u32 %v1212, 2147483648
  %v1227 = vmul.f32 %v1226, 1.442695
  %v1228 = vpow.pop %v1227
  %v1229 = vadd.f32 %v1228, 1.0
  %v1230 = vrcp.pop %v1229
  %v1231 = vmul.f32 1.0, %v1230
  %v1232 = vld [vmem:[#allocation3] sm:$0xff]
  %v1233 = vmul.f32 %v1224, %v1232
  %v1234 = vmul.f32 %v1218, %v1225
  %v1235 = vadd.f32 %v1233, %v1234
  %v1236 = vtanh.pop %v1235
  %v1237 = vmul.f32 %v1231, %v1236
  %1238 = vst [vmem:[#allocation3] sm:$0xff] %v1235
  %1239 = vst [vmem:[#allocation2] sm:$0xff] %v1237
  %s1240 = scalar_lea.vmem [#allocation4], 32
  %1241 = vst [vmem:[%s1240] sm:$0xff] %v1237
  %s1242 = scalar_lea.vmem %s0, 160
  %v1243 = vld [vmem:[%s1242] sm:$0xff]
  %v1244 = vld [vmem:[%s1242 + $0x8] sm:$0xff]
  %v1245 = vld [vmem:[%s1242 + $0x10] sm:$0xff]
  %v1246 = vld [vmem:[%s1242 + $0x18] sm:$0xff]
  %v1247 = vld [vmem:[#allocation2] sm:$0xff]
  %v1248 = vld [vmem:[%s1] sm:$0xff]
  %v1249 = vld [vmem:[%s1 + $0x8] sm:$0xff]
  %v1250 = vld [vmem:[%s1 + $0x10] sm:$0xff]
  %v1251 = vld [vmem:[%s1 + $0x18] sm:$0xff]
  %v1252 = vld [vmem:[%s1 + $0x20] sm:$0xff]
  %v1253 = vld [vmem:[%s1 + $0x28] sm:$0xff]
  %v1254 = vld [vmem:[%s1 + $0x30] sm:$0xff]
  %v1255 = vld [vmem:[%s1 + $0x38] sm:$0xff]
  %v1256 = vld [vmem:[%s1 + $0x40] sm:$0xff]
  %v1257 = vld [vmem:[%s1 + $0x48] sm:$0xff]
  %v1258 = vld [vmem:[%s1 + $0x50] sm:$0xff]
  %v1259 = vld [vmem:[%s1 + $0x58] sm:$0xff]
  %v1260 = vld [vmem:[%s1 + $0x60] sm:$0xff]
  %v1261 = vld [vmem:[%s1 + $0x68] sm:$0xff]
  %v1262 = vld [vmem:[%s1 + $0x70] sm:$0xff]
  %v1263 = vld [vmem:[%s1 + $0x78] sm:$0xff]
  %v1264 = vld [vmem:[%s1 + $0x80] sm:$0xff]
  %v1265 = vld [vmem:[%s1 + $0x88] sm:$0xff]
  %v1266 = vld [vmem:[%s1 + $0x90] sm:$0xff]
  %v1267 = vld [vmem:[%s1 + $0x98] sm:$0xff]
  %v1268 = vld [vmem:[%s1 + $0xa0] sm:$0xff]
  %v1269 = vld [vmem:[%s1 + $0xa8] sm:$0xff]
  %v1270 = vld [vmem:[%s1 + $0xb0] sm:$0xff]
  %v1271 = vld [vmem:[%s1 + $0xb8] sm:$0xff]
  %v1272 = vld [vmem:[%s1 + $0xc0] sm:$0xff]
  %v1273 = vld [vmem:[%s1 + $0xc8] sm:$0xff]
  %v1274 = vld [vmem:[%s1 + $0xd0] sm:$0xff]
  %v1275 = vld [vmem:[%s1 + $0xd8] sm:$0xff]
  %v1276 = vld [vmem:[%s1 + $0xe0] sm:$0xff]
  %v1277 = vld [vmem:[%s1 + $0xe8] sm:$0xff]
  %v1278 = vld [vmem:[%s1 + $0xf0] sm:$0xff]
  %v1279 = vld [vmem:[%s1 + $0xf8] sm:$0xff]
  %v1280 = vld [vmem:[%s1 + $0x100] sm:$0xff]
  %v1281 = vld [vmem:[%s1 + $0x108] sm:$0xff]
  %v1282 = vld [vmem:[%s1 + $0x110] sm:$0xff]
  %v1283 = vld [vmem:[%s1 + $0x118] sm:$0xff]
  %v1284 = vld [vmem:[%s1 + $0x120] sm:$0xff]
  %v1285 = vld [vmem:[%s1 + $0x128] sm:$0xff]
  %v1286 = vld [vmem:[%s1 + $0x130] sm:$0xff]
  %v1287 = vld [vmem:[%s1 + $0x138] sm:$0xff]
  %v1288 = vld [vmem:[%s1 + $0x140] sm:$0xff]
  %v1289 = vld [vmem:[%s1 + $0x148] sm:$0xff]
  %v1290 = vld [vmem:[%s1 + $0x150] sm:$0xff]
  %v1291 = vld [vmem:[%s1 + $0x158] sm:$0xff]
  %v1292 = vld [vmem:[%s1 + $0x160] sm:$0xff]
  %v1293 = vld [vmem:[%s1 + $0x168] sm:$0xff]
  %v1294 = vld [vmem:[%s1 + $0x170] sm:$0xff]
  %v1295 = vld [vmem:[%s1 + $0x178] sm:$0xff]
  %v1296 = vld [vmem:[%s1 + $0x180] sm:$0xff]
  %v1297 = vld [vmem:[%s1 + $0x188] sm:$0xff]
  %v1298 = vld [vmem:[%s1 + $0x190] sm:$0xff]
  %v1299 = vld [vmem:[%s1 + $0x198] sm:$0xff]
  %v1300 = vld [vmem:[%s1 + $0x1a0] sm:$0xff]
  %v1301 = vld [vmem:[%s1 + $0x1a8] sm:$0xff]
  %v1302 = vld [vmem:[%s1 + $0x1b0] sm:$0xff]
  %v1303 = vld [vmem:[%s1 + $0x1b8] sm:$0xff]
  %v1304 = vld [vmem:[%s1 + $0x1c0] sm:$0xff]
  %v1305 = vld [vmem:[%s1 + $0x1c8] sm:$0xff]
  %v1306 = vld [vmem:[%s1 + $0x1d0] sm:$0xff]
  %v1307 = vld [vmem:[%s1 + $0x1d8] sm:$0xff]
  %v1308 = vld [vmem:[%s1 + $0x1e0] sm:$0xff]
  %v1309 = vld [vmem:[%s1 + $0x1e8] sm:$0xff]
  %v1310 = vld [vmem:[%s1 + $0x1f0] sm:$0xff]
  %v1311 = vld [vmem:[%s1 + $0x1f8] sm:$0xff]
  %1312 = vmatprep.subr.mxu0 %v1249
  %1313 = vmatpush1.msra.mxu0 %v1248
  %1314 = vmatprep.subr.mxu0 %v1253
  %1315 = vmatpush1.msra.mxu0 %v1252
  %1316 = vmatprep.subr.mxu0 %v1257
  %1317 = vmatpush1.msra.mxu0 %v1256
  %1318 = vmatprep.subr.mxu0 %v1261
  %1319 = vmatpush1.msra.mxu0 %v1260
  %1320 = vmatprep.subr.mxu0 %v1265
  %1321 = vmatpush1.msra.mxu0 %v1264
  %1322 = vmatprep.subr.mxu0 %v1269
  %1323 = vmatpush1.msra.mxu0 %v1268
  %1324 = vmatprep.subr.mxu0 %v1273
  %1325 = vmatpush1.msra.mxu0 %v1272
  %1326 = vmatprep.subr.mxu0 %v1277
  %1327 = vmatpush1.msra.mxu0 %v1276
  %1328 = vmatprep.subr.mxu0 %v1281
  %1329 = vmatpush1.msra.mxu0 %v1280
  %1330 = vmatprep.subr.mxu0 %v1285
  %1331 = vmatpush1.msra.mxu0 %v1284
  %1332 = vmatprep.subr.mxu0 %v1289
  %1333 = vmatpush1.msra.mxu0 %v1288
  %1334 = vmatprep.subr.mxu0 %v1293
  %1335 = vmatpush1.msra.mxu0 %v1292
  %1336 = vmatprep.subr.mxu0 %v1297
  %1337 = vmatpush1.msra.mxu0 %v1296
  %1338 = vmatprep.subr.mxu0 %v1301
  %1339 = vmatpush1.msra.mxu0 %v1300
  %1340 = vmatprep.subr.mxu0 %v1305
  %1341 = vmatpush1.msra.mxu0 %v1304
  %1342 = vmatprep.subr.mxu0 %v1309
  %1343 = vmatpush1.msra.mxu0 %v1308
  %1344 = vmatprep.subr.mxu0 0.0
  %1345 = vmatpush1.msra.mxu0 0.0
  %1346 = vmatprep.subr.mxu0 0.0
  %1347 = vmatpush1.msra.mxu0 0.0
  %1348 = vmatprep.subr.mxu0 0.0
  %1349 = vmatpush1.msra.mxu0 0.0
  %1350 = vmatprep.subr.mxu0 0.0
  %1351 = vmatpush1.msra.mxu0 0.0
  %1352 = vmatprep.subr.mxu0 0.0
  %1353 = vmatpush1.msra.mxu0 0.0
  %1354 = vmatprep.subr.mxu0 0.0
  %1355 = vmatpush1.msra.mxu0 0.0
  %1356 = vmatprep.subr.mxu0 0.0
  %1357 = vmatpush1.msra.mxu0 0.0
  %1358 = vmatprep.subr.mxu0 0.0
  %1359 = vmatpush1.msra.mxu0 0.0
  %1360 = vmatprep.subr.mxu0 0.0
  %1361 = vmatpush1.msra.mxu0 0.0
  %1362 = vmatprep.subr.mxu0 0.0
  %1363 = vmatpush1.msra.mxu0 0.0
  %1364 = vmatprep.subr.mxu0 0.0
  %1365 = vmatpush1.msra.mxu0 0.0
  %1366 = vmatprep.subr.mxu0 0.0
  %1367 = vmatpush1.msra.mxu0 0.0
  %1368 = vmatprep.subr.mxu0 0.0
  %1369 = vmatpush1.msra.mxu0 0.0
  %1370 = vmatprep.subr.mxu0 0.0
  %1371 = vmatpush1.msra.mxu0 0.0
  %1372 = vmatprep.subr.mxu0 0.0
  %1373 = vmatpush1.msra.mxu0 0.0
  %1374 = vmatprep.subr.mxu0 0.0
  %1375 = vmatpush1.msra.mxu0 0.0
  %1376 = vmatprep.mubr.f32.mxu0 0.0
  %1377 = vmatmul.mubr.f32.gmra.mrb[0].mxu0 %v1247
  %v1378 = vpop.f32.mrb[0].mxu0
  %v1379 = vadd.f32 0.0, %v1378
  %v1380 = vpop.f32.mrb[0].mxu0
  %v1381 = vadd.f32 0.0, %v1380
  %1382 = vdwg.mxu0
  %1383 = vmatprep.subr.mxu0 %v1251
  %1384 = vmatpush1.msra.mxu0 %v1250
  %1385 = vmatprep.subr.mxu0 %v1255
  %1386 = vmatpush1.msra.mxu0 %v1254
  %1387 = vmatprep.subr.mxu0 %v1259
  %1388 = vmatpush1.msra.mxu0 %v1258
  %1389 = vmatprep.subr.mxu0 %v1263
  %1390 = vmatpush1.msra.mxu0 %v1262
  %1391 = vmatprep.subr.mxu0 %v1267
  %1392 = vmatpush1.msra.mxu0 %v1266
  %1393 = vmatprep.subr.mxu0 %v1271
  %1394 = vmatpush1.msra.mxu0 %v1270
  %1395 = vmatprep.subr.mxu0 %v1275
  %1396 = vmatpush1.msra.mxu0 %v1274
  %1397 = vmatprep.subr.mxu0 %v1279
  %1398 = vmatpush1.msra.mxu0 %v1278
  %1399 = vmatprep.subr.mxu0 %v1283
  %1400 = vmatpush1.msra.mxu0 %v1282
  %1401 = vmatprep.subr.mxu0 %v1287
  %1402 = vmatpush1.msra.mxu0 %v1286
  %1403 = vmatprep.subr.mxu0 %v1291
  %1404 = vmatpush1.msra.mxu0 %v1290
  %1405 = vmatprep.subr.mxu0 %v1295
  %1406 = vmatpush1.msra.mxu0 %v1294
  %1407 = vmatprep.subr.mxu0 %v1299
  %1408 = vmatpush1.msra.mxu0 %v1298
  %1409 = vmatprep.subr.mxu0 %v1303
  %1410 = vmatpush1.msra.mxu0 %v1302
  %1411 = vmatprep.subr.mxu0 %v1307
  %1412 = vmatpush1.msra.mxu0 %v1306
  %1413 = vmatprep.subr.mxu0 %v1311
  %1414 = vmatpush1.msra.mxu0 %v1310
  %1415 = vmatprep.subr.mxu0 0.0
  %1416 = vmatpush1.msra.mxu0 0.0
  %1417 = vmatprep.subr.mxu0 0.0
  %1418 = vmatpush1.msra.mxu0 0.0
  %1419 = vmatprep.subr.mxu0 0.0
  %1420 = vmatpush1.msra.mxu0 0.0
  %1421 = vmatprep.subr.mxu0 0.0
  %1422 = vmatpush1.msra.mxu0 0.0
  %1423 = vmatprep.subr.mxu0 0.0
  %1424 = vmatpush1.msra.mxu0 0.0
  %1425 = vmatprep.subr.mxu0 0.0
  %1426 = vmatpush1.msra.mxu0 0.0
  %1427 = vmatprep.subr.mxu0 0.0
  %1428 = vmatpush1.msra.mxu0 0.0
  %1429 = vmatprep.subr.mxu0 0.0
  %1430 = vmatpush1.msra.mxu0 0.0
  %1431 = vmatprep.subr.mxu0 0.0
  %1432 = vmatpush1.msra.mxu0 0.0
  %1433 = vmatprep.subr.mxu0 0.0
  %1434 = vmatpush1.msra.mxu0 0.0
  %1435 = vmatprep.subr.mxu0 0.0
  %1436 = vmatpush1.msra.mxu0 0.0
  %1437 = vmatprep.subr.mxu0 0.0
  %1438 = vmatpush1.msra.mxu0 0.0
  %1439 = vmatprep.subr.mxu0 0.0
  %1440 = vmatpush1.msra.mxu0 0.0
  %1441 = vmatprep.subr.mxu0 0.0
  %1442 = vmatpush1.msra.mxu0 0.0
  %1443 = vmatprep.subr.mxu0 0.0
  %1444 = vmatpush1.msra.mxu0 0.0
  %1445 = vmatprep.subr.mxu0 0.0
  %1446 = vmatpush1.msra.mxu0 0.0
  %1447 = vmatprep.mubr.f32.mxu0 0.0
  %1448 = vmatmul.mubr.f32.gmra.mrb[0].mxu0 %v1247
  %v1449 = vpop.f32.mrb[0].mxu0
  %v1450 = vadd.f32 0.0, %v1449
  %v1451 = vpop.f32.mrb[0].mxu0
  %v1452 = vadd.f32 0.0, %v1451
  %1453 = vdwg.mxu0
  %v1454 = vadd.f32 %v1243, %v1379
  %v1455 = vadd.f32 %v1244, %v1381
  %v1456 = vadd.f32 %v1245, %v1450
  %v1457 = vadd.f32 %v1246, %v1452
  %v1458 = vxor.u32 %v1454, 2147483648
  %v1459 = vmul.f32 %v1458, 1.442695
  %v1460 = vpow.pop %v1459
  %v1461 = vadd.f32 %v1460, 1.0
  %v1462 = vrcp.pop %v1461
  %v1463 = vmul.f32 1.0, %v1462
  %v1464 = vxor.u32 %v1455, 2147483648
  %v1465 = vmul.f32 %v1464, 1.442695
  %v1466 = vpow.pop %v1465
  %v1467 = vadd.f32 %v1466, 1.0
  %v1468 = vrcp.pop %v1467
  %v1469 = vmul.f32 1.0, %v1468
  %v1470 = vtanh.pop %v1456
  %v1471 = vxor.u32 %v1457, 2147483648
  %v1472 = vmul.f32 %v1471, 1.442695
  %v1473 = vpow.pop %v1472
  %v1474 = vadd.f32 %v1473, 1.0
  %v1475 = vrcp.pop %v1474
  %v1476 = vmul.f32 1.0, %v1475
  %v1477 = vld [vmem:[#allocation3] sm:$0xff]
  %v1478 = vmul.f32 %v1469, %v1477
  %v1479 = vmul.f32 %v1463, %v1470
  %v1480 = vadd.f32 %v1478, %v1479
  %v1481 = vtanh.pop %v1480
  %v1482 = vmul.f32 %v1476, %v1481
  %1483 = vst [vmem:[#allocation3] sm:$0xff] %v1480
  %1484 = vst [vmem:[#allocation2] sm:$0xff] %v1482
  %s1485 = scalar_lea.vmem [#allocation4], 40
  %1486 = vst [vmem:[%s1485] sm:$0xff] %v1482
  %s1487 = scalar_lea.vmem %s0, 192
  %v1488 = vld [vmem:[%s1487] sm:$0xff]
  %v1489 = vld [vmem:[%s1487 + $0x8] sm:$0xff]
  %v1490 = vld [vmem:[%s1487 + $0x10] sm:$0xff]
  %v1491 = vld [vmem:[%s1487 + $0x18] sm:$0xff]
  %v1492 = vld [vmem:[#allocation2] sm:$0xff]
  %v1493 = vld [vmem:[%s1] sm:$0xff]
  %v1494 = vld [vmem:[%s1 + $0x8] sm:$0xff]
  %v1495 = vld [vmem:[%s1 + $0x10] sm:$0xff]
  %v1496 = vld [vmem:[%s1 + $0x18] sm:$0xff]
  %v1497 = vld [vmem:[%s1 + $0x20] sm:$0xff]
  %v1498 = vld [vmem:[%s1 + $0x28] sm:$0xff]
  %v1499 = vld [vmem:[%s1 + $0x30] sm:$0xff]
  %v1500 = vld [vmem:[%s1 + $0x38] sm:$0xff]
  %v1501 = vld [vmem:[%s1 + $0x40] sm:$0xff]
  %v1502 = vld [vmem:[%s1 + $0x48] sm:$0xff]
  %v1503 = vld [vmem:[%s1 + $0x50] sm:$0xff]
  %v1504 = vld [vmem:[%s1 + $0x58] sm:$0xff]
  %v1505 = vld [vmem:[%s1 + $0x60] sm:$0xff]
  %v1506 = vld [vmem:[%s1 + $0x68] sm:$0xff]
  %v1507 = vld [vmem:[%s1 + $0x70] sm:$0xff]
  %v1508 = vld [vmem:[%s1 + $0x78] sm:$0xff]
  %v1509 = vld [vmem:[%s1 + $0x80] sm:$0xff]
  %v1510 = vld [vmem:[%s1 + $0x88] sm:$0xff]
  %v1511 = vld [vmem:[%s1 + $0x90] sm:$0xff]
  %v1512 = vld [vmem:[%s1 + $0x98] sm:$0xff]
  %v1513 = vld [vmem:[%s1 + $0xa0] sm:$0xff]
  %v1514 = vld [vmem:[%s1 + $0xa8] sm:$0xff]
  %v1515 = vld [vmem:[%s1 + $0xb0] sm:$0xff]
  %v1516 = vld [vmem:[%s1 + $0xb8] sm:$0xff]
  %v1517 = vld [vmem:[%s1 + $0xc0] sm:$0xff]
  %v1518 = vld [vmem:[%s1 + $0xc8] sm:$0xff]
  %v1519 = vld [vmem:[%s1 + $0xd0] sm:$0xff]
  %v1520 = vld [vmem:[%s1 + $0xd8] sm:$0xff]
  %v1521 = vld [vmem:[%s1 + $0xe0] sm:$0xff]
  %v1522 = vld [vmem:[%s1 + $0xe8] sm:$0xff]
  %v1523 = vld [vmem:[%s1 + $0xf0] sm:$0xff]
  %v1524 = vld [vmem:[%s1 + $0xf8] sm:$0xff]
  %v1525 = vld [vmem:[%s1 + $0x100] sm:$0xff]
  %v1526 = vld [vmem:[%s1 + $0x108] sm:$0xff]
  %v1527 = vld [vmem:[%s1 + $0x110] sm:$0xff]
  %v1528 = vld [vmem:[%s1 + $0x118] sm:$0xff]
  %v1529 = vld [vmem:[%s1 + $0x120] sm:$0xff]
  %v1530 = vld [vmem:[%s1 + $0x128] sm:$0xff]
  %v1531 = vld [vmem:[%s1 + $0x130] sm:$0xff]
  %v1532 = vld [vmem:[%s1 + $0x138] sm:$0xff]
  %v1533 = vld [vmem:[%s1 + $0x140] sm:$0xff]
  %v1534 = vld [vmem:[%s1 + $0x148] sm:$0xff]
  %v1535 = vld [vmem:[%s1 + $0x150] sm:$0xff]
  %v1536 = vld [vmem:[%s1 + $0x158] sm:$0xff]
  %v1537 = vld [vmem:[%s1 + $0x160] sm:$0xff]
  %v1538 = vld [vmem:[%s1 + $0x168] sm:$0xff]
  %v1539 = vld [vmem:[%s1 + $0x170] sm:$0xff]
  %v1540 = vld [vmem:[%s1 + $0x178] sm:$0xff]
  %v1541 = vld [vmem:[%s1 + $0x180] sm:$0xff]
  %v1542 = vld [vmem:[%s1 + $0x188] sm:$0xff]
  %v1543 = vld [vmem:[%s1 + $0x190] sm:$0xff]
  %v1544 = vld [vmem:[%s1 + $0x198] sm:$0xff]
  %v1545 = vld [vmem:[%s1 + $0x1a0] sm:$0xff]
  %v1546 = vld [vmem:[%s1 + $0x1a8] sm:$0xff]
  %v1547 = vld [vmem:[%s1 + $0x1b0] sm:$0xff]
  %v1548 = vld [vmem:[%s1 + $0x1b8] sm:$0xff]
  %v1549 = vld [vmem:[%s1 + $0x1c0] sm:$0xff]
  %v1550 = vld [vmem:[%s1 + $0x1c8] sm:$0xff]
  %v1551 = vld [vmem:[%s1 + $0x1d0] sm:$0xff]
  %v1552 = vld [vmem:[%s1 + $0x1d8] sm:$0xff]
  %v1553 = vld [vmem:[%s1 + $0x1e0] sm:$0xff]
  %v1554 = vld [vmem:[%s1 + $0x1e8] sm:$0xff]
  %v1555 = vld [vmem:[%s1 + $0x1f0] sm:$0xff]
  %v1556 = vld [vmem:[%s1 + $0x1f8] sm:$0xff]
  %1557 = vmatprep.subr.mxu0 %v1494
  %1558 = vmatpush1.msra.mxu0 %v1493
  %1559 = vmatprep.subr.mxu0 %v1498
  %1560 = vmatpush1.msra.mxu0 %v1497
  %1561 = vmatprep.subr.mxu0 %v1502
  %1562 = vmatpush1.msra.mxu0 %v1501
  %1563 = vmatprep.subr.mxu0 %v1506
  %1564 = vmatpush1.msra.mxu0 %v1505
  %1565 = vmatprep.subr.mxu0 %v1510
  %1566 = vmatpush1.msra.mxu0 %v1509
  %1567 = vmatprep.subr.mxu0 %v1514
  %1568 = vmatpush1.msra.mxu0 %v1513
  %1569 = vmatprep.subr.mxu0 %v1518
  %1570 = vmatpush1.msra.mxu0 %v1517
  %1571 = vmatprep.subr.mxu0 %v1522
  %1572 = vmatpush1.msra.mxu0 %v1521
  %1573 = vmatprep.subr.mxu0 %v1526
  %1574 = vmatpush1.msra.mxu0 %v1525
  %1575 = vmatprep.subr.mxu0 %v1530
  %1576 = vmatpush1.msra.mxu0 %v1529
  %1577 = vmatprep.subr.mxu0 %v1534
  %1578 = vmatpush1.msra.mxu0 %v1533
  %1579 = vmatprep.subr.mxu0 %v1538
  %1580 = vmatpush1.msra.mxu0 %v1537
  %1581 = vmatprep.subr.mxu0 %v1542
  %1582 = vmatpush1.msra.mxu0 %v1541
  %1583 = vmatprep.subr.mxu0 %v1546
  %1584 = vmatpush1.msra.mxu0 %v1545
  %1585 = vmatprep.subr.mxu0 %v1550
  %1586 = vmatpush1.msra.mxu0 %v1549
  %1587 = vmatprep.subr.mxu0 %v1554
  %1588 = vmatpush1.msra.mxu0 %v1553
  %1589 = vmatprep.subr.mxu0 0.0
  %1590 = vmatpush1.msra.mxu0 0.0
  %1591 = vmatprep.subr.mxu0 0.0
  %1592 = vmatpush1.msra.mxu0 0.0
  %1593 = vmatprep.subr.mxu0 0.0
  %1594 = vmatpush1.msra.mxu0 0.0
  %1595 = vmatprep.subr.mxu0 0.0
  %1596 = vmatpush1.msra.mxu0 0.0
  %1597 = vmatprep.subr.mxu0 0.0
  %1598 = vmatpush1.msra.mxu0 0.0
  %1599 = vmatprep.subr.mxu0 0.0
  %1600 = vmatpush1.msra.mxu0 0.0
  %1601 = vmatprep.subr.mxu0 0.0
  %1602 = vmatpush1.msra.mxu0 0.0
  %1603 = vmatprep.subr.mxu0 0.0
  %1604 = vmatpush1.msra.mxu0 0.0
  %1605 = vmatprep.subr.mxu0 0.0
  %1606 = vmatpush1.msra.mxu0 0.0
  %1607 = vmatprep.subr.mxu0 0.0
  %1608 = vmatpush1.msra.mxu0 0.0
  %1609 = vmatprep.subr.mxu0 0.0
  %1610 = vmatpush1.msra.mxu0 0.0
  %1611 = vmatprep.subr.mxu0 0.0
  %1612 = vmatpush1.msra.mxu0 0.0
  %1613 = vmatprep.subr.mxu0 0.0
  %1614 = vmatpush1.msra.mxu0 0.0
  %1615 = vmatprep.subr.mxu0 0.0
  %1616 = vmatpush1.msra.mxu0 0.0
  %1617 = vmatprep.subr.mxu0 0.0
  %1618 = vmatpush1.msra.mxu0 0.0
  %1619 = vmatprep.subr.mxu0 0.0
  %1620 = vmatpush1.msra.mxu0 0.0
  %1621 = vmatprep.mubr.f32.mxu0 0.0
  %1622 = vmatmul.mubr.f32.gmra.mrb[0].mxu0 %v1492
  %v1623 = vpop.f32.mrb[0].mxu0
  %v1624 = vadd.f32 0.0, %v1623
  %v1625 = vpop.f32.mrb[0].mxu0
  %v1626 = vadd.f32 0.0, %v1625
  %1627 = vdwg.mxu0
  %1628 = vmatprep.subr.mxu0 %v1496
  %1629 = vmatpush1.msra.mxu0 %v1495
  %1630 = vmatprep.subr.mxu0 %v1500
  %1631 = vmatpush1.msra.mxu0 %v1499
  %1632 = vmatprep.subr.mxu0 %v1504
  %1633 = vmatpush1.msra.mxu0 %v1503
  %1634 = vmatprep.subr.mxu0 %v1508
  %1635 = vmatpush1.msra.mxu0 %v1507
  %1636 = vmatprep.subr.mxu0 %v1512
  %1637 = vmatpush1.msra.mxu0 %v1511
  %1638 = vmatprep.subr.mxu0 %v1516
  %1639 = vmatpush1.msra.mxu0 %v1515
  %1640 = vmatprep.subr.mxu0 %v1520
  %1641 = vmatpush1.msra.mxu0 %v1519
  %1642 = vmatprep.subr.mxu0 %v1524
  %1643 = vmatpush1.msra.mxu0 %v1523
  %1644 = vmatprep.subr.mxu0 %v1528
  %1645 = vmatpush1.msra.mxu0 %v1527
  %1646 = vmatprep.subr.mxu0 %v1532
  %1647 = vmatpush1.msra.mxu0 %v1531
  %1648 = vmatprep.subr.mxu0 %v1536
  %1649 = vmatpush1.msra.mxu0 %v1535
  %1650 = vmatprep.subr.mxu0 %v1540
  %1651 = vmatpush1.msra.mxu0 %v1539
  %1652 = vmatprep.subr.mxu0 %v1544
  %1653 = vmatpush1.msra.mxu0 %v1543
  %1654 = vmatprep.subr.mxu0 %v1548
  %1655 = vmatpush1.msra.mxu0 %v1547
  %1656 = vmatprep.subr.mxu0 %v1552
  %1657 = vmatpush1.msra.mxu0 %v1551
  %1658 = vmatprep.subr.mxu0 %v1556
  %1659 = vmatpush1.msra.mxu0 %v1555
  %1660 = vmatprep.subr.mxu0 0.0
  %1661 = vmatpush1.msra.mxu0 0.0
  %1662 = vmatprep.subr.mxu0 0.0
  %1663 = vmatpush1.msra.mxu0 0.0
  %1664 = vmatprep.subr.mxu0 0.0
  %1665 = vmatpush1.msra.mxu0 0.0
  %1666 = vmatprep.subr.mxu0 0.0
  %1667 = vmatpush1.msra.mxu0 0.0
  %1668 = vmatprep.subr.mxu0 0.0
  %1669 = vmatpush1.msra.mxu0 0.0
  %1670 = vmatprep.subr.mxu0 0.0
  %1671 = vmatpush1.msra.mxu0 0.0
  %1672 = vmatprep.subr.mxu0 0.0
  %1673 = vmatpush1.msra.mxu0 0.0
  %1674 = vmatprep.subr.mxu0 0.0
  %1675 = vmatpush1.msra.mxu0 0.0
  %1676 = vmatprep.subr.mxu0 0.0
  %1677 = vmatpush1.msra.mxu0 0.0
  %1678 = vmatprep.subr.mxu0 0.0
  %1679 = vmatpush1.msra.mxu0 0.0
  %1680 = vmatprep.subr.mxu0 0.0
  %1681 = vmatpush1.msra.mxu0 0.0
  %1682 = vmatprep.subr.mxu0 0.0
  %1683 = vmatpush1.msra.mxu0 0.0
  %1684 = vmatprep.subr.mxu0 0.0
  %1685 = vmatpush1.msra.mxu0 0.0
  %1686 = vmatprep.subr.mxu0 0.0
  %1687 = vmatpush1.msra.mxu0 0.0
  %1688 = vmatprep.subr.mxu0 0.0
  %1689 = vmatpush1.msra.mxu0 0.0
  %1690 = vmatprep.subr.mxu0 0.0
  %1691 = vmatpush1.msra.mxu0 0.0
  %1692 = vmatprep.mubr.f32.mxu0 0.0
  %1693 = vmatmul.mubr.f32.gmra.mrb[0].mxu0 %v1492
  %v1694 = vpop.f32.mrb[0].mxu0
  %v1695 = vadd.f32 0.0, %v1694
  %v1696 = vpop.f32.mrb[0].mxu0
  %v1697 = vadd.f32 0.0, %v1696
  %1698 = vdwg.mxu0
  %v1699 = vadd.f32 %v1488, %v1624
  %v1700 = vadd.f32 %v1489, %v1626
  %v1701 = vadd.f32 %v1490, %v1695
  %v1702 = vadd.f32 %v1491, %v1697
  %v1703 = vxor.u32 %v1699, 2147483648
  %v1704 = vmul.f32 %v1703, 1.442695
  %v1705 = vpow.pop %v1704
  %v1706 = vadd.f32 %v1705, 1.0
  %v1707 = vrcp.pop %v1706
  %v1708 = vmul.f32 1.0, %v1707
  %v1709 = vxor.u32 %v1700, 2147483648
  %v1710 = vmul.f32 %v1709, 1.442695
  %v1711 = vpow.pop %v1710
  %v1712 = vadd.f32 %v1711, 1.0
  %v1713 = vrcp.pop %v1712
  %v1714 = vmul.f32 1.0, %v1713
  %v1715 = vtanh.pop %v1701
  %v1716 = vxor.u32 %v1702, 2147483648
  %v1717 = vmul.f32 %v1716, 1.442695
  %v1718 = vpow.pop %v1717
  %v1719 = vadd.f32 %v1718, 1.0
  %v1720 = vrcp.pop %v1719
  %v1721 = vmul.f32 1.0, %v1720
  %v1722 = vld [vmem:[#allocation3] sm:$0xff]
  %v1723 = vmul.f32 %v1714, %v1722
  %v1724 = vmul.f32 %v1708, %v1715
  %v1725 = vadd.f32 %v1723, %v1724
  %v1726 = vtanh.pop %v1725
  %v1727 = vmul.f32 %v1721, %v1726
  %1728 = vst [vmem:[#allocation3] sm:$0xff] %v1725
  %1729 = vst [vmem:[#allocation2] sm:$0xff] %v1727
  %s1730 = scalar_lea.vmem [#allocation4], 48
  %1731 = vst [vmem:[%s1730] sm:$0xff] %v1727
  %s1732 = scalar_lea.vmem %s0, 224
  %v1733 = vld [vmem:[%s1732] sm:$0xff]
  %v1734 = vld [vmem:[%s1732 + $0x8] sm:$0xff]
  %v1735 = vld [vmem:[%s1732 + $0x10] sm:$0xff]
  %v1736 = vld [vmem:[%s1732 + $0x18] sm:$0xff]
  %v1737 = vld [vmem:[#allocation2] sm:$0xff]
  %v1738 = vld [vmem:[%s1] sm:$0xff]
  %v1739 = vld [vmem:[%s1 + $0x8] sm:$0xff]
  %v1740 = vld [vmem:[%s1 + $0x10] sm:$0xff]
  %v1741 = vld [vmem:[%s1 + $0x18] sm:$0xff]
  %v1742 = vld [vmem:[%s1 + $0x20] sm:$0xff]
  %v1743 = vld [vmem:[%s1 + $0x28] sm:$0xff]
  %v1744 = vld [vmem:[%s1 + $0x30] sm:$0xff]
  %v1745 = vld [vmem:[%s1 + $0x38] sm:$0xff]
  %v1746 = vld [vmem:[%s1 + $0x40] sm:$0xff]
  %v1747 = vld [vmem:[%s1 + $0x48] sm:$0xff]
  %v1748 = vld [vmem:[%s1 + $0x50] sm:$0xff]
  %v1749 = vld [vmem:[%s1 + $0x58] sm:$0xff]
  %v1750 = vld [vmem:[%s1 + $0x60] sm:$0xff]
  %v1751 = vld [vmem:[%s1 + $0x68] sm:$0xff]
  %v1752 = vld [vmem:[%s1 + $0x70] sm:$0xff]
  %v1753 = vld [vmem:[%s1 + $0x78] sm:$0xff]
  %v1754 = vld [vmem:[%s1 + $0x80] sm:$0xff]
  %v1755 = vld [vmem:[%s1 + $0x88] sm:$0xff]
  %v1756 = vld [vmem:[%s1 + $0x90] sm:$0xff]
  %v1757 = vld [vmem:[%s1 + $0x98] sm:$0xff]
  %v1758 = vld [vmem:[%s1 + $0xa0] sm:$0xff]
  %v1759 = vld [vmem:[%s1 + $0xa8] sm:$0xff]
  %v1760 = vld [vmem:[%s1 + $0xb0] sm:$0xff]
  %v1761 = vld [vmem:[%s1 + $0xb8] sm:$0xff]
  %v1762 = vld [vmem:[%s1 + $0xc0] sm:$0xff]
  %v1763 = vld [vmem:[%s1 + $0xc8] sm:$0xff]
  %v1764 = vld [vmem:[%s1 + $0xd0] sm:$0xff]
  %v1765 = vld [vmem:[%s1 + $0xd8] sm:$0xff]
  %v1766 = vld [vmem:[%s1 + $0xe0] sm:$0xff]
  %v1767 = vld [vmem:[%s1 + $0xe8] sm:$0xff]
  %v1768 = vld [vmem:[%s1 + $0xf0] sm:$0xff]
  %v1769 = vld [vmem:[%s1 + $0xf8] sm:$0xff]
  %v1770 = vld [vmem:[%s1 + $0x100] sm:$0xff]
  %v1771 = vld [vmem:[%s1 + $0x108] sm:$0xff]
  %v1772 = vld [vmem:[%s1 + $0x110] sm:$0xff]
  %v1773 = vld [vmem:[%s1 + $0x118] sm:$0xff]
  %v1774 = vld [vmem:[%s1 + $0x120] sm:$0xff]
  %v1775 = vld [vmem:[%s1 + $0x128] sm:$0xff]
  %v1776 = vld [vmem:[%s1 + $0x130] sm:$0xff]
  %v1777 = vld [vmem:[%s1 + $0x138] sm:$0xff]
  %v1778 = vld [vmem:[%s1 + $0x140] sm:$0xff]
  %v1779 = vld [vmem:[%s1 + $0x148] sm:$0xff]
  %v1780 = vld [vmem:[%s1 + $0x150] sm:$0xff]
  %v1781 = vld [vmem:[%s1 + $0x158] sm:$0xff]
  %v1782 = vld [vmem:[%s1 + $0x160] sm:$0xff]
  %v1783 = vld [vmem:[%s1 + $0x168] sm:$0xff]
  %v1784 = vld [vmem:[%s1 + $0x170] sm:$0xff]
  %v1785 = vld [vmem:[%s1 + $0x178] sm:$0xff]
  %v1786 = vld [vmem:[%s1 + $0x180] sm:$0xff]
  %v1787 = vld [vmem:[%s1 + $0x188] sm:$0xff]
  %v1788 = vld [vmem:[%s1 + $0x190] sm:$0xff]
  %v1789 = vld [vmem:[%s1 + $0x198] sm:$0xff]
  %v1790 = vld [vmem:[%s1 + $0x1a0] sm:$0xff]
  %v1791 = vld [vmem:[%s1 + $0x1a8] sm:$0xff]
  %v1792 = vld [vmem:[%s1 + $0x1b0] sm:$0xff]
  %v1793 = vld [vmem:[%s1 + $0x1b8] sm:$0xff]
  %v1794 = vld [vmem:[%s1 + $0x1c0] sm:$0xff]
  %v1795 = vld [vmem:[%s1 + $0x1c8] sm:$0xff]
  %v1796 = vld [vmem:[%s1 + $0x1d0] sm:$0xff]
  %v1797 = vld [vmem:[%s1 + $0x1d8] sm:$0xff]
  %v1798 = vld [vmem:[%s1 + $0x1e0] sm:$0xff]
  %v1799 = vld [vmem:[%s1 + $0x1e8] sm:$0xff]
  %v1800 = vld [vmem:[%s1 + $0x1f0] sm:$0xff]
  %v1801 = vld [vmem:[%s1 + $0x1f8] sm:$0xff]
  %1802 = vmatprep.subr.mxu0 %v1739
  %1803 = vmatpush1.msra.mxu0 %v1738
  %1804 = vmatprep.subr.mxu0 %v1743
  %1805 = vmatpush1.msra.mxu0 %v1742
  %1806 = vmatprep.subr.mxu0 %v1747
  %1807 = vmatpush1.msra.mxu0 %v1746
  %1808 = vmatprep.subr.mxu0 %v1751
  %1809 = vmatpush1.msra.mxu0 %v1750
  %1810 = vmatprep.subr.mxu0 %v1755
  %1811 = vmatpush1.msra.mxu0 %v1754
  %1812 = vmatprep.subr.mxu0 %v1759
  %1813 = vmatpush1.msra.mxu0 %v1758
  %1814 = vmatprep.subr.mxu0 %v1763
  %1815 = vmatpush1.msra.mxu0 %v1762
  %1816 = vmatprep.subr.mxu0 %v1767
  %1817 = vmatpush1.msra.mxu0 %v1766
  %1818 = vmatprep.subr.mxu0 %v1771
  %1819 = vmatpush1.msra.mxu0 %v1770
  %1820 = vmatprep.subr.mxu0 %v1775
  %1821 = vmatpush1.msra.mxu0 %v1774
  %1822 = vmatprep.subr.mxu0 %v1779
  %1823 = vmatpush1.msra.mxu0 %v1778
  %1824 = vmatprep.subr.mxu0 %v1783
  %1825 = vmatpush1.msra.mxu0 %v1782
  %1826 = vmatprep.subr.mxu0 %v1787
  %1827 = vmatpush1.msra.mxu0 %v1786
  %1828 = vmatprep.subr.mxu0 %v1791
  %1829 = vmatpush1.msra.mxu0 %v1790
  %1830 = vmatprep.subr.mxu0 %v1795
  %1831 = vmatpush1.msra.mxu0 %v1794
  %1832 = vmatprep.subr.mxu0 %v1799
  %1833 = vmatpush1.msra.mxu0 %v1798
  %1834 = vmatprep.subr.mxu0 0.0
  %1835 = vmatpush1.msra.mxu0 0.0
  %1836 = vmatprep.subr.mxu0 0.0
  %1837 = vmatpush1.msra.mxu0 0.0
  %1838 = vmatprep.subr.mxu0 0.0
  %1839 = vmatpush1.msra.mxu0 0.0
  %1840 = vmatprep.subr.mxu0 0.0
  %1841 = vmatpush1.msra.mxu0 0.0
  %1842 = vmatprep.subr.mxu0 0.0
  %1843 = vmatpush1.msra.mxu0 0.0
  %1844 = vmatprep.subr.mxu0 0.0
  %1845 = vmatpush1.msra.mxu0 0.0
  %1846 = vmatprep.subr.mxu0 0.0
  %1847 = vmatpush1.msra.mxu0 0.0
  %1848 = vmatprep.subr.mxu0 0.0
  %1849 = vmatpush1.msra.mxu0 0.0
  %1850 = vmatprep.subr.mxu0 0.0
  %1851 = vmatpush1.msra.mxu0 0.0
  %1852 = vmatprep.subr.mxu0 0.0
  %1853 = vmatpush1.msra.mxu0 0.0
  %1854 = vmatprep.subr.mxu0 0.0
  %1855 = vmatpush1.msra.mxu0 0.0
  %1856 = vmatprep.subr.mxu0 0.0
  %1857 = vmatpush1.msra.mxu0 0.0
  %1858 = vmatprep.subr.mxu0 0.0
  %1859 = vmatpush1.msra.mxu0 0.0
  %1860 = vmatprep.subr.mxu0 0.0
  %1861 = vmatpush1.msra.mxu0 0.0
  %1862 = vmatprep.subr.mxu0 0.0
  %1863 = vmatpush1.msra.mxu0 0.0
  %1864 = vmatprep.subr.mxu0 0.0
  %1865 = vmatpush1.msra.mxu0 0.0
  %1866 = vmatprep.mubr.f32.mxu0 0.0
  %1867 = vmatmul.mubr.f32.gmra.mrb[0].mxu0 %v1737
  %v1868 = vpop.f32.mrb[0].mxu0
  %v1869 = vadd.f32 0.0, %v1868
  %v1870 = vpop.f32.mrb[0].mxu0
  %v1871 = vadd.f32 0.0, %v1870
  %1872 = vdwg.mxu0
  %1873 = vmatprep.subr.mxu0 %v1741
  %1874 = vmatpush1.msra.mxu0 %v1740
  %1875 = vmatprep.subr.mxu0 %v1745
  %1876 = vmatpush1.msra.mxu0 %v1744
  %1877 = vmatprep.subr.mxu0 %v1749
  %1878 = vmatpush1.msra.mxu0 %v1748
  %1879 = vmatprep.subr.mxu0 %v1753
  %1880 = vmatpush1.msra.mxu0 %v1752
  %1881 = vmatprep.subr.mxu0 %v1757
  %1882 = vmatpush1.msra.mxu0 %v1756
  %1883 = vmatprep.subr.mxu0 %v1761
  %1884 = vmatpush1.msra.mxu0 %v1760
  %1885 = vmatprep.subr.mxu0 %v1765
  %1886 = vmatpush1.msra.mxu0 %v1764
  %1887 = vmatprep.subr.mxu0 %v1769
  %1888 = vmatpush1.msra.mxu0 %v1768
  %1889 = vmatprep.subr.mxu0 %v1773
  %1890 = vmatpush1.msra.mxu0 %v1772
  %1891 = vmatprep.subr.mxu0 %v1777
  %1892 = vmatpush1.msra.mxu0 %v1776
  %1893 = vmatprep.subr.mxu0 %v1781
  %1894 = vmatpush1.msra.mxu0 %v1780
  %1895 = vmatprep.subr.mxu0 %v1785
  %1896 = vmatpush1.msra.mxu0 %v1784
  %1897 = vmatprep.subr.mxu0 %v1789
  %1898 = vmatpush1.msra.mxu0 %v1788
  %1899 = vmatprep.subr.mxu0 %v1793
  %1900 = vmatpush1.msra.mxu0 %v1792
  %1901 = vmatprep.subr.mxu0 %v1797
  %1902 = vmatpush1.msra.mxu0 %v1796
  %1903 = vmatprep.subr.mxu0 %v1801
  %1904 = vmatpush1.msra.mxu0 %v1800
  %1905 = vmatprep.subr.mxu0 0.0
  %1906 = vmatpush1.msra.mxu0 0.0
  %1907 = vmatprep.subr.mxu0 0.0
  %1908 = vmatpush1.msra.mxu0 0.0
  %1909 = vmatprep.subr.mxu0 0.0
  %1910 = vmatpush1.msra.mxu0 0.0
  %1911 = vmatprep.subr.mxu0 0.0
  %1912 = vmatpush1.msra.mxu0 0.0
  %1913 = vmatprep.subr.mxu0 0.0
  %1914 = vmatpush1.msra.mxu0 0.0
  %1915 = vmatprep.subr.mxu0 0.0
  %1916 = vmatpush1.msra.mxu0 0.0
  %1917 = vmatprep.subr.mxu0 0.0
  %1918 = vmatpush1.msra.mxu0 0.0
  %1919 = vmatprep.subr.mxu0 0.0
  %1920 = vmatpush1.msra.mxu0 0.0
  %1921 = vmatprep.subr.mxu0 0.0
  %1922 = vmatpush1.msra.mxu0 0.0
  %1923 = vmatprep.subr.mxu0 0.0
  %1924 = vmatpush1.msra.mxu0 0.0
  %1925 = vmatprep.subr.mxu0 0.0
  %1926 = vmatpush1.msra.mxu0 0.0
  %1927 = vmatprep.subr.mxu0 0.0
  %1928 = vmatpush1.msra.mxu0 0.0
  %1929 = vmatprep.subr.mxu0 0.0
  %1930 = vmatpush1.msra.mxu0 0.0
  %1931 = vmatprep.subr.mxu0 0.0
  %1932 = vmatpush1.msra.mxu0 0.0
  %1933 = vmatprep.subr.mxu0 0.0
  %1934 = vmatpush1.msra.mxu0 0.0
  %1935 = vmatprep.subr.mxu0 0.0
  %1936 = vmatpush1.msra.mxu0 0.0
  %1937 = vmatprep.mubr.f32.mxu0 0.0
  %1938 = vmatmul.mubr.f32.gmra.mrb[0].mxu0 %v1737
  %v1939 = vpop.f32.mrb[0].mxu0
  %v1940 = vadd.f32 0.0, %v1939
  %v1941 = vpop.f32.mrb[0].mxu0
  %v1942 = vadd.f32 0.0, %v1941
  %1943 = vdwg.mxu0
  %v1944 = vadd.f32 %v1733, %v1869
  %v1945 = vadd.f32 %v1734, %v1871
  %v1946 = vadd.f32 %v1735, %v1940
  %v1947 = vadd.f32 %v1736, %v1942
  %v1948 = vxor.u32 %v1944, 2147483648
  %v1949 = vmul.f32 %v1948, 1.442695
  %v1950 = vpow.pop %v1949
  %v1951 = vadd.f32 %v1950, 1.0
  %v1952 = vrcp.pop %v1951
  %v1953 = vmul.f32 1.0, %v1952
  %v1954 = vxor.u32 %v1945, 2147483648
  %v1955 = vmul.f32 %v1954, 1.442695
  %v1956 = vpow.pop %v1955
  %v1957 = vadd.f32 %v1956, 1.0
  %v1958 = vrcp.pop %v1957
  %v1959 = vmul.f32 1.0, %v1958
  %v1960 = vtanh.pop %v1946
  %v1961 = vxor.u32 %v1947, 2147483648
  %v1962 = vmul.f32 %v1961, 1.442695
  %v1963 = vpow.pop %v1962
  %v1964 = vadd.f32 %v1963, 1.0
  %v1965 = vrcp.pop %v1964
  %v1966 = vmul.f32 1.0, %v1965
  %v1967 = vld [vmem:[#allocation3] sm:$0xff]
  %v1968 = vmul.f32 %v1959, %v1967
  %v1969 = vmul.f32 %v1953, %v1960
  %v1970 = vadd.f32 %v1968, %v1969
  %v1971 = vtanh.pop %v1970
  %v1972 = vmul.f32 %v1966, %v1971
  %1973 = vst [vmem:[#allocation3] sm:$0xff] %v1970
  %1974 = vst [vmem:[#allocation2] sm:$0xff] %v1972
  %s1975 = scalar_lea.vmem [#allocation4], 56
  %1976 = vst [vmem:[%s1975] sm:$0xff] %v1972
  %s1977 = scalar_lea.vmem %s0, 256
  %v1978 = vld [vmem:[%s1977] sm:$0xff]
  %v1979 = vld [vmem:[%s1977 + $0x8] sm:$0xff]
  %v1980 = vld [vmem:[%s1977 + $0x10] sm:$0xff]
  %v1981 = vld [vmem:[%s1977 + $0x18] sm:$0xff]
  %v1982 = vld [vmem:[#allocation2] sm:$0xff]
  %v1983 = vld [vmem:[%s1] sm:$0xff]
  %v1984 = vld [vmem:[%s1 + $0x8] sm:$0xff]
  %v1985 = vld [vmem:[%s1 + $0x10] sm:$0xff]
  %v1986 = vld [vmem:[%s1 + $0x18] sm:$0xff]
  %v1987 = vld [vmem:[%s1 + $0x20] sm:$0xff]
  %v1988 = vld [vmem:[%s1 + $0x28] sm:$0xff]
  %v1989 = vld [vmem:[%s1 + $0x30] sm:$0xff]
  %v1990 = vld [vmem:[%s1 + $0x38] sm:$0xff]
  %v1991 = vld [vmem:[%s1 + $0x40] sm:$0xff]
  %v1992 = vld [vmem:[%s1 + $0x48] sm:$0xff]
  %v1993 = vld [vmem:[%s1 + $0x50] sm:$0xff]
  %v1994 = vld [vmem:[%s1 + $0x58] sm:$0xff]
  %v1995 = vld [vmem:[%s1 + $0x60] sm:$0xff]
  %v1996 = vld [vmem:[%s1 + $0x68] sm:$0xff]
  %v1997 = vld [vmem:[%s1 + $0x70] sm:$0xff]
  %v1998 = vld [vmem:[%s1 + $0x78] sm:$0xff]
  %v1999 = vld [vmem:[%s1 + $0x80] sm:$0xff]
  %v2000 = vld [vmem:[%s1 + $0x88] sm:$0xff]
  %v2001 = vld [vmem:[%s1 + $0x90] sm:$0xff]
  %v2002 = vld [vmem:[%s1 + $0x98] sm:$0xff]
  %v2003 = vld [vmem:[%s1 + $0xa0] sm:$0xff]
  %v2004 = vld [vmem:[%s1 + $0xa8] sm:$0xff]
  %v2005 = vld [vmem:[%s1 + $0xb0] sm:$0xff]
  %v2006 = vld [vmem:[%s1 + $0xb8] sm:$0xff]
  %v2007 = vld [vmem:[%s1 + $0xc0] sm:$0xff]
  %v2008 = vld [vmem:[%s1 + $0xc8] sm:$0xff]
  %v2009 = vld [vmem:[%s1 + $0xd0] sm:$0xff]
  %v2010 = vld [vmem:[%s1 + $0xd8] sm:$0xff]
  %v2011 = vld [vmem:[%s1 + $0xe0] sm:$0xff]
  %v2012 = vld [vmem:[%s1 + $0xe8] sm:$0xff]
  %v2013 = vld [vmem:[%s1 + $0xf0] sm:$0xff]
  %v2014 = vld [vmem:[%s1 + $0xf8] sm:$0xff]
  %v2015 = vld [vmem:[%s1 + $0x100] sm:$0xff]
  %v2016 = vld [vmem:[%s1 + $0x108] sm:$0xff]
  %v2017 = vld [vmem:[%s1 + $0x110] sm:$0xff]
  %v2018 = vld [vmem:[%s1 + $0x118] sm:$0xff]
  %v2019 = vld [vmem:[%s1 + $0x120] sm:$0xff]
  %v2020 = vld [vmem:[%s1 + $0x128] sm:$0xff]
  %v2021 = vld [vmem:[%s1 + $0x130] sm:$0xff]
  %v2022 = vld [vmem:[%s1 + $0x138] sm:$0xff]
  %v2023 = vld [vmem:[%s1 + $0x140] sm:$0xff]
  %v2024 = vld [vmem:[%s1 + $0x148] sm:$0xff]
  %v2025 = vld [vmem:[%s1 + $0x150] sm:$0xff]
  %v2026 = vld [vmem:[%s1 + $0x158] sm:$0xff]
  %v2027 = vld [vmem:[%s1 + $0x160] sm:$0xff]
  %v2028 = vld [vmem:[%s1 + $0x168] sm:$0xff]
  %v2029 = vld [vmem:[%s1 + $0x170] sm:$0xff]
  %v2030 = vld [vmem:[%s1 + $0x178] sm:$0xff]
  %v2031 = vld [vmem:[%s1 + $0x180] sm:$0xff]
  %v2032 = vld [vmem:[%s1 + $0x188] sm:$0xff]
  %v2033 = vld [vmem:[%s1 + $0x190] sm:$0xff]
  %v2034 = vld [vmem:[%s1 + $0x198] sm:$0xff]
  %v2035 = vld [vmem:[%s1 + $0x1a0] sm:$0xff]
  %v2036 = vld [vmem:[%s1 + $0x1a8] sm:$0xff]
  %v2037 = vld [vmem:[%s1 + $0x1b0] sm:$0xff]
  %v2038 = vld [vmem:[%s1 + $0x1b8] sm:$0xff]
  %v2039 = vld [vmem:[%s1 + $0x1c0] sm:$0xff]
  %v2040 = vld [vmem:[%s1 + $0x1c8] sm:$0xff]
  %v2041 = vld [vmem:[%s1 + $0x1d0] sm:$0xff]
  %v2042 = vld [vmem:[%s1 + $0x1d8] sm:$0xff]
  %v2043 = vld [vmem:[%s1 + $0x1e0] sm:$0xff]
  %v2044 = vld [vmem:[%s1 + $0x1e8] sm:$0xff]
  %v2045 = vld [vmem:[%s1 + $0x1f0] sm:$0xff]
  %v2046 = vld [vmem:[%s1 + $0x1f8] sm:$0xff]
  %2047 = vmatprep.subr.mxu0 %v1984
  %2048 = vmatpush1.msra.mxu0 %v1983
  %2049 = vmatprep.subr.mxu0 %v1988
  %2050 = vmatpush1.msra.mxu0 %v1987
  %2051 = vmatprep.subr.mxu0 %v1992
  %2052 = vmatpush1.msra.mxu0 %v1991
  %2053 = vmatprep.subr.mxu0 %v1996
  %2054 = vmatpush1.msra.mxu0 %v1995
  %2055 = vmatprep.subr.mxu0 %v2000
  %2056 = vmatpush1.msra.mxu0 %v1999
  %2057 = vmatprep.subr.mxu0 %v2004
  %2058 = vmatpush1.msra.mxu0 %v2003
  %2059 = vmatprep.subr.mxu0 %v2008
  %2060 = vmatpush1.msra.mxu0 %v2007
  %2061 = vmatprep.subr.mxu0 %v2012
  %2062 = vmatpush1.msra.mxu0 %v2011
  %2063 = vmatprep.subr.mxu0 %v2016
  %2064 = vmatpush1.msra.mxu0 %v2015
  %2065 = vmatprep.subr.mxu0 %v2020
  %2066 = vmatpush1.msra.mxu0 %v2019
  %2067 = vmatprep.subr.mxu0 %v2024
  %2068 = vmatpush1.msra.mxu0 %v2023
  %2069 = vmatprep.subr.mxu0 %v2028
  %2070 = vmatpush1.msra.mxu0 %v2027
  %2071 = vmatprep.subr.mxu0 %v2032
  %2072 = vmatpush1.msra.mxu0 %v2031
  %2073 = vmatprep.subr.mxu0 %v2036
  %2074 = vmatpush1.msra.mxu0 %v2035
  %2075 = vmatprep.subr.mxu0 %v2040
  %2076 = vmatpush1.msra.mxu0 %v2039
  %2077 = vmatprep.subr.mxu0 %v2044
  %2078 = vmatpush1.msra.mxu0 %v2043
  %2079 = vmatprep.subr.mxu0 0.0
  %2080 = vmatpush1.msra.mxu0 0.0
  %2081 = vmatprep.subr.mxu0 0.0
  %2082 = vmatpush1.msra.mxu0 0.0
  %2083 = vmatprep.subr.mxu0 0.0
  %2084 = vmatpush1.msra.mxu0 0.0
  %2085 = vmatprep.subr.mxu0 0.0
  %2086 = vmatpush1.msra.mxu0 0.0
  %2087 = vmatprep.subr.mxu0 0.0
  %2088 = vmatpush1.msra.mxu0 0.0
  %2089 = vmatprep.subr.mxu0 0.0
  %2090 = vmatpush1.msra.mxu0 0.0
  %2091 = vmatprep.subr.mxu0 0.0
  %2092 = vmatpush1.msra.mxu0 0.0
  %2093 = vmatprep.subr.mxu0 0.0
  %2094 = vmatpush1.msra.mxu0 0.0
  %2095 = vmatprep.subr.mxu0 0.0
  %2096 = vmatpush1.msra.mxu0 0.0
  %2097 = vmatprep.subr.mxu0 0.0
  %2098 = vmatpush1.msra.mxu0 0.0
  %2099 = vmatprep.subr.mxu0 0.0
  %2100 = vmatpush1.msra.mxu0 0.0
  %2101 = vmatprep.subr.mxu0 0.0
  %2102 = vmatpush1.msra.mxu0 0.0
  %2103 = vmatprep.subr.mxu0 0.0
  %2104 = vmatpush1.msra.mxu0 0.0
  %2105 = vmatprep.subr.mxu0 0.0
  %2106 = vmatpush1.msra.mxu0 0.0
  %2107 = vmatprep.subr.mxu0 0.0
  %2108 = vmatpush1.msra.mxu0 0.0
  %2109 = vmatprep.subr.mxu0 0.0
  %2110 = vmatpush1.msra.mxu0 0.0
  %2111 = vmatprep.mubr.f32.mxu0 0.0
  %2112 = vmatmul.mubr.f32.gmra.mrb[0].mxu0 %v1982
  %v2113 = vpop.f32.mrb[0].mxu0
  %v2114 = vadd.f32 0.0, %v2113
  %v2115 = vpop.f32.mrb[0].mxu0
  %v2116 = vadd.f32 0.0, %v2115
  %2117 = vdwg.mxu0
  %2118 = vmatprep.subr.mxu0 %v1986
  %2119 = vmatpush1.msra.mxu0 %v1985
  %2120 = vmatprep.subr.mxu0 %v1990
  %2121 = vmatpush1.msra.mxu0 %v1989
  %2122 = vmatprep.subr.mxu0 %v1994
  %2123 = vmatpush1.msra.mxu0 %v1993
  %2124 = vmatprep.subr.mxu0 %v1998
  %2125 = vmatpush1.msra.mxu0 %v1997
  %2126 = vmatprep.subr.mxu0 %v2002
  %2127 = vmatpush1.msra.mxu0 %v2001
  %2128 = vmatprep.subr.mxu0 %v2006
  %2129 = vmatpush1.msra.mxu0 %v2005
  %2130 = vmatprep.subr.mxu0 %v2010
  %2131 = vmatpush1.msra.mxu0 %v2009
  %2132 = vmatprep.subr.mxu0 %v2014
  %2133 = vmatpush1.msra.mxu0 %v2013
  %2134 = vmatprep.subr.mxu0 %v2018
  %2135 = vmatpush1.msra.mxu0 %v2017
  %2136 = vmatprep.subr.mxu0 %v2022
  %2137 = vmatpush1.msra.mxu0 %v2021
  %2138 = vmatprep.subr.mxu0 %v2026
  %2139 = vmatpush1.msra.mxu0 %v2025
  %2140 = vmatprep.subr.mxu0 %v2030
  %2141 = vmatpush1.msra.mxu0 %v2029
  %2142 = vmatprep.subr.mxu0 %v2034
  %2143 = vmatpush1.msra.mxu0 %v2033
  %2144 = vmatprep.subr.mxu0 %v2038
  %2145 = vmatpush1.msra.mxu0 %v2037
  %2146 = vmatprep.subr.mxu0 %v2042
  %2147 = vmatpush1.msra.mxu0 %v2041
  %2148 = vmatprep.subr.mxu0 %v2046
  %2149 = vmatpush1.msra.mxu0 %v2045
  %2150 = vmatprep.subr.mxu0 0.0
  %2151 = vmatpush1.msra.mxu0 0.0
  %2152 = vmatprep.subr.mxu0 0.0
  %2153 = vmatpush1.msra.mxu0 0.0
  %2154 = vmatprep.subr.mxu0 0.0
  %2155 = vmatpush1.msra.mxu0 0.0
  %2156 = vmatprep.subr.mxu0 0.0
  %2157 = vmatpush1.msra.mxu0 0.0
  %2158 = vmatprep.subr.mxu0 0.0
  %2159 = vmatpush1.msra.mxu0 0.0
  %2160 = vmatprep.subr.mxu0 0.0
  %2161 = vmatpush1.msra.mxu0 0.0
  %2162 = vmatprep.subr.mxu0 0.0
  %2163 = vmatpush1.msra.mxu0 0.0
  %2164 = vmatprep.subr.mxu0 0.0
  %2165 = vmatpush1.msra.mxu0 0.0
  %2166 = vmatprep.subr.mxu0 0.0
  %2167 = vmatpush1.msra.mxu0 0.0
  %2168 = vmatprep.subr.mxu0 0.0
  %2169 = vmatpush1.msra.mxu0 0.0
  %2170 = vmatprep.subr.mxu0 0.0
  %2171 = vmatpush1.msra.mxu0 0.0
  %2172 = vmatprep.subr.mxu0 0.0
  %2173 = vmatpush1.msra.mxu0 0.0
  %2174 = vmatprep.subr.mxu0 0.0
  %2175 = vmatpush1.msra.mxu0 0.0
  %2176 = vmatprep.subr.mxu0 0.0
  %2177 = vmatpush1.msra.mxu0 0.0
  %2178 = vmatprep.subr.mxu0 0.0
  %2179 = vmatpush1.msra.mxu0 0.0
  %2180 = vmatprep.subr.mxu0 0.0
  %2181 = vmatpush1.msra.mxu0 0.0
  %2182 = vmatprep.mubr.f32.mxu0 0.0
  %2183 = vmatmul.mubr.f32.gmra.mrb[0].mxu0 %v1982
  %v2184 = vpop.f32.mrb[0].mxu0
  %v2185 = vadd.f32 0.0, %v2184
  %v2186 = vpop.f32.mrb[0].mxu0
  %v2187 = vadd.f32 0.0, %v2186
  %2188 = vdwg.mxu0
  %v2189 = vadd.f32 %v1978, %v2114
  %v2190 = vadd.f32 %v1979, %v2116
  %v2191 = vadd.f32 %v1980, %v2185
  %v2192 = vadd.f32 %v1981, %v2187
  %v2193 = vxor.u32 %v2189, 2147483648
  %v2194 = vmul.f32 %v2193, 1.442695
  %v2195 = vpow.pop %v2194
  %v2196 = vadd.f32 %v2195, 1.0
  %v2197 = vrcp.pop %v2196
  %v2198 = vmul.f32 1.0, %v2197
  %v2199 = vxor.u32 %v2190, 2147483648
  %v2200 = vmul.f32 %v2199, 1.442695
  %v2201 = vpow.pop %v2200
  %v2202 = vadd.f32 %v2201, 1.0
  %v2203 = vrcp.pop %v2202
  %v2204 = vmul.f32 1.0, %v2203
  %v2205 = vtanh.pop %v2191
  %v2206 = vxor.u32 %v2192, 2147483648
  %v2207 = vmul.f32 %v2206, 1.442695
  %v2208 = vpow.pop %v2207
  %v2209 = vadd.f32 %v2208, 1.0
  %v2210 = vrcp.pop %v2209
  %v2211 = vmul.f32 1.0, %v2210
  %v2212 = vld [vmem:[#allocation3] sm:$0xff]
  %v2213 = vmul.f32 %v2204, %v2212
  %v2214 = vmul.f32 %v2198, %v2205
  %v2215 = vadd.f32 %v2213, %v2214
  %v2216 = vtanh.pop %v2215
  %v2217 = vmul.f32 %v2211, %v2216
  %2218 = vst [vmem:[#allocation3] sm:$0xff] %v2215
  %2219 = vst [vmem:[#allocation2] sm:$0xff] %v2217
  %s2220 = scalar_lea.vmem [#allocation4], 64
  %2221 = vst [vmem:[%s2220] sm:$0xff] %v2217
  %v2222 = vld [vmem:[#allocation4] sm:$0xff]
  %v2223 = vld [vmem:[#allocation4 + $0x8] sm:$0xff]
  %v2224 = vld [vmem:[#allocation4 + $0x10] sm:$0xff]
  %v2225 = vld [vmem:[#allocation4 + $0x18] sm:$0xff]
  %v2226 = vld [vmem:[#allocation4 + $0x20] sm:$0xff]
  %v2227 = vld [vmem:[#allocation4 + $0x28] sm:$0xff]
  %v2228 = vld [vmem:[#allocation4 + $0x30] sm:$0xff]
  %v2229 = vld [vmem:[#allocation4 + $0x38] sm:$0xff]
  %v2230 = vld [vmem:[#allocation4 + $0x40] sm:$0xff]
  %v2231 = vld [vmem:[%s2] sm:$0xff]
  %v2232 = vld [vmem:[%s2 + $0x8] sm:$0xff]
  %v2233 = vld [vmem:[%s2 + $0x10] sm:$0xff]
  %v2234 = vld [vmem:[%s2 + $0x18] sm:$0xff]
  %v2235 = vld [vmem:[%s2 + $0x20] sm:$0xff]
  %v2236 = vld [vmem:[%s2 + $0x28] sm:$0xff]
  %v2237 = vld [vmem:[%s2 + $0x30] sm:$0xff]
  %v2238 = vld [vmem:[%s2 + $0x38] sm:$0xff]
  %v2239 = vld [vmem:[%s2 + $0x40] sm:$0xff]
  %v2240 = vld [vmem:[%s2 + $0x48] sm:$0xff]
  %v2241 = vld [vmem:[%s2 + $0x50] sm:$0xff]
  %v2242 = vld [vmem:[%s2 + $0x58] sm:$0xff]
  %v2243 = vld [vmem:[%s2 + $0x60] sm:$0xff]
  %v2244 = vld [vmem:[%s2 + $0x68] sm:$0xff]
  %v2245 = vld [vmem:[%s2 + $0x70] sm:$0xff]
  %v2246 = vld [vmem:[%s2 + $0x78] sm:$0xff]
  %v2247 = vld [vmem:[%s3] sm:$0x1]
  %v2249 = vlaneseq
  %v2250 = vshrl.u32 %v2249, 7
  %v2251 = vsub.s32 0, %v2250
  %v2252 = vrot.slane %v2247, %v2251
  %2254 = vmatprep.subr.mxu0 0.0
  %2255 = vmatpush1.msra.mxu0 %v2231
  %2256 = vmatprep.subr.mxu0 0.0
  %2257 = vmatpush1.msra.mxu0 %v2232
  %2258 = vmatprep.subr.mxu0 0.0
  %2259 = vmatpush1.msra.mxu0 %v2233
  %2260 = vmatprep.subr.mxu0 0.0
  %2261 = vmatpush1.msra.mxu0 %v2234
  %2262 = vmatprep.subr.mxu0 0.0
  %2263 = vmatpush1.msra.mxu0 %v2235
  %2264 = vmatprep.subr.mxu0 0.0
  %2265 = vmatpush1.msra.mxu0 %v2236
  %2266 = vmatprep.subr.mxu0 0.0
  %2267 = vmatpush1.msra.mxu0 %v2237
  %2268 = vmatprep.subr.mxu0 0.0
  %2269 = vmatpush1.msra.mxu0 %v2238
  %2270 = vmatprep.subr.mxu0 0.0
  %2271 = vmatpush1.msra.mxu0 %v2239
  %2272 = vmatprep.subr.mxu0 0.0
  %2273 = vmatpush1.msra.mxu0 %v2240
  %2274 = vmatprep.subr.mxu0 0.0
  %2275 = vmatpush1.msra.mxu0 %v2241
  %2276 = vmatprep.subr.mxu0 0.0
  %2277 = vmatpush1.msra.mxu0 %v2242
  %2278 = vmatprep.subr.mxu0 0.0
  %2279 = vmatpush1.msra.mxu0 %v2243
  %2280 = vmatprep.subr.mxu0 0.0
  %2281 = vmatpush1.msra.mxu0 %v2244
  %2282 = vmatprep.subr.mxu0 0.0
  %2283 = vmatpush1.msra.mxu0 %v2245
  %2284 = vmatprep.subr.mxu0 0.0
  %2285 = vmatpush1.msra.mxu0 %v2246
  %2286 = vmatprep.subr.mxu0 0.0
  %2287 = vmatpush1.msra.mxu0 0.0
  %2288 = vmatprep.subr.mxu0 0.0
  %2289 = vmatpush1.msra.mxu0 0.0
  %2290 = vmatprep.subr.mxu0 0.0
  %2291 = vmatpush1.msra.mxu0 0.0
  %2292 = vmatprep.subr.mxu0 0.0
  %2293 = vmatpush1.msra.mxu0 0.0
  %2294 = vmatprep.subr.mxu0 0.0
  %2295 = vmatpush1.msra.mxu0 0.0
  %2296 = vmatprep.subr.mxu0 0.0
  %2297 = vmatpush1.msra.mxu0 0.0
  %2298 = vmatprep.subr.mxu0 0.0
  %2299 = vmatpush1.msra.mxu0 0.0
  %2300 = vmatprep.subr.mxu0 0.0
  %2301 = vmatpush1.msra.mxu0 0.0
  %2302 = vmatprep.subr.mxu0 0.0
  %2303 = vmatpush1.msra.mxu0 0.0
  %2304 = vmatprep.subr.mxu0 0.0
  %2305 = vmatpush1.msra.mxu0 0.0
  %2306 = vmatprep.subr.mxu0 0.0
  %2307 = vmatpush1.msra.mxu0 0.0
  %2308 = vmatprep.subr.mxu0 0.0
  %2309 = vmatpush1.msra.mxu0 0.0
  %2310 = vmatprep.subr.mxu0 0.0
  %2311 = vmatpush1.msra.mxu0 0.0
  %2312 = vmatprep.subr.mxu0 0.0
  %2313 = vmatpush1.msra.mxu0 0.0
  %2314 = vmatprep.subr.mxu0 0.0
  %2315 = vmatpush1.msra.mxu0 0.0
  %2316 = vmatprep.subr.mxu0 0.0
  %2317 = vmatpush1.msra.mxu0 0.0
  %2318 = vmatprep.mubr.f32.mxu0 0.0
  %2319 = vmatmul.mubr.f32.gmra.mrb[0].mxu0 %v2222
  %v2320 = vpop.f32.mrb[0].mxu0
  %v2321 = vadd.f32 %v2252, %v2320
  %v2322 = vpop.f32.mrb[0].mxu0
  %2323 = vmatprep.mubr.f32.mxu0 0.0
  %2324 = vmatmul.mubr.f32.gmra.mrb[0].mxu0 %v2223
  %v2325 = vpop.f32.mrb[0].mxu0
  %v2326 = vadd.f32 %v2252, %v2325
  %v2327 = vpop.f32.mrb[0].mxu0
  %2328 = vmatprep.mubr.f32.mxu0 0.0
  %2329 = vmatmul.mubr.f32.gmra.mrb[0].mxu0 %v2224
  %v2330 = vpop.f32.mrb[0].mxu0
  %v2331 = vadd.f32 %v2252, %v2330
  %v2332 = vpop.f32.mrb[0].mxu0
  %2333 = vmatprep.mubr.f32.mxu0 0.0
  %2334 = vmatmul.mubr.f32.gmra.mrb[0].mxu0 %v2225
  %v2335 = vpop.f32.mrb[0].mxu0
  %v2336 = vadd.f32 %v2252, %v2335
  %v2337 = vpop.f32.mrb[0].mxu0
  %2338 = vmatprep.mubr.f32.mxu0 0.0
  %2339 = vmatmul.mubr.f32.gmra.mrb[0].mxu0 %v2226
  %v2340 = vpop.f32.mrb[0].mxu0
  %v2341 = vadd.f32 %v2252, %v2340
  %v2342 = vpop.f32.mrb[0].mxu0
  %2343 = vmatprep.mubr.f32.mxu0 0.0
  %2344 = vmatmul.mubr.f32.gmra.mrb[0].mxu0 %v2227
  %v2345 = vpop.f32.mrb[0].mxu0
  %v2346 = vadd.f32 %v2252, %v2345
  %v2347 = vpop.f32.mrb[0].mxu0
  %2348 = vmatprep.mubr.f32.mxu0 0.0
  %2349 = vmatmul.mubr.f32.gmra.mrb[0].mxu0 %v2228
  %v2350 = vpop.f32.mrb[0].mxu0
  %v2351 = vadd.f32 %v2252, %v2350
  %v2352 = vpop.f32.mrb[0].mxu0
  %2353 = vmatprep.mubr.f32.mxu0 0.0
  %2354 = vmatmul.mubr.f32.gmra.mrb[0].mxu0 %v2229
  %v2355 = vpop.f32.mrb[0].mxu0
  %v2356 = vadd.f32 %v2252, %v2355
  %v2357 = vpop.f32.mrb[0].mxu0
  %2358 = vmatprep.mubr.f32.mxu0 0.0
  %2359 = vmatmul.mubr.f32.gmra.mrb[0].mxu0 %v2230
  %v2360 = vpop.f32.mrb[0].mxu0
  %v2361 = vadd.f32 %v2252, %v2360
  %v2362 = vpop.f32.mrb[0].mxu0
  %2363 = vdwg.mxu0
  %v2373 = vrot.slane %v2326, 7
  %vm2374 = vcmask 1041409
  %v2375 = vsel %vm2374, %v2373, %v2321
  %v2376 = vrot.slane %v2331, 6
  %vm2377 = vcmask 1042434
  %v2378 = vsel %vm2377, %v2376, %v2375
  %v2379 = vrot.slane %v2336, 5
  %vm2380 = vcmask 1043459
  %v2381 = vsel %vm2380, %v2379, %v2378
  %v2382 = vrot.slane %v2341, 4
  %vm2383 = vcmask 1044484
  %v2384 = vsel %vm2383, %v2382, %v2381
  %v2385 = vrot.slane %v2346, 3
  %vm2386 = vcmask 1045509
  %v2387 = vsel %vm2386, %v2385, %v2384
  %v2388 = vrot.slane %v2351, 2
  %vm2389 = vcmask 1046534
  %v2390 = vsel %vm2389, %v2388, %v2387
  %v2391 = vrot.slane %v2356, 1
  %vm2392 = vcmask 1047559
  %v2393 = vsel %vm2392, %v2391, %v2390
  %2396 = vst [vmem:[%s4] sm:$0xff] %v2393
  %2397 = vst [vmem:[%s4 + $0x8] sm:$0x1] %v2361
  %v2398 = vsel %vm2377, %v2373, %v2321
  %v2399 = vsel %vm2380, %v2376, %v2398
  %v2400 = vsel %vm2383, %v2379, %v2399
  %v2401 = vsel %vm2386, %v2382, %v2400
  %v2402 = vsel %vm2389, %v2385, %v2401
  %v2403 = vsel %vm2392, %v2388, %v2402
  %v2404 = vsel %vm2374, %v2361, %v2391
  %s2407 = scalar_lea.vmem %s4, 16
  %2408 = vst [vmem:[%s2407 - $0x1] sm:$0xfe] %v2403
  %2409 = vst [vmem:[%s2407 + $0x7] sm:$0x3] %v2404
  %v2410 = vsel %vm2380, %v2373, %v2321
  %v2411 = vsel %vm2383, %v2376, %v2410
  %v2412 = vsel %vm2386, %v2379, %v2411
  %v2413 = vsel %vm2389, %v2382, %v2412
  %v2414 = vsel %vm2392, %v2385, %v2413
  %v2415 = vsel %vm2374, %v2391, %v2388
  %v2416 = vsel %vm2377, %v2361, %v2415
  %s2419 = scalar_lea.vmem %s4, 32
  %2420 = vst [vmem:[%s2419 - $0x2] sm:$0xfc] %v2414
  %2421 = vst [vmem:[%s2419 + $0x6] sm:$0x7] %v2416
  %v2422 = vsel %vm2383, %v2373, %v2321
  %v2423 = vsel %vm2386, %v2376, %v2422
  %v2424 = vsel %vm2389, %v2379, %v2423
  %v2425 = vsel %vm2392, %v2382, %v2424
  %v2426 = vsel %vm2374, %v2388, %v2385
  %v2427 = vsel %vm2377, %v2391, %v2426
  %v2428 = vsel %vm2380, %v2361, %v2427
  %s2431 = scalar_lea.vmem %s4, 48
  %2432 = vst [vmem:[%s2431 - $0x3] sm:$0xf8] %v2425
  %2433 = vst [vmem:[%s2431 + $0x5] sm:$0xf] %v2428
  %v2434 = vsel %vm2386, %v2373, %v2321
  %v2435 = vsel %vm2389, %v2376, %v2434
  %v2436 = vsel %vm2392, %v2379, %v2435
  %v2437 = vsel %vm2374, %v2385, %v2382
  %v2438 = vsel %vm2377, %v2388, %v2437
  %v2439 = vsel %vm2380, %v2391, %v2438
  %v2440 = vsel %vm2383, %v2361, %v2439
  %s2443 = scalar_lea.vmem %s4, 64
  %2444 = vst [vmem:[%s2443 - $0x4] sm:$0xf0] %v2436
  %2445 = vst [vmem:[%s2443 + $0x4] sm:$0x1f] %v2440
  %v2446 = vsel %vm2389, %v2373, %v2321
  %v2447 = vsel %vm2392, %v2376, %v2446
  %v2448 = vsel %vm2374, %v2382, %v2379
  %v2449 = vsel %vm2377, %v2385, %v2448
  %v2450 = vsel %vm2380, %v2388, %v2449
  %v2451 = vsel %vm2383, %v2391, %v2450
  %v2452 = vsel %vm2386, %v2361, %v2451
  %s2455 = scalar_lea.vmem %s4, 80
  %2456 = vst [vmem:[%s2455 - $0x5] sm:$0xe0] %v2447
  %2457 = vst [vmem:[%s2455 + $0x3] sm:$0x3f] %v2452
  %v2458 = vsel %vm2392, %v2373, %v2321
  %v2459 = vsel %vm2374, %v2379, %v2376
  %v2460 = vsel %vm2377, %v2382, %v2459
  %v2461 = vsel %vm2380, %v2385, %v2460
  %v2462 = vsel %vm2383, %v2388, %v2461
  %v2463 = vsel %vm2386, %v2391, %v2462
  %v2464 = vsel %vm2389, %v2361, %v2463
  %s2467 = scalar_lea.vmem %s4, 96
  %2468 = vst [vmem:[%s2467 - $0x6] sm:$0xc0] %v2458
  %2469 = vst [vmem:[%s2467 + $0x2] sm:$0x7f] %v2464
  %v2470 = vsel %vm2374, %v2376, %v2373
  %v2471 = vsel %vm2377, %v2379, %v2470
  %v2472 = vsel %vm2380, %v2382, %v2471
  %v2473 = vsel %vm2383, %v2385, %v2472
  %v2474 = vsel %vm2386, %v2388, %v2473
  %v2475 = vsel %vm2389, %v2391, %v2474
  %v2476 = vsel %vm2392, %v2361, %v2475
  %s2479 = scalar_lea.vmem %s4, 112
  %2480 = vst [vmem:[%s2479 - $0x7] sm:$0x80] %v2321
  %2481 = vst [vmem:[%s2479 + $0x1] sm:$0xff] %v2476
  // Predicated region
  $region18: #{decoder_forward.1} parent=0 // pred_check
    _
  $region19: #{decoder_forward.1} parent=0 // pred_check_branch
    %2483 = sbr.rel (0) target = $region21
  $region20: #{decoder_forward.1} parent=0 // pred_region
    _
  $region21: #{decoder_forward.1} parent=0 // pred_fallthru
    _
  // Predicated region
  $region22: #{decoder_forward.1} parent=0 // pred_check
    _
  $region23: #{decoder_forward.1} parent=0 // pred_check_branch
    %2485 = sbr.rel (0) target = $region25
  $region24: #{decoder_forward.1} parent=0 // pred_region
    _
  $region25: #{decoder_forward.1} parent=0 // pred_fallthru
    _

</llo_original>
